<compile_context>
chip_gen: v7x
topology: tpu7x:2x2x1
jax: 0.10.0
libtpu: 0.0.40
codegen_flags: <defaults>
</compile_context>

<pallas_src>
import functools

import jax
import jax.numpy as jnp
from jax import lax
from jax.experimental import pallas as pl
from jax.experimental.pallas import tpu as pltpu

HIGHEST = jax.lax.Precision.HIGHEST  # used only by the pure-JAX reference


def triplane_kernel(coords_ref, planes_ref, w1_ref, b1_ref, w2_ref, b2_ref,
                    w3t_ref, b3_ref, out_ref, *, R, C, TM):
    # coords_ref: (3, TM) f32     planes_ref: (3, C, R*R) bf16 [flat idx = h*R + w]
    cx = coords_ref[pl.ds(0, 1), :]            # (1, TM)  indexes W on planes 0, 2
    cy = coords_ref[pl.ds(1, 1), :]            # (1, TM)
    cz = coords_ref[pl.ds(2, 1), :]            # (1, TM)

    # Grid-line index 0..R-1, tiny (R, 1) int32; broadcast happens in the compares.
    r_iota = lax.broadcasted_iota(jnp.int32, (R, 1), 0)

    def axis_weights(g):
        # Bilinear weights of the R grid lines along one axis for every point.
        # align_corners=True; out-of-range neighbors match no grid line => zeros pad.
        ix = (g + 1.0) * (0.5 * (R - 1))          # (1, TM) f32
        x0f = jnp.floor(ix)
        frac = ix - x0f                           # (1, TM)
        one_m_frac = 1.0 - frac
        x0 = x0f.astype(jnp.int32)                # exact integer compare path
        return (jnp.where(r_iota == x0, one_m_frac, 0.0)
                + jnp.where(r_iota == x0 + 1, frac, 0.0))       # (R, TM) f32

    wx = axis_weights(cx)                         # (R, TM)
    wy = axis_weights(cy)
    wz = axis_weights(cz)

    def sample(p, ww, wh):
        # Outer-product combined bilinear weights, row index = h*R + w, then ONE
        # full-depth MXU contraction: (C, R*R) @ (R*R, TM) -> (C, TM).
        w_comb = (wh[:, None, :] * ww[None, :, :]).reshape(R * R, TM)
        return jnp.dot(planes_ref[p], w_comb.astype(jnp.bfloat16),
                       preferred_element_type=jnp.float32)       # (C, TM) f32

    s_xy = sample(0, wx, wy)      # coords[..., 0:2]  on plane 0
    s_yz = sample(1, wy, wz)      # coords[..., 1:3]  on plane 1
    s_xz = sample(2, wx, wz)      # coords[..., 0,2]  on plane 2

    feats = (s_xy * s_yz * s_xz).astype(jnp.bfloat16)   # aggregate_fn == 'prod'

    h = jnp.dot(w1_ref[...], feats, preferred_element_type=jnp.float32) + b1_ref[...]
    h = jnp.maximum(h, 0.0)
    h = jnp.dot(w2_ref[...], h.astype(jnp.bfloat16),
                preferred_element_type=jnp.float32) + b2_ref[...]
    h = jnp.maximum(h, 0.0)
    # Final (1, hidden) layer: VPU multiply + column reduce (avoids a 1-row MXU push).
    out_ref[...] = jnp.sum(w3t_ref[...] * h, axis=0, keepdims=True) + b3_ref[...]


def triplane_autodecoder_forward(obj_idx, coordinates, params, *,
                                 resolution, channels, tile_m=512):
    """Forward pass of TriplaneAutoDecoder (shape mode). Returns (B, M, 1)."""
    B, M, _ = coordinates.shape
    assert B == obj_idx.shape[0]
    # The PyTorch module views a single embedding row as the whole (B,3,C,R,R)
    # tensor, which only works for B == 1; make that explicit.
    assert B == 1, "TriplaneAutoDecoder's embedding view implies batch_size == 1"
    R, C = resolution, channels
    tile_m = min(tile_m, M)
    assert M % tile_m == 0 and tile_m % 128 == 0

    # Embedding lookup (== nn.Embedding(1, 3*C*R*R) of scene obj_idx, index 0).
    emb = params["embeddings"][obj_idx[0]]                       # (3*C*R*R,)
    triplanes = emb.reshape(3, C, R, R)
    # Flatten (H, W) -> flat idx h*R + w; bf16: MXU truncates to bf16 anyway.
    planes_flat = triplanes.reshape(3, C, R * R).astype(jnp.bfloat16)
    coords_t = coordinates[0].T                                  # (3, M) f32

    w1 = params["w1"].astype(jnp.bfloat16)     # (hidden, C)   PyTorch Linear layout
    b1 = params["b1"].reshape(-1, 1)           # (hidden, 1)   f32
    w2 = params["w2"].astype(jnp.bfloat16)     # (hidden, hidden)
    b2 = params["b2"].reshape(-1, 1)
    w3t = params["w3"].T                       # (hidden, 1)   f32, VPU reduce path
    b3 = params["b3"].reshape(1, 1)
    hidden = w1.shape[0]

    kernel = functools.partial(triplane_kernel, R=R, C=C, TM=tile_m)

    # --- VMEM budget (double-buffered blocks + live intermediates + headroom) ---
    blk_bytes = (3 * tile_m * 4 + tile_m * 4              # coords tile + out tile
                 + 3 * C * R * R * 2                       # resident triplanes (bf16)
                 + hidden * C * 2 + hidden * hidden * 2    # w1, w2 (bf16)
                 + 3 * hidden * 4 + 4)                     # biases, w3t, b3
    live_bytes = (3 * R * R * tile_m * (4 + 2)             # outer-product weights
                  + 3 * R * tile_m * 4                     # per-axis weights
                  + 3 * C * tile_m * 4                     # sampled features
                  + 2 * hidden * tile_m * 4)               # MLP activations
    vmem_limit = int(min(max(2 * blk_bytes + live_bytes + (6 << 20), 8 << 20),
                         64 << 20))

    flops_per_pt = (3 * R * R                              # weight outer products
                    + 6 * C * R * R                        # 3 sampling matmuls
                    + 2 * C                                # feature product
                    + 2 * (hidden * C + hidden * hidden + hidden))
    bytes_accessed = (coords_t.size * 4 + planes_flat.size * 2
                      + w1.size * 2 + w2.size * 2 + (3 * hidden + 1) * 4 + M * 4)

    out = pl.pallas_call(
        kernel,
        out_shape=jax.ShapeDtypeStruct((1, M), jnp.float32),
        grid_spec=pltpu.PrefetchScalarGridSpec(
            num_scalar_prefetch=0,
            grid=(M // tile_m,),
            in_specs=[
                pl.BlockSpec((3, tile_m), lambda mi: (0, mi)),
                # Constant block index -> Pallas keeps the copy resident.
                pl.BlockSpec((3, C, R * R), lambda mi: (0, 0, 0)),
                pl.BlockSpec((hidden, C), lambda mi: (0, 0)),
                pl.BlockSpec((hidden, 1), lambda mi: (0, 0)),
                pl.BlockSpec((hidden, hidden), lambda mi: (0, 0)),
                pl.BlockSpec((hidden, 1), lambda mi: (0, 0)),
                pl.BlockSpec((hidden, 1), lambda mi: (0, 0)),
                pl.BlockSpec((1, 1), lambda mi: (0, 0)),
            ],
            out_specs=pl.BlockSpec((1, tile_m), lambda mi: (0, mi)),
        ),
        compiler_params=pltpu.CompilerParams(
            dimension_semantics=("parallel",),
            vmem_limit_bytes=vmem_limit),
        cost_estimate=pl.CostEstimate(
            flops=int(flops_per_pt) * M,
            transcendentals=0,
            bytes_accessed=int(bytes_accessed)),
    )(coords_t, planes_flat, w1, b1, w2, b2, w3t, b3)

    return out.T.reshape(B, M, 1)


# ----------------------------- pure-JAX reference ----------------------------
def _ref_sample(plane, gx, gy, R):
    # plane: (C, R, R) [H, W]; gx indexes W, gy indexes H. align_corners=True, zeros pad.
    ix = (gx + 1.0) * 0.5 * (R - 1)
    iy = (gy + 1.0) * 0.5 * (R - 1)
    x0 = jnp.floor(ix)
    y0 = jnp.floor(iy)
    wx1 = ix - x0
    wx0 = 1.0 - wx1
    wy1 = iy - y0
    wy0 = 1.0 - wy1

    def gather(yi, xi, w):
        valid = (xi >= 0) & (xi < R) & (yi >= 0) & (yi < R)
        xc = jnp.clip(xi, 0, R - 1).astype(jnp.int32)
        yc = jnp.clip(yi, 0, R - 1).astype(jnp.int32)
        vals = plane[:, yc, xc]                                  # (C, M)
        return jnp.where(valid[None, :], vals, 0.0) * w[None, :]

    return (gather(y0, x0, wy0 * wx0) + gather(y0, x0 + 1, wy0 * wx1)
            + gather(y0 + 1, x0, wy1 * wx0) + gather(y0 + 1, x0 + 1, wy1 * wx1))


def reference_forward(obj_idx, coordinates, params, *, resolution, channels):
    B, M, _ = coordinates.shape
    R, C = resolution, channels
    tp = params["embeddings"][obj_idx[0]].reshape(B, 3, C, R, R)
    outs = []
    for b in range(B):
        cx, cy, cz = coordinates[b, :, 0], coordinates[b, :, 1], coordinates[b, :, 2]
        s_xy = _ref_sample(tp[b, 0], cx, cy, R)
        s_yz = _ref_sample(tp[b, 1], cy, cz, R)
        s_xz = _ref_sample(tp[b, 2], cx, cz, R)
        feats = (s_xy * s_yz * s_xz).T                           # (M, C)
        h = jnp.maximum(
            jnp.dot(feats, params["w1"].T, precision=HIGHEST) + params["b1"][None, :], 0.0)
        h = jnp.maximum(
            jnp.dot(h, params["w2"].T, precision=HIGHEST) + params["b2"][None, :], 0.0)
        o = jnp.dot(h, params["w3"].T, precision=HIGHEST) + params["b3"][None, :]
        outs.append(o)
    return jnp.stack(outs)                                       # (B, M, 1)


# --------------------------------- demo --------------------------------------
if __name__ == "__main__":
    resolution = 16        # triplane spatial resolution R
    channels = 16          # triplane feature channels C
    how_many_scenes = 4
    hidden = 128
    output_dim = 1         # 'shape' mode
    B = 1                  # module's single-embedding-row view implies B == 1
    M = 2048               # number of query coordinates (multiple of tile_m)
    tile_m = 512           # 4 M-steps: both v7x TensorCores get work; fine on v5e/v6e

    key = jax.random.PRNGKey(0)
    k_emb, k_w1, k_b1, k_w2, k_b2, k_w3, k_b3, k_coord = jax.random.split(key, 8)

    emb_dim = 3 * channels * resolution * resolution
    # nn.Embedding default init: N(0, 1)
    embeddings = jax.random.normal(k_emb, (how_many_scenes, emb_dim), jnp.float32)

    # net[0]: first_layer_sine_init  -> U(-1/fan_in, 1/fan_in)
    w1 = jax.random.uniform(k_w1, (hidden, channels), jnp.float32,
                            -1.0 / channels, 1.0 / channels)
    b1 = jax.random.uniform(k_b1, (hidden,), jnp.float32,
                            -1.0 / jnp.sqrt(channels), 1.0 / jnp.sqrt(channels))
    # net[2], net[4]: frequency_init(30) -> U(-sqrt(6/fan_in)/30, +sqrt(6/fan_in)/30)
    bnd2 = float(jnp.sqrt(6.0 / hidden) / 30.0)
    w2 = jax.random.uniform(k_w2, (hidden, hidden), jnp.float32, -bnd2, bnd2)
    b2 = jax.random.uniform(k_b2, (hidden,), jnp.float32,
                            -1.0 / jnp.sqrt(hidden), 1.0 / jnp.sqrt(hidden))
    w3 = jax.random.uniform(k_w3, (output_dim, hidden), jnp.float32, -bnd2, bnd2)
    b3 = jax.random.uniform(k_b3, (output_dim,), jnp.float32,
                            -1.0 / jnp.sqrt(hidden), 1.0 / jnp.sqrt(hidden))

    params = dict(embeddings=embeddings, w1=w1, b1=b1, w2=w2, b2=b2, w3=w3, b3=b3)

    obj_idx = jnp.array([1], dtype=jnp.int32)
    # coordinates slightly outside [-1, 1] to exercise the zeros-padding path
    coordinates = jax.random.uniform(k_coord, (B, M, 3), jnp.float32, -1.05, 1.05)

    out = triplane_autodecoder_forward(obj_idx, coordinates, params,
                                       resolution=resolution, channels=channels,
                                       tile_m=tile_m)
    out = jax.block_until_ready(out)
    assert out.shape == (B, M, 1), out.shape

    ref = reference_forward(obj_idx, coordinates, params,
                            resolution=resolution, channels=channels)
    # Kernel matmuls run with bf16 operands (the MXU's default-precision floor);
    # reference is f32/HIGHEST.
    assert jnp.allclose(out, ref, atol=2e-3, rtol=2e-3), \
        float(jnp.max(jnp.abs(out - ref)))

    print("KERNEL_OK")
</pallas_src>

<mosaic_0001>
module attributes {stable_mosaic.version = 11 : i64} {
  func.func @triplane_kernel(%arg0: i32, %arg1: memref<3x512xf32, #tpu.memory_space<vmem>>, %arg2: memref<3x16x256xbf16, #tpu.memory_space<vmem>>, %arg3: memref<128x16xbf16, #tpu.memory_space<vmem>>, %arg4: memref<128x1xf32, #tpu.memory_space<vmem>>, %arg5: memref<128x128xbf16, #tpu.memory_space<vmem>>, %arg6: memref<128x1xf32, #tpu.memory_space<vmem>>, %arg7: memref<128x1xf32, #tpu.memory_space<vmem>>, %arg8: memref<1x1xf32, #tpu.memory_space<vmem>>, %arg9: memref<1x512xf32, #tpu.memory_space<vmem>>) attributes {dimension_semantics = [#tpu.dimension_semantics<parallel>], iteration_bounds = array<i64: 4>, scalar_prefetch = 0 : i64, scratch_operands = 0 : i64, tpu.core_type = #tpu.core_type<tc>, window_params = [{transform_indices = @transform_0, window_bounds = array<i64: 3, 512>}, {pipeline_mode = #tpu.pipeline_mode<synchronous>, transform_indices = @transform_1, window_bounds = array<i64: 3, 16, 256>}, {pipeline_mode = #tpu.pipeline_mode<synchronous>, transform_indices = @transform_2, window_bounds = array<i64: 128, 16>}, {pipeline_mode = #tpu.pipeline_mode<synchronous>, transform_indices = @transform_3, window_bounds = array<i64: 128, 1>}, {pipeline_mode = #tpu.pipeline_mode<synchronous>, transform_indices = @transform_4, window_bounds = array<i64: 128, 128>}, {pipeline_mode = #tpu.pipeline_mode<synchronous>, transform_indices = @transform_5, window_bounds = array<i64: 128, 1>}, {pipeline_mode = #tpu.pipeline_mode<synchronous>, transform_indices = @transform_6, window_bounds = array<i64: 128, 1>}, {pipeline_mode = #tpu.pipeline_mode<synchronous>, transform_indices = @transform_7, window_bounds = array<i64: 1, 1>}, {transform_indices = @transform_8, window_bounds = array<i64: 1, 512>}]} {
    %c0 = arith.constant 0 : index
    %c0_0 = arith.constant 0 : index
    %0 = vector.load %arg1[%c0, %c0_0] : memref<3x512xf32, #tpu.memory_space<vmem>>, vector<1x512xf32>
    %c1 = arith.constant 1 : index
    %c0_1 = arith.constant 0 : index
    %1 = vector.load %arg1[%c1, %c0_1] : memref<3x512xf32, #tpu.memory_space<vmem>>, vector<1x512xf32>
    %c2 = arith.constant 2 : index
    %c0_2 = arith.constant 0 : index
    %2 = vector.load %arg1[%c2, %c0_2] : memref<3x512xf32, #tpu.memory_space<vmem>>, vector<1x512xf32>
    %3 = tpu.iota {dimensions = array<i32: 0>} : vector<16x1xi32>
    %cst = arith.constant 1.000000e+00 : f32
    %4 = vector.broadcast %cst : f32 to vector<1x512xf32>
    %5 = arith.addf %0, %4 : vector<1x512xf32>
    %cst_3 = arith.constant 7.500000e+00 : f32
    %6 = vector.broadcast %cst_3 : f32 to vector<1x512xf32>
    %7 = arith.mulf %5, %6 : vector<1x512xf32>
    %8 = math.floor %7 : vector<1x512xf32>
    %9 = arith.subf %7, %8 : vector<1x512xf32>
    %cst_4 = arith.constant 1.000000e+00 : f32
    %10 = vector.broadcast %cst_4 : f32 to vector<1x512xf32>
    %11 = arith.subf %10, %9 : vector<1x512xf32>
    %12 = arith.fptosi %8 : vector<1x512xf32> to vector<1x512xi32>
    %13 = vector.broadcast %3 : vector<16x1xi32> to vector<16x512xi32>
    %14 = vector.broadcast %12 : vector<1x512xi32> to vector<16x512xi32>
    %15 = arith.cmpi eq, %13, %14 : vector<16x512xi32>
    %cst_5 = arith.constant 0.000000e+00 : f32
    %16 = vector.shape_cast %11 : vector<1x512xf32> to vector<1x512xf32>
    %17 = vector.broadcast %16 : vector<1x512xf32> to vector<16x512xf32>
    %18 = vector.broadcast %cst_5 : f32 to vector<16x512xf32>
    %19 = arith.select %15, %17, %18 : vector<16x512xi1>, vector<16x512xf32>
    %c1_i32 = arith.constant 1 : i32
    %20 = vector.broadcast %c1_i32 : i32 to vector<1x512xi32>
    %21 = arith.addi %12, %20 : vector<1x512xi32>
    %22 = vector.broadcast %3 : vector<16x1xi32> to vector<16x512xi32>
    %23 = vector.broadcast %21 : vector<1x512xi32> to vector<16x512xi32>
    %24 = arith.cmpi eq, %22, %23 : vector<16x512xi32>
    %cst_6 = arith.constant 0.000000e+00 : f32
    %25 = vector.shape_cast %9 : vector<1x512xf32> to vector<1x512xf32>
    %26 = vector.broadcast %25 : vector<1x512xf32> to vector<16x512xf32>
    %27 = vector.broadcast %cst_6 : f32 to vector<16x512xf32>
    %28 = arith.select %24, %26, %27 : vector<16x512xi1>, vector<16x512xf32>
    %29 = arith.addf %19, %28 : vector<16x512xf32>
    %cst_7 = arith.constant 1.000000e+00 : f32
    %30 = vector.broadcast %cst_7 : f32 to vector<1x512xf32>
    %31 = arith.addf %1, %30 : vector<1x512xf32>
    %cst_8 = arith.constant 7.500000e+00 : f32
    %32 = vector.broadcast %cst_8 : f32 to vector<1x512xf32>
    %33 = arith.mulf %31, %32 : vector<1x512xf32>
    %34 = math.floor %33 : vector<1x512xf32>
    %35 = arith.subf %33, %34 : vector<1x512xf32>
    %cst_9 = arith.constant 1.000000e+00 : f32
    %36 = vector.broadcast %cst_9 : f32 to vector<1x512xf32>
    %37 = arith.subf %36, %35 : vector<1x512xf32>
    %38 = arith.fptosi %34 : vector<1x512xf32> to vector<1x512xi32>
    %39 = vector.broadcast %3 : vector<16x1xi32> to vector<16x512xi32>
    %40 = vector.broadcast %38 : vector<1x512xi32> to vector<16x512xi32>
    %41 = arith.cmpi eq, %39, %40 : vector<16x512xi32>
    %cst_10 = arith.constant 0.000000e+00 : f32
    %42 = vector.shape_cast %37 : vector<1x512xf32> to vector<1x512xf32>
    %43 = vector.broadcast %42 : vector<1x512xf32> to vector<16x512xf32>
    %44 = vector.broadcast %cst_10 : f32 to vector<16x512xf32>
    %45 = arith.select %41, %43, %44 : vector<16x512xi1>, vector<16x512xf32>
    %c1_i32_11 = arith.constant 1 : i32
    %46 = vector.broadcast %c1_i32_11 : i32 to vector<1x512xi32>
    %47 = arith.addi %38, %46 : vector<1x512xi32>
    %48 = vector.broadcast %3 : vector<16x1xi32> to vector<16x512xi32>
    %49 = vector.broadcast %47 : vector<1x512xi32> to vector<16x512xi32>
    %50 = arith.cmpi eq, %48, %49 : vector<16x512xi32>
    %cst_12 = arith.constant 0.000000e+00 : f32
    %51 = vector.shape_cast %35 : vector<1x512xf32> to vector<1x512xf32>
    %52 = vector.broadcast %51 : vector<1x512xf32> to vector<16x512xf32>
    %53 = vector.broadcast %cst_12 : f32 to vector<16x512xf32>
    %54 = arith.select %50, %52, %53 : vector<16x512xi1>, vector<16x512xf32>
    %55 = arith.addf %45, %54 : vector<16x512xf32>
    %cst_13 = arith.constant 1.000000e+00 : f32
    %56 = vector.broadcast %cst_13 : f32 to vector<1x512xf32>
    %57 = arith.addf %2, %56 : vector<1x512xf32>
    %cst_14 = arith.constant 7.500000e+00 : f32
    %58 = vector.broadcast %cst_14 : f32 to vector<1x512xf32>
    %59 = arith.mulf %57, %58 : vector<1x512xf32>
    %60 = math.floor %59 : vector<1x512xf32>
    %61 = arith.subf %59, %60 : vector<1x512xf32>
    %cst_15 = arith.constant 1.000000e+00 : f32
    %62 = vector.broadcast %cst_15 : f32 to vector<1x512xf32>
    %63 = arith.subf %62, %61 : vector<1x512xf32>
    %64 = arith.fptosi %60 : vector<1x512xf32> to vector<1x512xi32>
    %65 = vector.broadcast %3 : vector<16x1xi32> to vector<16x512xi32>
    %66 = vector.broadcast %64 : vector<1x512xi32> to vector<16x512xi32>
    %67 = arith.cmpi eq, %65, %66 : vector<16x512xi32>
    %cst_16 = arith.constant 0.000000e+00 : f32
    %68 = vector.shape_cast %63 : vector<1x512xf32> to vector<1x512xf32>
    %69 = vector.broadcast %68 : vector<1x512xf32> to vector<16x512xf32>
    %70 = vector.broadcast %cst_16 : f32 to vector<16x512xf32>
    %71 = arith.select %67, %69, %70 : vector<16x512xi1>, vector<16x512xf32>
    %c1_i32_17 = arith.constant 1 : i32
    %72 = vector.broadcast %c1_i32_17 : i32 to vector<1x512xi32>
    %73 = arith.addi %64, %72 : vector<1x512xi32>
    %74 = vector.broadcast %3 : vector<16x1xi32> to vector<16x512xi32>
    %75 = vector.broadcast %73 : vector<1x512xi32> to vector<16x512xi32>
    %76 = arith.cmpi eq, %74, %75 : vector<16x512xi32>
    %cst_18 = arith.constant 0.000000e+00 : f32
    %77 = vector.shape_cast %61 : vector<1x512xf32> to vector<1x512xf32>
    %78 = vector.broadcast %77 : vector<1x512xf32> to vector<16x512xf32>
    %79 = vector.broadcast %cst_18 : f32 to vector<16x512xf32>
    %80 = arith.select %76, %78, %79 : vector<16x512xi1>, vector<16x512xf32>
    %81 = arith.addf %71, %80 : vector<16x512xf32>
    %82 = vector.shape_cast %55 : vector<16x512xf32> to vector<16x1x512xf32>
    %83 = vector.shape_cast %29 : vector<16x512xf32> to vector<1x16x512xf32>
    %84 = vector.broadcast %82 : vector<16x1x512xf32> to vector<16x16x512xf32>
    %85 = vector.broadcast %83 : vector<1x16x512xf32> to vector<16x16x512xf32>
    %86 = arith.mulf %84, %85 : vector<16x16x512xf32>
    %87 = vector.shape_cast %86 : vector<16x16x512xf32> to vector<256x512xf32>
    %c0_19 = arith.constant 0 : index
    %c0_20 = arith.constant 0 : index
    %c0_21 = arith.constant 0 : index
    %88 = vector.load %arg2[%c0_19, %c0_20, %c0_21] : memref<3x16x256xbf16, #tpu.memory_space<vmem>>, vector<1x16x256xbf16>
    %89 = vector.shape_cast %88 : vector<1x16x256xbf16> to vector<16x256xbf16>
    %90 = arith.truncf %87 : vector<256x512xf32> to vector<256x512xbf16>
    %cst_22 = arith.constant dense<0.000000e+00> : vector<16x512xf32>
    %91 = tpu.matmul %89, %90, %cst_22 {dimension_numbers = #tpu.dot_dimension_numbers<[1], [0], [0], [1], [0, 0, 1, 1], [], []>} : vector<16x256xbf16>, vector<256x512xbf16>, vector<16x512xf32> -> vector<16x512xf32>
    %92 = vector.shape_cast %81 : vector<16x512xf32> to vector<16x1x512xf32>
    %93 = vector.shape_cast %55 : vector<16x512xf32> to vector<1x16x512xf32>
    %94 = vector.broadcast %92 : vector<16x1x512xf32> to vector<16x16x512xf32>
    %95 = vector.broadcast %93 : vector<1x16x512xf32> to vector<16x16x512xf32>
    %96 = arith.mulf %94, %95 : vector<16x16x512xf32>
    %97 = vector.shape_cast %96 : vector<16x16x512xf32> to vector<256x512xf32>
    %c1_23 = arith.constant 1 : index
    %c0_24 = arith.constant 0 : index
    %c0_25 = arith.constant 0 : index
    %98 = vector.load %arg2[%c1_23, %c0_24, %c0_25] : memref<3x16x256xbf16, #tpu.memory_space<vmem>>, vector<1x16x256xbf16>
    %99 = vector.shape_cast %98 : vector<1x16x256xbf16> to vector<16x256xbf16>
    %100 = arith.truncf %97 : vector<256x512xf32> to vector<256x512xbf16>
    %cst_26 = arith.constant dense<0.000000e+00> : vector<16x512xf32>
    %101 = tpu.matmul %99, %100, %cst_26 {dimension_numbers = #tpu.dot_dimension_numbers<[1], [0], [0], [1], [0, 0, 1, 1], [], []>} : vector<16x256xbf16>, vector<256x512xbf16>, vector<16x512xf32> -> vector<16x512xf32>
    %102 = vector.shape_cast %81 : vector<16x512xf32> to vector<16x1x512xf32>
    %103 = vector.shape_cast %29 : vector<16x512xf32> to vector<1x16x512xf32>
    %104 = vector.broadcast %102 : vector<16x1x512xf32> to vector<16x16x512xf32>
    %105 = vector.broadcast %103 : vector<1x16x512xf32> to vector<16x16x512xf32>
    %106 = arith.mulf %104, %105 : vector<16x16x512xf32>
    %107 = vector.shape_cast %106 : vector<16x16x512xf32> to vector<256x512xf32>
    %c2_27 = arith.constant 2 : index
    %c0_28 = arith.constant 0 : index
    %c0_29 = arith.constant 0 : index
    %108 = vector.load %arg2[%c2_27, %c0_28, %c0_29] : memref<3x16x256xbf16, #tpu.memory_space<vmem>>, vector<1x16x256xbf16>
    %109 = vector.shape_cast %108 : vector<1x16x256xbf16> to vector<16x256xbf16>
    %110 = arith.truncf %107 : vector<256x512xf32> to vector<256x512xbf16>
    %cst_30 = arith.constant dense<0.000000e+00> : vector<16x512xf32>
    %111 = tpu.matmul %109, %110, %cst_30 {dimension_numbers = #tpu.dot_dimension_numbers<[1], [0], [0], [1], [0, 0, 1, 1], [], []>} : vector<16x256xbf16>, vector<256x512xbf16>, vector<16x512xf32> -> vector<16x512xf32>
    %112 = arith.mulf %91, %101 : vector<16x512xf32>
    %113 = arith.mulf %112, %111 : vector<16x512xf32>
    %114 = arith.truncf %113 : vector<16x512xf32> to vector<16x512xbf16>
    %c0_31 = arith.constant 0 : index
    %c0_32 = arith.constant 0 : index
    %115 = vector.load %arg3[%c0_31, %c0_32] : memref<128x16xbf16, #tpu.memory_space<vmem>>, vector<128x16xbf16>
    %cst_33 = arith.constant dense<0.000000e+00> : vector<128x512xf32>
    %116 = tpu.matmul %115, %114, %cst_33 {dimension_numbers = #tpu.dot_dimension_numbers<[1], [0], [0], [1], [0, 0, 1, 1], [], []>} : vector<128x16xbf16>, vector<16x512xbf16>, vector<128x512xf32> -> vector<128x512xf32>
    %c0_34 = arith.constant 0 : index
    %c0_35 = arith.constant 0 : index
    %117 = vector.load %arg4[%c0_34, %c0_35] : memref<128x1xf32, #tpu.memory_space<vmem>>, vector<128x1xf32>
    %118 = vector.broadcast %117 : vector<128x1xf32> to vector<128x512xf32>
    %119 = arith.addf %116, %118 : vector<128x512xf32>
    %cst_36 = arith.constant 0.000000e+00 : f32
    %120 = vector.broadcast %cst_36 : f32 to vector<128x512xf32>
    %121 = arith.maximumf %119, %120 : vector<128x512xf32>
    %c0_37 = arith.constant 0 : index
    %c0_38 = arith.constant 0 : index
    %122 = vector.load %arg5[%c0_37, %c0_38] : memref<128x128xbf16, #tpu.memory_space<vmem>>, vector<128x128xbf16>
    %123 = arith.truncf %121 : vector<128x512xf32> to vector<128x512xbf16>
    %cst_39 = arith.constant dense<0.000000e+00> : vector<128x512xf32>
    %124 = tpu.matmul %122, %123, %cst_39 {dimension_numbers = #tpu.dot_dimension_numbers<[1], [0], [0], [1], [0, 0, 1, 1], [], []>} : vector<128x128xbf16>, vector<128x512xbf16>, vector<128x512xf32> -> vector<128x512xf32>
    %c0_40 = arith.constant 0 : index
    %c0_41 = arith.constant 0 : index
    %125 = vector.load %arg6[%c0_40, %c0_41] : memref<128x1xf32, #tpu.memory_space<vmem>>, vector<128x1xf32>
    %126 = vector.broadcast %125 : vector<128x1xf32> to vector<128x512xf32>
    %127 = arith.addf %124, %126 : vector<128x512xf32>
    %cst_42 = arith.constant 0.000000e+00 : f32
    %128 = vector.broadcast %cst_42 : f32 to vector<128x512xf32>
    %129 = arith.maximumf %127, %128 : vector<128x512xf32>
    %c0_43 = arith.constant 0 : index
    %c0_44 = arith.constant 0 : index
    %130 = vector.load %arg7[%c0_43, %c0_44] : memref<128x1xf32, #tpu.memory_space<vmem>>, vector<128x1xf32>
    %131 = vector.broadcast %130 : vector<128x1xf32> to vector<128x512xf32>
    %132 = arith.mulf %131, %129 : vector<128x512xf32>
    %cst_45 = arith.constant dense<0.000000e+00> : vector<512xf32>
    %133 = vector.multi_reduction <add>, %132, %cst_45 [0] : vector<128x512xf32> to vector<512xf32>
    %134 = vector.shape_cast %133 : vector<512xf32> to vector<1x512xf32>
    %c0_46 = arith.constant 0 : index
    %c0_47 = arith.constant 0 : index
    %135 = vector.load %arg8[%c0_46, %c0_47] : memref<1x1xf32, #tpu.memory_space<vmem>>, vector<1x1xf32>
    %136 = vector.broadcast %135 : vector<1x1xf32> to vector<1x512xf32>
    %137 = arith.addf %134, %136 : vector<1x512xf32>
    %c0_48 = arith.constant 0 : index
    %c0_49 = arith.constant 0 : index
    %138 = vector.load %arg9[%c0_48, %c0_49] : memref<1x512xf32, #tpu.memory_space<vmem>>, vector<1x512xf32>
    tpu.vector_store %arg9[%c0_48, %c0_49], %137 {strides = array<i32>} : memref<1x512xf32, #tpu.memory_space<vmem>>, vector<1x512xf32>,
    return
  }
  func.func @transform_0(%arg0: i32) -> (i32, i32) {
    %c0_i32 = arith.constant 0 : i32
    %c0_i32_0 = arith.constant 0 : i32
    return %c0_i32, %arg0 : i32, i32
  }
  func.func @transform_1(%arg0: i32) -> (i32, i32, i32) {
    %c0_i32 = arith.constant 0 : i32
    %c0_i32_0 = arith.constant 0 : i32
    %c0_i32_1 = arith.constant 0 : i32
    %c0_i32_2 = arith.constant 0 : i32
    return %c0_i32, %c0_i32_0, %c0_i32_1 : i32, i32, i32
  }
  func.func @transform_2(%arg0: i32) -> (i32, i32) {
    %c0_i32 = arith.constant 0 : i32
    %c0_i32_0 = arith.constant 0 : i32
    %c0_i32_1 = arith.constant 0 : i32
    return %c0_i32, %c0_i32_0 : i32, i32
  }
  func.func @transform_3(%arg0: i32) -> (i32, i32) {
    %c0_i32 = arith.constant 0 : i32
    %c0_i32_0 = arith.constant 0 : i32
    %c0_i32_1 = arith.constant 0 : i32
    return %c0_i32, %c0_i32_0 : i32, i32
  }
  func.func @transform_4(%arg0: i32) -> (i32, i32) {
    %c0_i32 = arith.constant 0 : i32
    %c0_i32_0 = arith.constant 0 : i32
    %c0_i32_1 = arith.constant 0 : i32
    return %c0_i32, %c0_i32_0 : i32, i32
  }
  func.func @transform_5(%arg0: i32) -> (i32, i32) {
    %c0_i32 = arith.constant 0 : i32
    %c0_i32_0 = arith.constant 0 : i32
    %c0_i32_1 = arith.constant 0 : i32
    return %c0_i32, %c0_i32_0 : i32, i32
  }
  func.func @transform_6(%arg0: i32) -> (i32, i32) {
    %c0_i32 = arith.constant 0 : i32
    %c0_i32_0 = arith.constant 0 : i32
    %c0_i32_1 = arith.constant 0 : i32
    return %c0_i32, %c0_i32_0 : i32, i32
  }
  func.func @transform_7(%arg0: i32) -> (i32, i32) {
    %c0_i32 = arith.constant 0 : i32
    %c0_i32_0 = arith.constant 0 : i32
    %c0_i32_1 = arith.constant 0 : i32
    return %c0_i32, %c0_i32_0 : i32, i32
  }
  func.func @transform_8(%arg0: i32) -> (i32, i32) {
    %c0_i32 = arith.constant 0 : i32
    %c0_i32_0 = arith.constant 0 : i32
    return %c0_i32, %arg0 : i32, i32
  }
}

</mosaic_0001>

<llo_original>
// kernel: tpu_custom_call.1
$region0: #{tpu_custom_call.1}
  #allocation0 [shape = 'u32[]', space=smem, size = 0x4, offset = 0x4, fixed_abs, tag = 'smem constant byte address 0x4 - core index']
  #allocation1 [shape = 'u32[144,128]{1,0:T(1,128)}', space=vmem, size = 0x12000, scoped, tag = 'internal scratch']
  #allocation2 [shape = 'f32[1,1]{1,0:T(1,128)S(1)}', space=vmem, size = 0x200, scoped, tag = 'scoped memory for tpu_custom_call.1']
  %s0 = inlined_call_operand.vmem [shape: f32[3,2048], index: 0, kind: input, shape index: {}]
  %s1 = inlined_call_operand.vmem [shape: bf16[3,16,256], index: 1, kind: input, shape index: {}]
  %s2 = inlined_call_operand.vmem [shape: bf16[128,16], index: 2, kind: input, shape index: {}]
  %s3 = inlined_call_operand.vmem [shape: f32[128,1], index: 3, kind: input, shape index: {}]
  %s4 = inlined_call_operand.vmem [shape: bf16[128,128], index: 4, kind: input, shape index: {}]
  %s5 = inlined_call_operand.vmem [shape: f32[128,1], index: 5, kind: input, shape index: {}]
  %s6 = inlined_call_operand.vmem [shape: f32[128,1], index: 6, kind: input, shape index: {}]
  %s7 = inlined_call_operand.<no memory space> [shape: f32[1,1], index: 7, kind: input, shape index: {}]
  %s8 = inlined_call_operand.hbm [shape: f32[1,2048], index: 8, kind: output, shape index: {}]
  %s9 = sld [smem:[#allocation0]]
  $region65: #{tpu_custom_call.1} parent=0
    _
  %s11 = ssub.s32 1, %s9
  %s12 = scalar_select 0, %s11, %s9
  %v13 = vstv %s7
  %14 = vst [vmem:[#allocation2] sm:$0x1] %v13
  $region1: #{tpu_custom_call.1} parent=0
    #allocation3 [shape = 'u8[4096]{0}', space=vmem, size = 0x1000, scoped, tag = 'output window, operand 0']
    #allocation4 [shape = 's32[2]{0}', space=sflag, size = 0x8, scoped, tag = 'scoped memory for tpu_custom_call.1']
    %15 = vsyncpa [#allocation4], 0
    %s16 = scalar_lea.sflag [#allocation4], 1
    %17 = vsyncpa %s16, 0
    loop: start=0, step=1, limit=6
    $region2: #{tpu_custom_call.1} parent=1 // loop_pre_header
      _
    $region3: #{tpu_custom_call.1} parent=1 // loop_header
      %s19 = sphi 0, %s23
      %p20 = scmp.ge.s32.totalorder %s19, 6
      %s29 = sphi 0, %s31
      %s32 = sphi 0, %s29
      %s33 = sphi 0, %s32
      %s49 = sphi 0, %s33
      %s53 = sphi 0, %s53
      %s55 = sphi 0, %s53
      %s56 = sphi 0, %s55
      %s70 = sphi 0, %s56
      %s74 = sphi 0, %s74
      %s76 = sphi 0, %s74
      %s77 = sphi 0, %s76
      %s91 = sphi 0, %s77
      %s95 = sphi 0, %s95
      %s97 = sphi 0, %s95
      %s98 = sphi 0, %s97
      %s112 = sphi 0, %s98
      %s116 = sphi 0, %s116
      %s118 = sphi 0, %s116
      %s119 = sphi 0, %s118
      %s133 = sphi 0, %s119
      %s137 = sphi 0, %s137
      %s139 = sphi 0, %s137
      %s140 = sphi 0, %s139
      %s154 = sphi 0, %s140
      %s158 = sphi 0, %s158
      %s160 = sphi 0, %s158
      %s161 = sphi 0, %s160
      %s175 = sphi 0, %s161
      %s179 = sphi 0, %s179
      %s181 = sphi 0, %s179
      %s182 = sphi 0, %s181
      %s196 = sphi 0, %s182
      %s202 = sphi 0, %s204
      %s205 = sphi 0, %s202
      %s206 = sphi 0, %s205
      %s222 = sphi 0, %s206
    $region4: #{tpu_custom_call.1} parent=1 // loop_header_branch
      %22 = sbr.rel (%p20) target = $region8
    $region5: #{tpu_custom_call.1} parent=1 // loop_body
      %s24 = ssub.s32 %s19, 1
      %s25 = ssub.s32 %s19, 2
      %s26 = sadd.s32 %s19, 1
      %s27 = ssub.s32 %s19, %s26
      %p28 = scmp.eq.s32.totalorder %s27, 0
      %s30 = sadd.s32 %s29, 1
      %s31 = scalar_select %p28, %s29, %s30
      %p34 = pneg %p28
      %p35 = scmp.eq.s32.totalorder %s19, 3
      %p36 = por %p34, %p35
      %p37 = scmp.ne.s32.totalorder %s29, %s32
      %p38 = scmp.eq.s32.totalorder %s19, 0
      %p39 = por %p37, %p38
      %p40 = scmp.ne.s32.totalorder %s29, %s32
      %p41 = scmp.eq.s32.totalorder %s24, 3
      %p42 = por %p40, %p41
      %p43 = scmp.ne.s32.totalorder %s32, %s33
      %p44 = scmp.eq.s32.totalorder %s24, 0
      %p45 = por %p43, %p44
      %p46 = scmp.ne.s32.totalorder %s32, %s33
      %p47 = scmp.eq.s32.totalorder %s25, 3
      %p48 = por %p46, %p47
      %p50 = scmp.ne.s32.totalorder %s33, %s49
      %p51 = scmp.eq.s32.totalorder %s25, 0
      %p52 = por %p50, %p51
      %s54 = sadd.s32 %s53, 1
      %p57 = scmp.eq.s32.totalorder %s19, 3
      %p58 = scmp.ne.s32.totalorder %s53, %s55
      %p59 = scmp.eq.s32.totalorder %s19, 0
      %p60 = por %p58, %p59
      %p61 = scmp.ne.s32.totalorder %s53, %s55
      %p62 = scmp.eq.s32.totalorder %s24, 3
      %p63 = por %p61, %p62
      %p64 = scmp.ne.s32.totalorder %s55, %s56
      %p65 = scmp.eq.s32.totalorder %s24, 0
      %p66 = por %p64, %p65
      %p67 = scmp.ne.s32.totalorder %s55, %s56
      %p68 = scmp.eq.s32.totalorder %s25, 3
      %p69 = por %p67, %p68
      %p71 = scmp.ne.s32.totalorder %s56, %s70
      %p72 = scmp.eq.s32.totalorder %s25, 0
      %p73 = por %p71, %p72
      %s75 = sadd.s32 %s74, 1
      %p78 = scmp.eq.s32.totalorder %s19, 3
      %p79 = scmp.ne.s32.totalorder %s74, %s76
      %p80 = scmp.eq.s32.totalorder %s19, 0
      %p81 = por %p79, %p80
      %p82 = scmp.ne.s32.totalorder %s74, %s76
      %p83 = scmp.eq.s32.totalorder %s24, 3
      %p84 = por %p82, %p83
      %p85 = scmp.ne.s32.totalorder %s76, %s77
      %p86 = scmp.eq.s32.totalorder %s24, 0
      %p87 = por %p85, %p86
      %p88 = scmp.ne.s32.totalorder %s76, %s77
      %p89 = scmp.eq.s32.totalorder %s25, 3
      %p90 = por %p88, %p89
      %p92 = scmp.ne.s32.totalorder %s77, %s91
      %p93 = scmp.eq.s32.totalorder %s25, 0
      %p94 = por %p92, %p93
      %s96 = sadd.s32 %s95, 1
      %p99 = scmp.eq.s32.totalorder %s19, 3
      %p100 = scmp.ne.s32.totalorder %s95, %s97
      %p101 = scmp.eq.s32.totalorder %s19, 0
      %p102 = por %p100, %p101
      %p103 = scmp.ne.s32.totalorder %s95, %s97
      %p104 = scmp.eq.s32.totalorder %s24, 3
      %p105 = por %p103, %p104
      %p106 = scmp.ne.s32.totalorder %s97, %s98
      %p107 = scmp.eq.s32.totalorder %s24, 0
      %p108 = por %p106, %p107
      %p109 = scmp.ne.s32.totalorder %s97, %s98
      %p110 = scmp.eq.s32.totalorder %s25, 3
      %p111 = por %p109, %p110
      %p113 = scmp.ne.s32.totalorder %s98, %s112
      %p114 = scmp.eq.s32.totalorder %s25, 0
      %p115 = por %p113, %p114
      %s117 = sadd.s32 %s116, 1
      %p120 = scmp.eq.s32.totalorder %s19, 3
      %p121 = scmp.ne.s32.totalorder %s116, %s118
      %p122 = scmp.eq.s32.totalorder %s19, 0
      %p123 = por %p121, %p122
      %p124 = scmp.ne.s32.totalorder %s116, %s118
      %p125 = scmp.eq.s32.totalorder %s24, 3
      %p126 = por %p124, %p125
      %p127 = scmp.ne.s32.totalorder %s118, %s119
      %p128 = scmp.eq.s32.totalorder %s24, 0
      %p129 = por %p127, %p128
      %p130 = scmp.ne.s32.totalorder %s118, %s119
      %p131 = scmp.eq.s32.totalorder %s25, 3
      %p132 = por %p130, %p131
      %p134 = scmp.ne.s32.totalorder %s119, %s133
      %p135 = scmp.eq.s32.totalorder %s25, 0
      %p136 = por %p134, %p135
      %s138 = sadd.s32 %s137, 1
      %p141 = scmp.eq.s32.totalorder %s19, 3
      %p142 = scmp.ne.s32.totalorder %s137, %s139
      %p143 = scmp.eq.s32.totalorder %s19, 0
      %p144 = por %p142, %p143
      %p145 = scmp.ne.s32.totalorder %s137, %s139
      %p146 = scmp.eq.s32.totalorder %s24, 3
      %p147 = por %p145, %p146
      %p148 = scmp.ne.s32.totalorder %s139, %s140
      %p149 = scmp.eq.s32.totalorder %s24, 0
      %p150 = por %p148, %p149
      %p151 = scmp.ne.s32.totalorder %s139, %s140
      %p152 = scmp.eq.s32.totalorder %s25, 3
      %p153 = por %p151, %p152
      %p155 = scmp.ne.s32.totalorder %s140, %s154
      %p156 = scmp.eq.s32.totalorder %s25, 0
      %p157 = por %p155, %p156
      %s159 = sadd.s32 %s158, 1
      %p162 = scmp.eq.s32.totalorder %s19, 3
      %p163 = scmp.ne.s32.totalorder %s158, %s160
      %p164 = scmp.eq.s32.totalorder %s19, 0
      %p165 = por %p163, %p164
      %p166 = scmp.ne.s32.totalorder %s158, %s160
      %p167 = scmp.eq.s32.totalorder %s24, 3
      %p168 = por %p166, %p167
      %p169 = scmp.ne.s32.totalorder %s160, %s161
      %p170 = scmp.eq.s32.totalorder %s24, 0
      %p171 = por %p169, %p170
      %p172 = scmp.ne.s32.totalorder %s160, %s161
      %p173 = scmp.eq.s32.totalorder %s25, 3
      %p174 = por %p172, %p173
      %p176 = scmp.ne.s32.totalorder %s161, %s175
      %p177 = scmp.eq.s32.totalorder %s25, 0
      %p178 = por %p176, %p177
      %s180 = sadd.s32 %s179, 1
      %p183 = scmp.eq.s32.totalorder %s19, 3
      %p184 = scmp.ne.s32.totalorder %s179, %s181
      %p185 = scmp.eq.s32.totalorder %s19, 0
      %p186 = por %p184, %p185
      %p187 = scmp.ne.s32.totalorder %s179, %s181
      %p188 = scmp.eq.s32.totalorder %s24, 3
      %p189 = por %p187, %p188
      %p190 = scmp.ne.s32.totalorder %s181, %s182
      %p191 = scmp.eq.s32.totalorder %s24, 0
      %p192 = por %p190, %p191
      %p193 = scmp.ne.s32.totalorder %s181, %s182
      %p194 = scmp.eq.s32.totalorder %s25, 3
      %p195 = por %p193, %p194
      %p197 = scmp.ne.s32.totalorder %s182, %s196
      %p198 = scmp.eq.s32.totalorder %s25, 0
      %p199 = por %p197, %p198
      %s200 = ssub.s32 %s19, %s26
      %p201 = scmp.eq.s32.totalorder %s200, 0
      %s203 = sadd.s32 %s202, 1
      %s204 = scalar_select %p201, %s202, %s203
      %p207 = pneg %p201
      %p208 = scmp.eq.s32.totalorder %s19, 3
      %p209 = por %p207, %p208
      %p210 = scmp.ne.s32.totalorder %s202, %s205
      %p211 = scmp.eq.s32.totalorder %s19, 0
      %p212 = por %p210, %p211
      %p213 = scmp.ne.s32.totalorder %s202, %s205
      %p214 = scmp.eq.s32.totalorder %s24, 3
      %p215 = por %p213, %p214
      %p216 = scmp.ne.s32.totalorder %s205, %s206
      %p217 = scmp.eq.s32.totalorder %s24, 0
      %p218 = por %p216, %p217
      %p219 = scmp.ne.s32.totalorder %s205, %s206
      %p220 = scmp.eq.s32.totalorder %s25, 3
      %p221 = por %p219, %p220
      %p223 = scmp.ne.s32.totalorder %s206, %s222
      %p224 = scmp.eq.s32.totalorder %s25, 0
      %p225 = por %p223, %p224
      %p226 = scmp.le.s32.totalorder 1, %s19
      %p227 = scmp.lt.s32.totalorder %s19, 5
      %p228 = pnand %p226, %p227
      %p229 = pneg %p228
      // Predicated region
      $region9: #{tpu_custom_call.1} parent=5 // pred_check
        _
      $region10: #{tpu_custom_call.1} parent=5 // pred_check_branch
        %231 = sbr.rel (%p228) target = $region12
      $region11: #{tpu_custom_call.1} parent=5 // pred_region
        %s232 = ssub.s32 %s19, 1
        // Predicated region
        $region13: #{tpu_custom_call.1} parent=11 // pred_check
          %p233 = pneg %p66
        $region14: #{tpu_custom_call.1} parent=11 // pred_check_branch
          %235 = sbr.rel (%p233) target = $region16
        $region15: #{tpu_custom_call.1} parent=11 // pred_region
          _
        $region16: #{tpu_custom_call.1} parent=11 // pred_fallthru
          _
        // Predicated region
        $region17: #{tpu_custom_call.1} parent=11 // pred_check
          %p236 = pneg %p87
        $region18: #{tpu_custom_call.1} parent=11 // pred_check_branch
          %238 = sbr.rel (%p236) target = $region20
        $region19: #{tpu_custom_call.1} parent=11 // pred_region
          _
        $region20: #{tpu_custom_call.1} parent=11 // pred_fallthru
          _
        // Predicated region
        $region21: #{tpu_custom_call.1} parent=11 // pred_check
          %p239 = pneg %p108
        $region22: #{tpu_custom_call.1} parent=11 // pred_check_branch
          %241 = sbr.rel (%p239) target = $region24
        $region23: #{tpu_custom_call.1} parent=11 // pred_region
          _
        $region24: #{tpu_custom_call.1} parent=11 // pred_fallthru
          _
        // Predicated region
        $region25: #{tpu_custom_call.1} parent=11 // pred_check
          %p242 = pneg %p129
        $region26: #{tpu_custom_call.1} parent=11 // pred_check_branch
          %244 = sbr.rel (%p242) target = $region28
        $region27: #{tpu_custom_call.1} parent=11 // pred_region
          _
        $region28: #{tpu_custom_call.1} parent=11 // pred_fallthru
          _
        // Predicated region
        $region29: #{tpu_custom_call.1} parent=11 // pred_check
          %p245 = pneg %p150
        $region30: #{tpu_custom_call.1} parent=11 // pred_check_branch
          %247 = sbr.rel (%p245) target = $region32
        $region31: #{tpu_custom_call.1} parent=11 // pred_region
          _
        $region32: #{tpu_custom_call.1} parent=11 // pred_fallthru
          _
        // Predicated region
        $region33: #{tpu_custom_call.1} parent=11 // pred_check
          %p248 = pneg %p171
        $region34: #{tpu_custom_call.1} parent=11 // pred_check_branch
          %250 = sbr.rel (%p248) target = $region36
        $region35: #{tpu_custom_call.1} parent=11 // pred_region
          _
        $region36: #{tpu_custom_call.1} parent=11 // pred_fallthru
          _
        // Predicated region
        $region37: #{tpu_custom_call.1} parent=11 // pred_check
          %p251 = pneg %p192
        $region38: #{tpu_custom_call.1} parent=11 // pred_check_branch
          %253 = sbr.rel (%p251) target = $region40
        $region39: #{tpu_custom_call.1} parent=11 // pred_region
          _
        $region40: #{tpu_custom_call.1} parent=11 // pred_fallthru
          _
      $region12: #{tpu_custom_call.1} parent=5 // pred_fallthru
        _
      %p254 = scmp.lt.s32.totalorder %s19, 4
      // Predicated region
      $region41: #{tpu_custom_call.1} parent=5 // pred_check
        %p255 = pneg %p254
      $region42: #{tpu_custom_call.1} parent=5 // pred_check_branch
        %257 = sbr.rel (%p255) target = $region44
      $region43: #{tpu_custom_call.1} parent=5 // pred_region
        // Predicated region
        $region45: #{tpu_custom_call.1} parent=43 // pred_check
          %p258 = pneg %p39
        $region46: #{tpu_custom_call.1} parent=43 // pred_check_branch
          %260 = sbr.rel (%p258) target = $region48
        $region47: #{tpu_custom_call.1} parent=43 // pred_region
          %s261 = smul.u32 4, %s19
          %p262 = scmp.lt.s32.totalorder %s261, 15
          %s263 = scalar_select %p262, %s261, 15
          %s264 = smul.addr %s263, 4
          %s265 = scalar_lea.vmem %s0, %s264
          %s266 = smul.u32 4, %s19
        $region48: #{tpu_custom_call.1} parent=43 // pred_fallthru
          _
      $region44: #{tpu_custom_call.1} parent=5 // pred_fallthru
        _
      %p267 = scmp.le.s32.totalorder 1, %s19
      %p268 = scmp.lt.s32.totalorder %s19, 5
      %p269 = pnand %p267, %p268
      %p270 = pneg %p269
      // Predicated region
      $region49: #{tpu_custom_call.1} parent=5 // pred_check
        _
      $region50: #{tpu_custom_call.1} parent=5 // pred_check_branch
        %272 = sbr.rel (%p269) target = $region52
      $region51: #{tpu_custom_call.1} parent=5 // pred_region
        %s273 = ssub.s32 %s19, 1
        %s274 = smul.u32 4, %s24
        %p275 = scmp.lt.s32.totalorder %s274, 15
        %s276 = scalar_select %p275, %s274, 15
        %s277 = smul.addr %s276, 4
        %s278 = scalar_lea.vmem %s0, %s277
        %p279 = pneg %p45
        %p280 = pneg %p42
        %p281 = pneg %p66
        %p282 = pneg %p63
        %p283 = pneg %p87
        %p284 = pneg %p84
        %p285 = pneg %p108
        %p286 = pneg %p105
        %p287 = pneg %p129
        %p288 = pneg %p126
        %p289 = pneg %p150
        %p290 = pneg %p147
        %p291 = pneg %p171
        %p292 = pneg %p168
        %p293 = pneg %p192
        %p294 = pneg %p189
        %p295 = pneg %p218
        %p296 = pneg %p215
        %s297 = sand.u32 %s205, 1
        %s298 = scalar_lea.sflag [#allocation4], %s297
        %s299 = sand.u32 %s205, 1
        %s300 = smul.addr %s299, 4
        %s301 = scalar_lea.vmem [#allocation3], %s300
        %s302 = smul.u32 4, %s24
        %p303 = scmp.lt.s32.totalorder %s302, 15
        %s304 = scalar_select %p303, %s302, 15
        %s305 = smul.addr %s304, 4
        %s306 = scalar_lea.vmem %s0, %s305
        %s307 = smul.u32 4, %s24
        %s308 = smul.u32 4, %s24
        %v310 = vld [vmem:[%s306] ss:$4 sm:$0xf]
        %s311 = scalar_lea.vmem %s306, 1
        %v312 = vld [vmem:[%s311] ss:$4 sm:$0xf]
        %s313 = scalar_lea.vmem %s306, 2
        %v314 = vld [vmem:[%s313] ss:$4 sm:$0xf]
        %v315 = vlaneseq
        %v316 = vshrl.u32 %v315, 7
        %v317 = vadd.s32 %v316, 8
        %v318 = vadd.f32 %v310, 1.0
        %v319 = vmul.f32 %v318, 7.5
        %v320 = vfloor.f32 %v319
        %v321 = vsub.f32 %v319, %v320
        %v322 = vsub.f32 1.0, %v321
        %v323 = vcvt.f32.s32.to.zero.pseudo %v320
        %v324 = vlaneseq
        %v325 = vshrl.u32 %v324, 7
        %v326 = vsub.s32 0, %v325
        %v327 = vrot.slane %v323, %v326
        %v328 = vlaneseq
        %v329 = vshrl.u32 %v328, 7
        %v330 = vsub.s32 1, %v329
        %v331 = vrot.slane %v323, %v330
        %v332 = vlaneseq
        %v333 = vshrl.u32 %v332, 7
        %v334 = vsub.s32 2, %v333
        %v335 = vrot.slane %v323, %v334
        %v336 = vlaneseq
        %v337 = vshrl.u32 %v336, 7
        %v338 = vsub.s32 3, %v337
        %v339 = vrot.slane %v323, %v338
        %vm340 = vcmp.eq.s32.totalorder %v316, %v327
        %vm341 = vcmp.eq.s32.totalorder %v316, %v331
        %vm342 = vcmp.eq.s32.totalorder %v316, %v335
        %vm343 = vcmp.eq.s32.totalorder %v316, %v339
        %vm344 = vcmp.eq.s32.totalorder %v317, %v327
        %vm345 = vcmp.eq.s32.totalorder %v317, %v331
        %vm346 = vcmp.eq.s32.totalorder %v317, %v335
        %vm347 = vcmp.eq.s32.totalorder %v317, %v339
        %v349 = vlaneseq
        %v350 = vshrl.u32 %v349, 7
        %v351 = vsub.s32 0, %v350
        %v352 = vrot.slane %v322, %v351
        %v353 = vlaneseq
        %v354 = vshrl.u32 %v353, 7
        %v355 = vsub.s32 1, %v354
        %v356 = vrot.slane %v322, %v355
        %v357 = vlaneseq
        %v358 = vshrl.u32 %v357, 7
        %v359 = vsub.s32 2, %v358
        %v360 = vrot.slane %v322, %v359
        %v361 = vlaneseq
        %v362 = vshrl.u32 %v361, 7
        %v363 = vsub.s32 3, %v362
        %v364 = vrot.slane %v322, %v363
        %v369 = vsel %vm340, %v352, 0.0
        %v370 = vsel %vm341, %v356, 0.0
        %v371 = vsel %vm342, %v360, 0.0
        %v372 = vsel %vm343, %v364, 0.0
        %v373 = vsel %vm344, %v352, 0.0
        %v374 = vsel %vm345, %v356, 0.0
        %v375 = vsel %vm346, %v360, 0.0
        %v376 = vsel %vm347, %v364, 0.0
        %v377 = vadd.s32 %v323, 1
        %v378 = vlaneseq
        %v379 = vshrl.u32 %v378, 7
        %v380 = vsub.s32 0, %v379
        %v381 = vrot.slane %v377, %v380
        %v382 = vlaneseq
        %v383 = vshrl.u32 %v382, 7
        %v384 = vsub.s32 1, %v383
        %v385 = vrot.slane %v377, %v384
        %v386 = vlaneseq
        %v387 = vshrl.u32 %v386, 7
        %v388 = vsub.s32 2, %v387
        %v389 = vrot.slane %v377, %v388
        %v390 = vlaneseq
        %v391 = vshrl.u32 %v390, 7
        %v392 = vsub.s32 3, %v391
        %v393 = vrot.slane %v377, %v392
        %vm394 = vcmp.eq.s32.totalorder %v316, %v381
        %vm395 = vcmp.eq.s32.totalorder %v316, %v385
        %vm396 = vcmp.eq.s32.totalorder %v316, %v389
        %vm397 = vcmp.eq.s32.totalorder %v316, %v393
        %vm398 = vcmp.eq.s32.totalorder %v317, %v381
        %vm399 = vcmp.eq.s32.totalorder %v317, %v385
        %vm400 = vcmp.eq.s32.totalorder %v317, %v389
        %vm401 = vcmp.eq.s32.totalorder %v317, %v393
        %v403 = vlaneseq
        %v404 = vshrl.u32 %v403, 7
        %v405 = vsub.s32 0, %v404
        %v406 = vrot.slane %v321, %v405
        %v407 = vlaneseq
        %v408 = vshrl.u32 %v407, 7
        %v409 = vsub.s32 1, %v408
        %v410 = vrot.slane %v321, %v409
        %v411 = vlaneseq
        %v412 = vshrl.u32 %v411, 7
        %v413 = vsub.s32 2, %v412
        %v414 = vrot.slane %v321, %v413
        %v415 = vlaneseq
        %v416 = vshrl.u32 %v415, 7
        %v417 = vsub.s32 3, %v416
        %v418 = vrot.slane %v321, %v417
        %v423 = vsel %vm394, %v406, 0.0
        %v424 = vsel %vm395, %v410, 0.0
        %v425 = vsel %vm396, %v414, 0.0
        %v426 = vsel %vm397, %v418, 0.0
        %v427 = vsel %vm398, %v406, 0.0
        %v428 = vsel %vm399, %v410, 0.0
        %v429 = vsel %vm400, %v414, 0.0
        %v430 = vsel %vm401, %v418, 0.0
        %v431 = vadd.f32 %v369, %v423
        %v432 = vadd.f32 %v370, %v424
        %v433 = vadd.f32 %v371, %v425
        %v434 = vadd.f32 %v372, %v426
        %v435 = vadd.f32 %v373, %v427
        %v436 = vadd.f32 %v374, %v428
        %v437 = vadd.f32 %v375, %v429
        %v438 = vadd.f32 %v376, %v430
        %v439 = vadd.f32 %v312, 1.0
        %v440 = vmul.f32 %v439, 7.5
        %v441 = vfloor.f32 %v440
        %v442 = vsub.f32 %v440, %v441
        %v443 = vsub.f32 1.0, %v442
        %v444 = vcvt.f32.s32.to.zero.pseudo %v441
        %v445 = vlaneseq
        %v446 = vshrl.u32 %v445, 7
        %v447 = vsub.s32 0, %v446
        %v448 = vrot.slane %v444, %v447
        %v449 = vlaneseq
        %v450 = vshrl.u32 %v449, 7
        %v451 = vsub.s32 1, %v450
        %v452 = vrot.slane %v444, %v451
        %v453 = vlaneseq
        %v454 = vshrl.u32 %v453, 7
        %v455 = vsub.s32 2, %v454
        %v456 = vrot.slane %v444, %v455
        %v457 = vlaneseq
        %v458 = vshrl.u32 %v457, 7
        %v459 = vsub.s32 3, %v458
        %v460 = vrot.slane %v444, %v459
        %vm461 = vcmp.eq.s32.totalorder %v316, %v448
        %vm462 = vcmp.eq.s32.totalorder %v316, %v452
        %vm463 = vcmp.eq.s32.totalorder %v316, %v456
        %vm464 = vcmp.eq.s32.totalorder %v316, %v460
        %vm465 = vcmp.eq.s32.totalorder %v317, %v448
        %vm466 = vcmp.eq.s32.totalorder %v317, %v452
        %vm467 = vcmp.eq.s32.totalorder %v317, %v456
        %vm468 = vcmp.eq.s32.totalorder %v317, %v460
        %v470 = vlaneseq
        %v471 = vshrl.u32 %v470, 7
        %v472 = vsub.s32 0, %v471
        %v473 = vrot.slane %v443, %v472
        %v474 = vlaneseq
        %v475 = vshrl.u32 %v474, 7
        %v476 = vsub.s32 1, %v475
        %v477 = vrot.slane %v443, %v476
        %v478 = vlaneseq
        %v479 = vshrl.u32 %v478, 7
        %v480 = vsub.s32 2, %v479
        %v481 = vrot.slane %v443, %v480
        %v482 = vlaneseq
        %v483 = vshrl.u32 %v482, 7
        %v484 = vsub.s32 3, %v483
        %v485 = vrot.slane %v443, %v484
        %v490 = vsel %vm461, %v473, 0.0
        %v491 = vsel %vm462, %v477, 0.0
        %v492 = vsel %vm463, %v481, 0.0
        %v493 = vsel %vm464, %v485, 0.0
        %v494 = vsel %vm465, %v473, 0.0
        %v495 = vsel %vm466, %v477, 0.0
        %v496 = vsel %vm467, %v481, 0.0
        %v497 = vsel %vm468, %v485, 0.0
        %v498 = vadd.s32 %v444, 1
        %v499 = vlaneseq
        %v500 = vshrl.u32 %v499, 7
        %v501 = vsub.s32 0, %v500
        %v502 = vrot.slane %v498, %v501
        %v503 = vlaneseq
        %v504 = vshrl.u32 %v503, 7
        %v505 = vsub.s32 1, %v504
        %v506 = vrot.slane %v498, %v505
        %v507 = vlaneseq
        %v508 = vshrl.u32 %v507, 7
        %v509 = vsub.s32 2, %v508
        %v510 = vrot.slane %v498, %v509
        %v511 = vlaneseq
        %v512 = vshrl.u32 %v511, 7
        %v513 = vsub.s32 3, %v512
        %v514 = vrot.slane %v498, %v513
        %vm515 = vcmp.eq.s32.totalorder %v316, %v502
        %vm516 = vcmp.eq.s32.totalorder %v316, %v506
        %vm517 = vcmp.eq.s32.totalorder %v316, %v510
        %vm518 = vcmp.eq.s32.totalorder %v316, %v514
        %vm519 = vcmp.eq.s32.totalorder %v317, %v502
        %vm520 = vcmp.eq.s32.totalorder %v317, %v506
        %vm521 = vcmp.eq.s32.totalorder %v317, %v510
        %vm522 = vcmp.eq.s32.totalorder %v317, %v514
        %v524 = vlaneseq
        %v525 = vshrl.u32 %v524, 7
        %v526 = vsub.s32 0, %v525
        %v527 = vrot.slane %v442, %v526
        %v528 = vlaneseq
        %v529 = vshrl.u32 %v528, 7
        %v530 = vsub.s32 1, %v529
        %v531 = vrot.slane %v442, %v530
        %v532 = vlaneseq
        %v533 = vshrl.u32 %v532, 7
        %v534 = vsub.s32 2, %v533
        %v535 = vrot.slane %v442, %v534
        %v536 = vlaneseq
        %v537 = vshrl.u32 %v536, 7
        %v538 = vsub.s32 3, %v537
        %v539 = vrot.slane %v442, %v538
        %v544 = vsel %vm515, %v527, 0.0
        %v545 = vsel %vm516, %v531, 0.0
        %v546 = vsel %vm517, %v535, 0.0
        %v547 = vsel %vm518, %v539, 0.0
        %v548 = vsel %vm519, %v527, 0.0
        %v549 = vsel %vm520, %v531, 0.0
        %v550 = vsel %vm521, %v535, 0.0
        %v551 = vsel %vm522, %v539, 0.0
        %v552 = vadd.f32 %v490, %v544
        %v553 = vadd.f32 %v491, %v545
        %v554 = vadd.f32 %v492, %v546
        %v555 = vadd.f32 %v493, %v547
        %v556 = vadd.f32 %v494, %v548
        %v557 = vadd.f32 %v495, %v549
        %v558 = vadd.f32 %v496, %v550
        %v559 = vadd.f32 %v497, %v551
        %v560 = vadd.f32 %v314, 1.0
        %v561 = vmul.f32 %v560, 7.5
        %v562 = vfloor.f32 %v561
        %v563 = vsub.f32 %v561, %v562
        %v564 = vsub.f32 1.0, %v563
        %v565 = vcvt.f32.s32.to.zero.pseudo %v562
        %v566 = vlaneseq
        %v567 = vshrl.u32 %v566, 7
        %v568 = vsub.s32 0, %v567
        %v569 = vrot.slane %v565, %v568
        %v570 = vlaneseq
        %v571 = vshrl.u32 %v570, 7
        %v572 = vsub.s32 1, %v571
        %v573 = vrot.slane %v565, %v572
        %v574 = vlaneseq
        %v575 = vshrl.u32 %v574, 7
        %v576 = vsub.s32 2, %v575
        %v577 = vrot.slane %v565, %v576
        %v578 = vlaneseq
        %v579 = vshrl.u32 %v578, 7
        %v580 = vsub.s32 3, %v579
        %v581 = vrot.slane %v565, %v580
        %vm582 = vcmp.eq.s32.totalorder %v316, %v569
        %vm583 = vcmp.eq.s32.totalorder %v316, %v573
        %vm584 = vcmp.eq.s32.totalorder %v316, %v577
        %vm585 = vcmp.eq.s32.totalorder %v316, %v581
        %vm586 = vcmp.eq.s32.totalorder %v317, %v569
        %vm587 = vcmp.eq.s32.totalorder %v317, %v573
        %vm588 = vcmp.eq.s32.totalorder %v317, %v577
        %vm589 = vcmp.eq.s32.totalorder %v317, %v581
        %v591 = vlaneseq
        %v592 = vshrl.u32 %v591, 7
        %v593 = vsub.s32 0, %v592
        %v594 = vrot.slane %v564, %v593
        %v595 = vlaneseq
        %v596 = vshrl.u32 %v595, 7
        %v597 = vsub.s32 1, %v596
        %v598 = vrot.slane %v564, %v597
        %v599 = vlaneseq
        %v600 = vshrl.u32 %v599, 7
        %v601 = vsub.s32 2, %v600
        %v602 = vrot.slane %v564, %v601
        %v603 = vlaneseq
        %v604 = vshrl.u32 %v603, 7
        %v605 = vsub.s32 3, %v604
        %v606 = vrot.slane %v564, %v605
        %v611 = vsel %vm582, %v594, 0.0
        %v612 = vsel %vm583, %v598, 0.0
        %v613 = vsel %vm584, %v602, 0.0
        %v614 = vsel %vm585, %v606, 0.0
        %v615 = vsel %vm586, %v594, 0.0
        %v616 = vsel %vm587, %v598, 0.0
        %v617 = vsel %vm588, %v602, 0.0
        %v618 = vsel %vm589, %v606, 0.0
        %v619 = vadd.s32 %v565, 1
        %v620 = vlaneseq
        %v621 = vshrl.u32 %v620, 7
        %v622 = vsub.s32 0, %v621
        %v623 = vrot.slane %v619, %v622
        %v624 = vlaneseq
        %v625 = vshrl.u32 %v624, 7
        %v626 = vsub.s32 1, %v625
        %v627 = vrot.slane %v619, %v626
        %v628 = vlaneseq
        %v629 = vshrl.u32 %v628, 7
        %v630 = vsub.s32 2, %v629
        %v631 = vrot.slane %v619, %v630
        %v632 = vlaneseq
        %v633 = vshrl.u32 %v632, 7
        %v634 = vsub.s32 3, %v633
        %v635 = vrot.slane %v619, %v634
        %vm636 = vcmp.eq.s32.totalorder %v316, %v623
        %vm637 = vcmp.eq.s32.totalorder %v316, %v627
        %vm638 = vcmp.eq.s32.totalorder %v316, %v631
        %vm639 = vcmp.eq.s32.totalorder %v316, %v635
        %vm640 = vcmp.eq.s32.totalorder %v317, %v623
        %vm641 = vcmp.eq.s32.totalorder %v317, %v627
        %vm642 = vcmp.eq.s32.totalorder %v317, %v631
        %vm643 = vcmp.eq.s32.totalorder %v317, %v635
        %v645 = vlaneseq
        %v646 = vshrl.u32 %v645, 7
        %v647 = vsub.s32 0, %v646
        %v648 = vrot.slane %v563, %v647
        %v649 = vlaneseq
        %v650 = vshrl.u32 %v649, 7
        %v651 = vsub.s32 1, %v650
        %v652 = vrot.slane %v563, %v651
        %v653 = vlaneseq
        %v654 = vshrl.u32 %v653, 7
        %v655 = vsub.s32 2, %v654
        %v656 = vrot.slane %v563, %v655
        %v657 = vlaneseq
        %v658 = vshrl.u32 %v657, 7
        %v659 = vsub.s32 3, %v658
        %v660 = vrot.slane %v563, %v659
        %v665 = vsel %vm636, %v648, 0.0
        %v666 = vsel %vm637, %v652, 0.0
        %v667 = vsel %vm638, %v656, 0.0
        %v668 = vsel %vm639, %v660, 0.0
        %v669 = vsel %vm640, %v648, 0.0
        %v670 = vsel %vm641, %v652, 0.0
        %v671 = vsel %vm642, %v656, 0.0
        %v672 = vsel %vm643, %v660, 0.0
        %v673 = vadd.f32 %v611, %v665
        %v674 = vadd.f32 %v612, %v666
        %v675 = vadd.f32 %v613, %v667
        %v676 = vadd.f32 %v614, %v668
        %v677 = vadd.f32 %v615, %v669
        %v678 = vadd.f32 %v616, %v670
        %v679 = vadd.f32 %v617, %v671
        %v680 = vadd.f32 %v618, %v672
        %v689 = vcombine.low %v552, %v553
        %v690 = vcombine.high %v552, %v553
        %v691 = vcombine.low %v554, %v555
        %v692 = vcombine.high %v554, %v555
        %v694 = vunpack.c.l.s4 1966171168
        %v695 = vunpack.c.0.s8 %v694
        %v696 = vlaneseq
        %v697 = vshrl.u32 %v696, 7
        %v698 = vsub.s32 %v695, %v697
        %v699 = vrot.slane %v689, %v698
        %v701 = vunpack.c.l.s4 1966171168
        %v702 = vunpack.c.0.s8 %v701
        %v703 = vlaneseq
        %v704 = vshrl.u32 %v703, 7
        %v705 = vsub.s32 %v702, %v704
        %v706 = vrot.slane %v690, %v705
        %v708 = vunpack.c.l.s4 1966171168
        %v709 = vunpack.c.0.s8 %v708
        %v710 = vlaneseq
        %v711 = vshrl.u32 %v710, 7
        %v712 = vsub.s32 %v709, %v711
        %v713 = vrot.slane %v691, %v712
        %v715 = vunpack.c.l.s4 1966171168
        %v716 = vunpack.c.0.s8 %v715
        %v717 = vlaneseq
        %v718 = vshrl.u32 %v717, 7
        %v719 = vsub.s32 %v716, %v718
        %v720 = vrot.slane %v692, %v719
        %v721 = vcombine.low %v699, %v713
        %v722 = vcombine.high %v699, %v713
        %v723 = vcombine.low %v706, %v720
        %v724 = vcombine.high %v706, %v720
        %v726 = vunpack.c.l.s4 1966171168
        %v727 = vunpack.c.0.s8 %v726
        %v728 = vlaneseq
        %v729 = vshrl.u32 %v728, 7
        %v730 = vsub.s32 %v727, %v729
        %v731 = vrot.slane %v721, %v730
        %v733 = vunpack.c.l.s4 1966171168
        %v734 = vunpack.c.0.s8 %v733
        %v735 = vlaneseq
        %v736 = vshrl.u32 %v735, 7
        %v737 = vsub.s32 %v734, %v736
        %v738 = vrot.slane %v723, %v737
        %v740 = vunpack.c.l.s4 1966171168
        %v741 = vunpack.c.0.s8 %v740
        %v742 = vlaneseq
        %v743 = vshrl.u32 %v742, 7
        %v744 = vsub.s32 %v741, %v743
        %v745 = vrot.slane %v722, %v744
        %v747 = vunpack.c.l.s4 1966171168
        %v748 = vunpack.c.0.s8 %v747
        %v749 = vlaneseq
        %v750 = vshrl.u32 %v749, 7
        %v751 = vsub.s32 %v748, %v750
        %v752 = vrot.slane %v724, %v751
        %v753 = vcombine.high %v731, %v731
        %v754 = vcombine.high %v738, %v738
        %v755 = vcombine.high %v745, %v745
        %v756 = vcombine.high %v752, %v752
        %v757 = vcombine.low %v556, %v557
        %v758 = vcombine.high %v556, %v557
        %v759 = vcombine.low %v558, %v559
        %v760 = vcombine.high %v558, %v559
        %v762 = vunpack.c.l.s4 1966171168
        %v763 = vunpack.c.0.s8 %v762
        %v764 = vlaneseq
        %v765 = vshrl.u32 %v764, 7
        %v766 = vsub.s32 %v763, %v765
        %v767 = vrot.slane %v757, %v766
        %v769 = vunpack.c.l.s4 1966171168
        %v770 = vunpack.c.0.s8 %v769
        %v771 = vlaneseq
        %v772 = vshrl.u32 %v771, 7
        %v773 = vsub.s32 %v770, %v772
        %v774 = vrot.slane %v758, %v773
        %v776 = vunpack.c.l.s4 1966171168
        %v777 = vunpack.c.0.s8 %v776
        %v778 = vlaneseq
        %v779 = vshrl.u32 %v778, 7
        %v780 = vsub.s32 %v777, %v779
        %v781 = vrot.slane %v759, %v780
        %v783 = vunpack.c.l.s4 1966171168
        %v784 = vunpack.c.0.s8 %v783
        %v785 = vlaneseq
        %v786 = vshrl.u32 %v785, 7
        %v787 = vsub.s32 %v784, %v786
        %v788 = vrot.slane %v760, %v787
        %v789 = vcombine.low %v767, %v781
        %v790 = vcombine.high %v767, %v781
        %v791 = vcombine.low %v774, %v788
        %v792 = vcombine.high %v774, %v788
        %v794 = vunpack.c.l.s4 1966171168
        %v795 = vunpack.c.0.s8 %v794
        %v796 = vlaneseq
        %v797 = vshrl.u32 %v796, 7
        %v798 = vsub.s32 %v795, %v797
        %v799 = vrot.slane %v789, %v798
        %v801 = vunpack.c.l.s4 1966171168
        %v802 = vunpack.c.0.s8 %v801
        %v803 = vlaneseq
        %v804 = vshrl.u32 %v803, 7
        %v805 = vsub.s32 %v802, %v804
        %v806 = vrot.slane %v791, %v805
        %v808 = vunpack.c.l.s4 1966171168
        %v809 = vunpack.c.0.s8 %v808
        %v810 = vlaneseq
        %v811 = vshrl.u32 %v810, 7
        %v812 = vsub.s32 %v809, %v811
        %v813 = vrot.slane %v790, %v812
        %v815 = vunpack.c.l.s4 1966171168
        %v816 = vunpack.c.0.s8 %v815
        %v817 = vlaneseq
        %v818 = vshrl.u32 %v817, 7
        %v819 = vsub.s32 %v816, %v818
        %v820 = vrot.slane %v792, %v819
        %v821 = vcombine.high %v799, %v799
        %v822 = vcombine.high %v806, %v806
        %v823 = vcombine.high %v813, %v813
        %v824 = vcombine.high %v820, %v820
        %v825 = vlaneseq
        %v826 = vshrl.u32 %v825, 7
        %v827 = vsub.s32 0, %v826
        %v828 = vrot.slane %v731, %v827
        %v829 = vlaneseq
        %v830 = vshrl.u32 %v829, 7
        %v831 = vsub.s32 1, %v830
        %v832 = vrot.slane %v731, %v831
        %v833 = vlaneseq
        %v834 = vshrl.u32 %v833, 7
        %v835 = vsub.s32 2, %v834
        %v836 = vrot.slane %v731, %v835
        %v837 = vlaneseq
        %v838 = vshrl.u32 %v837, 7
        %v839 = vsub.s32 3, %v838
        %v840 = vrot.slane %v731, %v839
        %v841 = vlaneseq
        %v842 = vshrl.u32 %v841, 7
        %v843 = vsub.s32 0, %v842
        %v844 = vrot.slane %v745, %v843
        %v845 = vlaneseq
        %v846 = vshrl.u32 %v845, 7
        %v847 = vsub.s32 1, %v846
        %v848 = vrot.slane %v745, %v847
        %v849 = vlaneseq
        %v850 = vshrl.u32 %v849, 7
        %v851 = vsub.s32 2, %v850
        %v852 = vrot.slane %v745, %v851
        %v853 = vlaneseq
        %v854 = vshrl.u32 %v853, 7
        %v855 = vsub.s32 3, %v854
        %v856 = vrot.slane %v745, %v855
        %v857 = vlaneseq
        %v858 = vshrl.u32 %v857, 7
        %v859 = vsub.s32 0, %v858
        %v860 = vrot.slane %v753, %v859
        %v861 = vlaneseq
        %v862 = vshrl.u32 %v861, 7
        %v863 = vsub.s32 1, %v862
        %v864 = vrot.slane %v753, %v863
        %v865 = vlaneseq
        %v866 = vshrl.u32 %v865, 7
        %v867 = vsub.s32 2, %v866
        %v868 = vrot.slane %v753, %v867
        %v869 = vlaneseq
        %v870 = vshrl.u32 %v869, 7
        %v871 = vsub.s32 3, %v870
        %v872 = vrot.slane %v753, %v871
        %v873 = vlaneseq
        %v874 = vshrl.u32 %v873, 7
        %v875 = vsub.s32 0, %v874
        %v876 = vrot.slane %v755, %v875
        %v877 = vlaneseq
        %v878 = vshrl.u32 %v877, 7
        %v879 = vsub.s32 1, %v878
        %v880 = vrot.slane %v755, %v879
        %v881 = vlaneseq
        %v882 = vshrl.u32 %v881, 7
        %v883 = vsub.s32 2, %v882
        %v884 = vrot.slane %v755, %v883
        %v885 = vlaneseq
        %v886 = vshrl.u32 %v885, 7
        %v887 = vsub.s32 3, %v886
        %v888 = vrot.slane %v755, %v887
        %v889 = vlaneseq
        %v890 = vshrl.u32 %v889, 7
        %v891 = vsub.s32 0, %v890
        %v892 = vrot.slane %v738, %v891
        %v893 = vlaneseq
        %v894 = vshrl.u32 %v893, 7
        %v895 = vsub.s32 1, %v894
        %v896 = vrot.slane %v738, %v895
        %v897 = vlaneseq
        %v898 = vshrl.u32 %v897, 7
        %v899 = vsub.s32 2, %v898
        %v900 = vrot.slane %v738, %v899
        %v901 = vlaneseq
        %v902 = vshrl.u32 %v901, 7
        %v903 = vsub.s32 3, %v902
        %v904 = vrot.slane %v738, %v903
        %v905 = vlaneseq
        %v906 = vshrl.u32 %v905, 7
        %v907 = vsub.s32 0, %v906
        %v908 = vrot.slane %v752, %v907
        %v909 = vlaneseq
        %v910 = vshrl.u32 %v909, 7
        %v911 = vsub.s32 1, %v910
        %v912 = vrot.slane %v752, %v911
        %v913 = vlaneseq
        %v914 = vshrl.u32 %v913, 7
        %v915 = vsub.s32 2, %v914
        %v916 = vrot.slane %v752, %v915
        %v917 = vlaneseq
        %v918 = vshrl.u32 %v917, 7
        %v919 = vsub.s32 3, %v918
        %v920 = vrot.slane %v752, %v919
        %v921 = vlaneseq
        %v922 = vshrl.u32 %v921, 7
        %v923 = vsub.s32 0, %v922
        %v924 = vrot.slane %v754, %v923
        %v925 = vlaneseq
        %v926 = vshrl.u32 %v925, 7
        %v927 = vsub.s32 1, %v926
        %v928 = vrot.slane %v754, %v927
        %v929 = vlaneseq
        %v930 = vshrl.u32 %v929, 7
        %v931 = vsub.s32 2, %v930
        %v932 = vrot.slane %v754, %v931
        %v933 = vlaneseq
        %v934 = vshrl.u32 %v933, 7
        %v935 = vsub.s32 3, %v934
        %v936 = vrot.slane %v754, %v935
        %v937 = vlaneseq
        %v938 = vshrl.u32 %v937, 7
        %v939 = vsub.s32 0, %v938
        %v940 = vrot.slane %v756, %v939
        %v941 = vlaneseq
        %v942 = vshrl.u32 %v941, 7
        %v943 = vsub.s32 1, %v942
        %v944 = vrot.slane %v756, %v943
        %v945 = vlaneseq
        %v946 = vshrl.u32 %v945, 7
        %v947 = vsub.s32 2, %v946
        %v948 = vrot.slane %v756, %v947
        %v949 = vlaneseq
        %v950 = vshrl.u32 %v949, 7
        %v951 = vsub.s32 3, %v950
        %v952 = vrot.slane %v756, %v951
        %v953 = vlaneseq
        %v954 = vshrl.u32 %v953, 7
        %v955 = vsub.s32 0, %v954
        %v956 = vrot.slane %v799, %v955
        %v957 = vlaneseq
        %v958 = vshrl.u32 %v957, 7
        %v959 = vsub.s32 1, %v958
        %v960 = vrot.slane %v799, %v959
        %v961 = vlaneseq
        %v962 = vshrl.u32 %v961, 7
        %v963 = vsub.s32 2, %v962
        %v964 = vrot.slane %v799, %v963
        %v965 = vlaneseq
        %v966 = vshrl.u32 %v965, 7
        %v967 = vsub.s32 3, %v966
        %v968 = vrot.slane %v799, %v967
        %v969 = vlaneseq
        %v970 = vshrl.u32 %v969, 7
        %v971 = vsub.s32 0, %v970
        %v972 = vrot.slane %v813, %v971
        %v973 = vlaneseq
        %v974 = vshrl.u32 %v973, 7
        %v975 = vsub.s32 1, %v974
        %v976 = vrot.slane %v813, %v975
        %v977 = vlaneseq
        %v978 = vshrl.u32 %v977, 7
        %v979 = vsub.s32 2, %v978
        %v980 = vrot.slane %v813, %v979
        %v981 = vlaneseq
        %v982 = vshrl.u32 %v981, 7
        %v983 = vsub.s32 3, %v982
        %v984 = vrot.slane %v813, %v983
        %v985 = vlaneseq
        %v986 = vshrl.u32 %v985, 7
        %v987 = vsub.s32 0, %v986
        %v988 = vrot.slane %v821, %v987
        %v989 = vlaneseq
        %v990 = vshrl.u32 %v989, 7
        %v991 = vsub.s32 1, %v990
        %v992 = vrot.slane %v821, %v991
        %v993 = vlaneseq
        %v994 = vshrl.u32 %v993, 7
        %v995 = vsub.s32 2, %v994
        %v996 = vrot.slane %v821, %v995
        %v997 = vlaneseq
        %v998 = vshrl.u32 %v997, 7
        %v999 = vsub.s32 3, %v998
        %v1000 = vrot.slane %v821, %v999
        %v1001 = vlaneseq
        %v1002 = vshrl.u32 %v1001, 7
        %v1003 = vsub.s32 0, %v1002
        %v1004 = vrot.slane %v823, %v1003
        %v1005 = vlaneseq
        %v1006 = vshrl.u32 %v1005, 7
        %v1007 = vsub.s32 1, %v1006
        %v1008 = vrot.slane %v823, %v1007
        %v1009 = vlaneseq
        %v1010 = vshrl.u32 %v1009, 7
        %v1011 = vsub.s32 2, %v1010
        %v1012 = vrot.slane %v823, %v1011
        %v1013 = vlaneseq
        %v1014 = vshrl.u32 %v1013, 7
        %v1015 = vsub.s32 3, %v1014
        %v1016 = vrot.slane %v823, %v1015
        %v1017 = vlaneseq
        %v1018 = vshrl.u32 %v1017, 7
        %v1019 = vsub.s32 0, %v1018
        %v1020 = vrot.slane %v806, %v1019
        %v1021 = vlaneseq
        %v1022 = vshrl.u32 %v1021, 7
        %v1023 = vsub.s32 1, %v1022
        %v1024 = vrot.slane %v806, %v1023
        %v1025 = vlaneseq
        %v1026 = vshrl.u32 %v1025, 7
        %v1027 = vsub.s32 2, %v1026
        %v1028 = vrot.slane %v806, %v1027
        %v1029 = vlaneseq
        %v1030 = vshrl.u32 %v1029, 7
        %v1031 = vsub.s32 3, %v1030
        %v1032 = vrot.slane %v806, %v1031
        %v1033 = vlaneseq
        %v1034 = vshrl.u32 %v1033, 7
        %v1035 = vsub.s32 0, %v1034
        %v1036 = vrot.slane %v820, %v1035
        %v1037 = vlaneseq
        %v1038 = vshrl.u32 %v1037, 7
        %v1039 = vsub.s32 1, %v1038
        %v1040 = vrot.slane %v820, %v1039
        %v1041 = vlaneseq
        %v1042 = vshrl.u32 %v1041, 7
        %v1043 = vsub.s32 2, %v1042
        %v1044 = vrot.slane %v820, %v1043
        %v1045 = vlaneseq
        %v1046 = vshrl.u32 %v1045, 7
        %v1047 = vsub.s32 3, %v1046
        %v1048 = vrot.slane %v820, %v1047
        %v1049 = vlaneseq
        %v1050 = vshrl.u32 %v1049, 7
        %v1051 = vsub.s32 0, %v1050
        %v1052 = vrot.slane %v822, %v1051
        %v1053 = vlaneseq
        %v1054 = vshrl.u32 %v1053, 7
        %v1055 = vsub.s32 1, %v1054
        %v1056 = vrot.slane %v822, %v1055
        %v1057 = vlaneseq
        %v1058 = vshrl.u32 %v1057, 7
        %v1059 = vsub.s32 2, %v1058
        %v1060 = vrot.slane %v822, %v1059
        %v1061 = vlaneseq
        %v1062 = vshrl.u32 %v1061, 7
        %v1063 = vsub.s32 3, %v1062
        %v1064 = vrot.slane %v822, %v1063
        %v1065 = vlaneseq
        %v1066 = vshrl.u32 %v1065, 7
        %v1067 = vsub.s32 0, %v1066
        %v1068 = vrot.slane %v824, %v1067
        %v1069 = vlaneseq
        %v1070 = vshrl.u32 %v1069, 7
        %v1071 = vsub.s32 1, %v1070
        %v1072 = vrot.slane %v824, %v1071
        %v1073 = vlaneseq
        %v1074 = vshrl.u32 %v1073, 7
        %v1075 = vsub.s32 2, %v1074
        %v1076 = vrot.slane %v824, %v1075
        %v1077 = vlaneseq
        %v1078 = vshrl.u32 %v1077, 7
        %v1079 = vsub.s32 3, %v1078
        %v1080 = vrot.slane %v824, %v1079
        %v1145 = vmul.f32 %v828, %v431
        %v1146 = vmul.f32 %v832, %v432
        %v1147 = vmul.f32 %v836, %v433
        %v1148 = vmul.f32 %v840, %v434
        %v1149 = vmul.f32 %v828, %v435
        %v1150 = vmul.f32 %v832, %v436
        %v1151 = vmul.f32 %v836, %v437
        %v1152 = vmul.f32 %v840, %v438
        %v1153 = vmul.f32 %v844, %v431
        %v1154 = vmul.f32 %v848, %v432
        %v1155 = vmul.f32 %v852, %v433
        %v1156 = vmul.f32 %v856, %v434
        %v1157 = vmul.f32 %v844, %v435
        %v1158 = vmul.f32 %v848, %v436
        %v1159 = vmul.f32 %v852, %v437
        %v1160 = vmul.f32 %v856, %v438
        %v1161 = vmul.f32 %v860, %v431
        %v1162 = vmul.f32 %v864, %v432
        %v1163 = vmul.f32 %v868, %v433
        %v1164 = vmul.f32 %v872, %v434
        %v1165 = vmul.f32 %v860, %v435
        %v1166 = vmul.f32 %v864, %v436
        %v1167 = vmul.f32 %v868, %v437
        %v1168 = vmul.f32 %v872, %v438
        %v1169 = vmul.f32 %v876, %v431
        %v1170 = vmul.f32 %v880, %v432
        %v1171 = vmul.f32 %v884, %v433
        %v1172 = vmul.f32 %v888, %v434
        %v1173 = vmul.f32 %v876, %v435
        %v1174 = vmul.f32 %v880, %v436
        %v1175 = vmul.f32 %v884, %v437
        %v1176 = vmul.f32 %v888, %v438
        %v1177 = vmul.f32 %v892, %v431
        %v1178 = vmul.f32 %v896, %v432
        %v1179 = vmul.f32 %v900, %v433
        %v1180 = vmul.f32 %v904, %v434
        %v1181 = vmul.f32 %v892, %v435
        %v1182 = vmul.f32 %v896, %v436
        %v1183 = vmul.f32 %v900, %v437
        %v1184 = vmul.f32 %v904, %v438
        %v1185 = vmul.f32 %v908, %v431
        %v1186 = vmul.f32 %v912, %v432
        %v1187 = vmul.f32 %v916, %v433
        %v1188 = vmul.f32 %v920, %v434
        %v1189 = vmul.f32 %v908, %v435
        %v1190 = vmul.f32 %v912, %v436
        %v1191 = vmul.f32 %v916, %v437
        %v1192 = vmul.f32 %v920, %v438
        %v1193 = vmul.f32 %v924, %v431
        %v1194 = vmul.f32 %v928, %v432
        %v1195 = vmul.f32 %v932, %v433
        %v1196 = vmul.f32 %v936, %v434
        %v1197 = vmul.f32 %v924, %v435
        %v1198 = vmul.f32 %v928, %v436
        %v1199 = vmul.f32 %v932, %v437
        %v1200 = vmul.f32 %v936, %v438
        %v1201 = vmul.f32 %v940, %v431
        %v1202 = vmul.f32 %v944, %v432
        %v1203 = vmul.f32 %v948, %v433
        %v1204 = vmul.f32 %v952, %v434
        %v1205 = vmul.f32 %v940, %v435
        %v1206 = vmul.f32 %v944, %v436
        %v1207 = vmul.f32 %v948, %v437
        %v1208 = vmul.f32 %v952, %v438
        %v1209 = vmul.f32 %v956, %v431
        %v1210 = vmul.f32 %v960, %v432
        %v1211 = vmul.f32 %v964, %v433
        %v1212 = vmul.f32 %v968, %v434
        %v1213 = vmul.f32 %v956, %v435
        %v1214 = vmul.f32 %v960, %v436
        %v1215 = vmul.f32 %v964, %v437
        %v1216 = vmul.f32 %v968, %v438
        %v1217 = vmul.f32 %v972, %v431
        %v1218 = vmul.f32 %v976, %v432
        %v1219 = vmul.f32 %v980, %v433
        %v1220 = vmul.f32 %v984, %v434
        %v1221 = vmul.f32 %v972, %v435
        %v1222 = vmul.f32 %v976, %v436
        %v1223 = vmul.f32 %v980, %v437
        %v1224 = vmul.f32 %v984, %v438
        %v1225 = vmul.f32 %v988, %v431
        %v1226 = vmul.f32 %v992, %v432
        %v1227 = vmul.f32 %v996, %v433
        %v1228 = vmul.f32 %v1000, %v434
        %v1229 = vmul.f32 %v988, %v435
        %v1230 = vmul.f32 %v992, %v436
        %v1231 = vmul.f32 %v996, %v437
        %v1232 = vmul.f32 %v1000, %v438
        %v1233 = vmul.f32 %v1004, %v431
        %v1234 = vmul.f32 %v1008, %v432
        %v1235 = vmul.f32 %v1012, %v433
        %v1236 = vmul.f32 %v1016, %v434
        %v1237 = vmul.f32 %v1004, %v435
        %v1238 = vmul.f32 %v1008, %v436
        %v1239 = vmul.f32 %v1012, %v437
        %v1240 = vmul.f32 %v1016, %v438
        %v1241 = vmul.f32 %v1020, %v431
        %v1242 = vmul.f32 %v1024, %v432
        %v1243 = vmul.f32 %v1028, %v433
        %v1244 = vmul.f32 %v1032, %v434
        %v1245 = vmul.f32 %v1020, %v435
        %v1246 = vmul.f32 %v1024, %v436
        %v1247 = vmul.f32 %v1028, %v437
        %v1248 = vmul.f32 %v1032, %v438
        %v1249 = vmul.f32 %v1036, %v431
        %v1250 = vmul.f32 %v1040, %v432
        %v1251 = vmul.f32 %v1044, %v433
        %v1252 = vmul.f32 %v1048, %v434
        %v1253 = vmul.f32 %v1036, %v435
        %v1254 = vmul.f32 %v1040, %v436
        %v1255 = vmul.f32 %v1044, %v437
        %v1256 = vmul.f32 %v1048, %v438
        %v1257 = vmul.f32 %v1052, %v431
        %v1258 = vmul.f32 %v1056, %v432
        %v1259 = vmul.f32 %v1060, %v433
        %v1260 = vmul.f32 %v1064, %v434
        %v1261 = vmul.f32 %v1052, %v435
        %v1262 = vmul.f32 %v1056, %v436
        %v1263 = vmul.f32 %v1060, %v437
        %v1264 = vmul.f32 %v1064, %v438
        %v1265 = vmul.f32 %v1068, %v431
        %v1266 = vmul.f32 %v1072, %v432
        %v1267 = vmul.f32 %v1076, %v433
        %v1268 = vmul.f32 %v1080, %v434
        %v1269 = vmul.f32 %v1068, %v435
        %v1270 = vmul.f32 %v1072, %v436
        %v1271 = vmul.f32 %v1076, %v437
        %v1272 = vmul.f32 %v1080, %v438
        %v1273 = vld [vmem:[%s1] sm:$0xff]
        %v1274 = vld [vmem:[%s1 + $0x8] sm:$0xff]
        %v1275 = vpack.c.bf16 %v1149, %v1145
        %v1276 = vpack.c.bf16 %v1150, %v1146
        %v1277 = vpack.c.bf16 %v1151, %v1147
        %v1278 = vpack.c.bf16 %v1152, %v1148
        %v1279 = vpack.c.bf16 %v1157, %v1153
        %v1280 = vpack.c.bf16 %v1158, %v1154
        %v1281 = vpack.c.bf16 %v1159, %v1155
        %v1282 = vpack.c.bf16 %v1160, %v1156
        %v1283 = vpack.c.bf16 %v1165, %v1161
        %v1284 = vpack.c.bf16 %v1166, %v1162
        %v1285 = vpack.c.bf16 %v1167, %v1163
        %v1286 = vpack.c.bf16 %v1168, %v1164
        %v1287 = vpack.c.bf16 %v1173, %v1169
        %v1288 = vpack.c.bf16 %v1174, %v1170
        %v1289 = vpack.c.bf16 %v1175, %v1171
        %v1290 = vpack.c.bf16 %v1176, %v1172
        %v1291 = vpack.c.bf16 %v1181, %v1177
        %v1292 = vpack.c.bf16 %v1182, %v1178
        %v1293 = vpack.c.bf16 %v1183, %v1179
        %v1294 = vpack.c.bf16 %v1184, %v1180
        %v1295 = vpack.c.bf16 %v1189, %v1185
        %v1296 = vpack.c.bf16 %v1190, %v1186
        %v1297 = vpack.c.bf16 %v1191, %v1187
        %v1298 = vpack.c.bf16 %v1192, %v1188
        %v1299 = vpack.c.bf16 %v1197, %v1193
        %v1300 = vpack.c.bf16 %v1198, %v1194
        %v1301 = vpack.c.bf16 %v1199, %v1195
        %v1302 = vpack.c.bf16 %v1200, %v1196
        %v1303 = vpack.c.bf16 %v1205, %v1201
        %v1304 = vpack.c.bf16 %v1206, %v1202
        %v1305 = vpack.c.bf16 %v1207, %v1203
        %v1306 = vpack.c.bf16 %v1208, %v1204
        %v1307 = vpack.c.bf16 %v1213, %v1209
        %v1308 = vpack.c.bf16 %v1214, %v1210
        %v1309 = vpack.c.bf16 %v1215, %v1211
        %v1310 = vpack.c.bf16 %v1216, %v1212
        %v1311 = vpack.c.bf16 %v1221, %v1217
        %v1312 = vpack.c.bf16 %v1222, %v1218
        %v1313 = vpack.c.bf16 %v1223, %v1219
        %v1314 = vpack.c.bf16 %v1224, %v1220
        %v1315 = vpack.c.bf16 %v1229, %v1225
        %v1316 = vpack.c.bf16 %v1230, %v1226
        %v1317 = vpack.c.bf16 %v1231, %v1227
        %v1318 = vpack.c.bf16 %v1232, %v1228
        %v1319 = vpack.c.bf16 %v1237, %v1233
        %v1320 = vpack.c.bf16 %v1238, %v1234
        %v1321 = vpack.c.bf16 %v1239, %v1235
        %v1322 = vpack.c.bf16 %v1240, %v1236
        %v1323 = vpack.c.bf16 %v1245, %v1241
        %v1324 = vpack.c.bf16 %v1246, %v1242
        %v1325 = vpack.c.bf16 %v1247, %v1243
        %v1326 = vpack.c.bf16 %v1248, %v1244
        %v1327 = vpack.c.bf16 %v1253, %v1249
        %v1328 = vpack.c.bf16 %v1254, %v1250
        %v1329 = vpack.c.bf16 %v1255, %v1251
        %v1330 = vpack.c.bf16 %v1256, %v1252
        %v1331 = vpack.c.bf16 %v1261, %v1257
        %v1332 = vpack.c.bf16 %v1262, %v1258
        %v1333 = vpack.c.bf16 %v1263, %v1259
        %v1334 = vpack.c.bf16 %v1264, %v1260
        %v1335 = vpack.c.bf16 %v1269, %v1265
        %v1336 = vpack.c.bf16 %v1270, %v1266
        %v1337 = vpack.c.bf16 %v1271, %v1267
        %v1338 = vpack.c.bf16 %v1272, %v1268
        %v1341 = vunpack.c.l.b16 %v1273
        %v1342 = vunpack.c.h.b16 %v1273
        %v1343 = vunpack.c.l.b16 %v1274
        %v1344 = vunpack.c.h.b16 %v1274
        %v1345 = vpack.c.b16 %v1343, %v1341
        %v1346 = vpack.c.b16 %v1344, %v1342
        %1349 = vmatprep.subr.bf16.mxu0 %v1276
        %1350 = vmatpush1.bf16.msra.mxu0 %v1275
        %1351 = vmatprep.subr.bf16.mxu0 %v1280
        %1352 = vmatpush1.bf16.msra.mxu0 %v1279
        %1353 = vmatprep.subr.bf16.mxu0 %v1284
        %1354 = vmatpush1.bf16.msra.mxu0 %v1283
        %1355 = vmatprep.subr.bf16.mxu0 %v1288
        %1356 = vmatpush1.bf16.msra.mxu0 %v1287
        %1357 = vmatprep.subr.bf16.mxu0 %v1292
        %1358 = vmatpush1.bf16.msra.mxu0 %v1291
        %1359 = vmatprep.subr.bf16.mxu0 %v1296
        %1360 = vmatpush1.bf16.msra.mxu0 %v1295
        %1361 = vmatprep.subr.bf16.mxu0 %v1300
        %1362 = vmatpush1.bf16.msra.mxu0 %v1299
        %1363 = vmatprep.subr.bf16.mxu0 %v1304
        %1364 = vmatpush1.bf16.msra.mxu0 %v1303
        %1365 = vmatprep.subr.bf16.mxu0 %v1308
        %1366 = vmatpush1.bf16.msra.mxu0 %v1307
        %1367 = vmatprep.subr.bf16.mxu0 %v1312
        %1368 = vmatpush1.bf16.msra.mxu0 %v1311
        %1369 = vmatprep.subr.bf16.mxu0 %v1316
        %1370 = vmatpush1.bf16.msra.mxu0 %v1315
        %1371 = vmatprep.subr.bf16.mxu0 %v1320
        %1372 = vmatpush1.bf16.msra.mxu0 %v1319
        %1373 = vmatprep.subr.bf16.mxu0 %v1324
        %1374 = vmatpush1.bf16.msra.mxu0 %v1323
        %1375 = vmatprep.subr.bf16.mxu0 %v1328
        %1376 = vmatpush1.bf16.msra.mxu0 %v1327
        %1377 = vmatprep.subr.bf16.mxu0 %v1332
        %1378 = vmatpush1.bf16.msra.mxu0 %v1331
        %1379 = vmatprep.subr.bf16.mxu0 %v1336
        %1380 = vmatpush1.bf16.msra.mxu0 %v1335
        %1381 = vmatprep.mubr.bf16.mxu0 %v1346
        %1382 = vmatmul.mubr.bf16.gmra.mrb[0].mxu0 %v1345
        %v1383 = vpop.f32.mrb[0].mxu0
        %v1384 = vadd.f32 0.0, %v1383
        %v1385 = vpop.f32.mrb[0].mxu0
        %v1386 = vadd.f32 0.0, %v1385
        %v1387 = vpop.f32.mrb[0].mxu0
        %v1388 = vadd.f32 0.0, %v1387
        %v1389 = vpop.f32.mrb[0].mxu0
        %v1390 = vadd.f32 0.0, %v1389
        %1391 = vdwg.mxu0
        %1392 = vmatprep.subr.bf16.mxu0 %v1278
        %1393 = vmatpush1.bf16.msra.mxu0 %v1277
        %1394 = vmatprep.subr.bf16.mxu0 %v1282
        %1395 = vmatpush1.bf16.msra.mxu0 %v1281
        %1396 = vmatprep.subr.bf16.mxu0 %v1286
        %1397 = vmatpush1.bf16.msra.mxu0 %v1285
        %1398 = vmatprep.subr.bf16.mxu0 %v1290
        %1399 = vmatpush1.bf16.msra.mxu0 %v1289
        %1400 = vmatprep.subr.bf16.mxu0 %v1294
        %1401 = vmatpush1.bf16.msra.mxu0 %v1293
        %1402 = vmatprep.subr.bf16.mxu0 %v1298
        %1403 = vmatpush1.bf16.msra.mxu0 %v1297
        %1404 = vmatprep.subr.bf16.mxu0 %v1302
        %1405 = vmatpush1.bf16.msra.mxu0 %v1301
        %1406 = vmatprep.subr.bf16.mxu0 %v1306
        %1407 = vmatpush1.bf16.msra.mxu0 %v1305
        %1408 = vmatprep.subr.bf16.mxu0 %v1310
        %1409 = vmatpush1.bf16.msra.mxu0 %v1309
        %1410 = vmatprep.subr.bf16.mxu0 %v1314
        %1411 = vmatpush1.bf16.msra.mxu0 %v1313
        %1412 = vmatprep.subr.bf16.mxu0 %v1318
        %1413 = vmatpush1.bf16.msra.mxu0 %v1317
        %1414 = vmatprep.subr.bf16.mxu0 %v1322
        %1415 = vmatpush1.bf16.msra.mxu0 %v1321
        %1416 = vmatprep.subr.bf16.mxu0 %v1326
        %1417 = vmatpush1.bf16.msra.mxu0 %v1325
        %1418 = vmatprep.subr.bf16.mxu0 %v1330
        %1419 = vmatpush1.bf16.msra.mxu0 %v1329
        %1420 = vmatprep.subr.bf16.mxu0 %v1334
        %1421 = vmatpush1.bf16.msra.mxu0 %v1333
        %1422 = vmatprep.subr.bf16.mxu0 %v1338
        %1423 = vmatpush1.bf16.msra.mxu0 %v1337
        %1424 = vmatprep.mubr.bf16.mxu0 %v1346
        %1425 = vmatmul.mubr.bf16.gmra.mrb[0].mxu0 %v1345
        %v1426 = vpop.f32.mrb[0].mxu0
        %v1427 = vadd.f32 0.0, %v1426
        %v1428 = vpop.f32.mrb[0].mxu0
        %v1429 = vadd.f32 0.0, %v1428
        %v1430 = vpop.f32.mrb[0].mxu0
        %v1431 = vadd.f32 0.0, %v1430
        %v1432 = vpop.f32.mrb[0].mxu0
        %v1433 = vadd.f32 0.0, %v1432
        %1434 = vdwg.mxu0
        %v1443 = vcombine.low %v673, %v674
        %v1444 = vcombine.high %v673, %v674
        %v1445 = vcombine.low %v675, %v676
        %v1446 = vcombine.high %v675, %v676
        %v1448 = vunpack.c.l.s4 1966171168
        %v1449 = vunpack.c.0.s8 %v1448
        %v1450 = vlaneseq
        %v1451 = vshrl.u32 %v1450, 7
        %v1452 = vsub.s32 %v1449, %v1451
        %v1453 = vrot.slane %v1443, %v1452
        %v1455 = vunpack.c.l.s4 1966171168
        %v1456 = vunpack.c.0.s8 %v1455
        %v1457 = vlaneseq
        %v1458 = vshrl.u32 %v1457, 7
        %v1459 = vsub.s32 %v1456, %v1458
        %v1460 = vrot.slane %v1444, %v1459
        %v1462 = vunpack.c.l.s4 1966171168
        %v1463 = vunpack.c.0.s8 %v1462
        %v1464 = vlaneseq
        %v1465 = vshrl.u32 %v1464, 7
        %v1466 = vsub.s32 %v1463, %v1465
        %v1467 = vrot.slane %v1445, %v1466
        %v1469 = vunpack.c.l.s4 1966171168
        %v1470 = vunpack.c.0.s8 %v1469
        %v1471 = vlaneseq
        %v1472 = vshrl.u32 %v1471, 7
        %v1473 = vsub.s32 %v1470, %v1472
        %v1474 = vrot.slane %v1446, %v1473
        %v1475 = vcombine.low %v1453, %v1467
        %v1476 = vcombine.high %v1453, %v1467
        %v1477 = vcombine.low %v1460, %v1474
        %v1478 = vcombine.high %v1460, %v1474
        %v1480 = vunpack.c.l.s4 1966171168
        %v1481 = vunpack.c.0.s8 %v1480
        %v1482 = vlaneseq
        %v1483 = vshrl.u32 %v1482, 7
        %v1484 = vsub.s32 %v1481, %v1483
        %v1485 = vrot.slane %v1475, %v1484
        %v1487 = vunpack.c.l.s4 1966171168
        %v1488 = vunpack.c.0.s8 %v1487
        %v1489 = vlaneseq
        %v1490 = vshrl.u32 %v1489, 7
        %v1491 = vsub.s32 %v1488, %v1490
        %v1492 = vrot.slane %v1477, %v1491
        %v1494 = vunpack.c.l.s4 1966171168
        %v1495 = vunpack.c.0.s8 %v1494
        %v1496 = vlaneseq
        %v1497 = vshrl.u32 %v1496, 7
        %v1498 = vsub.s32 %v1495, %v1497
        %v1499 = vrot.slane %v1476, %v1498
        %v1501 = vunpack.c.l.s4 1966171168
        %v1502 = vunpack.c.0.s8 %v1501
        %v1503 = vlaneseq
        %v1504 = vshrl.u32 %v1503, 7
        %v1505 = vsub.s32 %v1502, %v1504
        %v1506 = vrot.slane %v1478, %v1505
        %v1507 = vcombine.high %v1485, %v1485
        %v1508 = vcombine.high %v1492, %v1492
        %v1509 = vcombine.high %v1499, %v1499
        %v1510 = vcombine.high %v1506, %v1506
        %v1511 = vcombine.low %v677, %v678
        %v1512 = vcombine.high %v677, %v678
        %v1513 = vcombine.low %v679, %v680
        %v1514 = vcombine.high %v679, %v680
        %v1516 = vunpack.c.l.s4 1966171168
        %v1517 = vunpack.c.0.s8 %v1516
        %v1518 = vlaneseq
        %v1519 = vshrl.u32 %v1518, 7
        %v1520 = vsub.s32 %v1517, %v1519
        %v1521 = vrot.slane %v1511, %v1520
        %v1523 = vunpack.c.l.s4 1966171168
        %v1524 = vunpack.c.0.s8 %v1523
        %v1525 = vlaneseq
        %v1526 = vshrl.u32 %v1525, 7
        %v1527 = vsub.s32 %v1524, %v1526
        %v1528 = vrot.slane %v1512, %v1527
        %v1530 = vunpack.c.l.s4 1966171168
        %v1531 = vunpack.c.0.s8 %v1530
        %v1532 = vlaneseq
        %v1533 = vshrl.u32 %v1532, 7
        %v1534 = vsub.s32 %v1531, %v1533
        %v1535 = vrot.slane %v1513, %v1534
        %v1537 = vunpack.c.l.s4 1966171168
        %v1538 = vunpack.c.0.s8 %v1537
        %v1539 = vlaneseq
        %v1540 = vshrl.u32 %v1539, 7
        %v1541 = vsub.s32 %v1538, %v1540
        %v1542 = vrot.slane %v1514, %v1541
        %v1543 = vcombine.low %v1521, %v1535
        %v1544 = vcombine.high %v1521, %v1535
        %v1545 = vcombine.low %v1528, %v1542
        %v1546 = vcombine.high %v1528, %v1542
        %v1548 = vunpack.c.l.s4 1966171168
        %v1549 = vunpack.c.0.s8 %v1548
        %v1550 = vlaneseq
        %v1551 = vshrl.u32 %v1550, 7
        %v1552 = vsub.s32 %v1549, %v1551
        %v1553 = vrot.slane %v1543, %v1552
        %v1555 = vunpack.c.l.s4 1966171168
        %v1556 = vunpack.c.0.s8 %v1555
        %v1557 = vlaneseq
        %v1558 = vshrl.u32 %v1557, 7
        %v1559 = vsub.s32 %v1556, %v1558
        %v1560 = vrot.slane %v1545, %v1559
        %v1562 = vunpack.c.l.s4 1966171168
        %v1563 = vunpack.c.0.s8 %v1562
        %v1564 = vlaneseq
        %v1565 = vshrl.u32 %v1564, 7
        %v1566 = vsub.s32 %v1563, %v1565
        %v1567 = vrot.slane %v1544, %v1566
        %v1569 = vunpack.c.l.s4 1966171168
        %v1570 = vunpack.c.0.s8 %v1569
        %v1571 = vlaneseq
        %v1572 = vshrl.u32 %v1571, 7
        %v1573 = vsub.s32 %v1570, %v1572
        %v1574 = vrot.slane %v1546, %v1573
        %v1575 = vcombine.high %v1553, %v1553
        %v1576 = vcombine.high %v1560, %v1560
        %v1577 = vcombine.high %v1567, %v1567
        %v1578 = vcombine.high %v1574, %v1574
        %v1579 = vlaneseq
        %v1580 = vshrl.u32 %v1579, 7
        %v1581 = vsub.s32 0, %v1580
        %v1582 = vrot.slane %v1485, %v1581
        %v1583 = vlaneseq
        %v1584 = vshrl.u32 %v1583, 7
        %v1585 = vsub.s32 1, %v1584
        %v1586 = vrot.slane %v1485, %v1585
        %v1587 = vlaneseq
        %v1588 = vshrl.u32 %v1587, 7
        %v1589 = vsub.s32 2, %v1588
        %v1590 = vrot.slane %v1485, %v1589
        %v1591 = vlaneseq
        %v1592 = vshrl.u32 %v1591, 7
        %v1593 = vsub.s32 3, %v1592
        %v1594 = vrot.slane %v1485, %v1593
        %v1595 = vlaneseq
        %v1596 = vshrl.u32 %v1595, 7
        %v1597 = vsub.s32 0, %v1596
        %v1598 = vrot.slane %v1499, %v1597
        %v1599 = vlaneseq
        %v1600 = vshrl.u32 %v1599, 7
        %v1601 = vsub.s32 1, %v1600
        %v1602 = vrot.slane %v1499, %v1601
        %v1603 = vlaneseq
        %v1604 = vshrl.u32 %v1603, 7
        %v1605 = vsub.s32 2, %v1604
        %v1606 = vrot.slane %v1499, %v1605
        %v1607 = vlaneseq
        %v1608 = vshrl.u32 %v1607, 7
        %v1609 = vsub.s32 3, %v1608
        %v1610 = vrot.slane %v1499, %v1609
        %v1611 = vlaneseq
        %v1612 = vshrl.u32 %v1611, 7
        %v1613 = vsub.s32 0, %v1612
        %v1614 = vrot.slane %v1507, %v1613
        %v1615 = vlaneseq
        %v1616 = vshrl.u32 %v1615, 7
        %v1617 = vsub.s32 1, %v1616
        %v1618 = vrot.slane %v1507, %v1617
        %v1619 = vlaneseq
        %v1620 = vshrl.u32 %v1619, 7
        %v1621 = vsub.s32 2, %v1620
        %v1622 = vrot.slane %v1507, %v1621
        %v1623 = vlaneseq
        %v1624 = vshrl.u32 %v1623, 7
        %v1625 = vsub.s32 3, %v1624
        %v1626 = vrot.slane %v1507, %v1625
        %v1627 = vlaneseq
        %v1628 = vshrl.u32 %v1627, 7
        %v1629 = vsub.s32 0, %v1628
        %v1630 = vrot.slane %v1509, %v1629
        %v1631 = vlaneseq
        %v1632 = vshrl.u32 %v1631, 7
        %v1633 = vsub.s32 1, %v1632
        %v1634 = vrot.slane %v1509, %v1633
        %v1635 = vlaneseq
        %v1636 = vshrl.u32 %v1635, 7
        %v1637 = vsub.s32 2, %v1636
        %v1638 = vrot.slane %v1509, %v1637
        %v1639 = vlaneseq
        %v1640 = vshrl.u32 %v1639, 7
        %v1641 = vsub.s32 3, %v1640
        %v1642 = vrot.slane %v1509, %v1641
        %v1643 = vlaneseq
        %v1644 = vshrl.u32 %v1643, 7
        %v1645 = vsub.s32 0, %v1644
        %v1646 = vrot.slane %v1492, %v1645
        %v1647 = vlaneseq
        %v1648 = vshrl.u32 %v1647, 7
        %v1649 = vsub.s32 1, %v1648
        %v1650 = vrot.slane %v1492, %v1649
        %v1651 = vlaneseq
        %v1652 = vshrl.u32 %v1651, 7
        %v1653 = vsub.s32 2, %v1652
        %v1654 = vrot.slane %v1492, %v1653
        %v1655 = vlaneseq
        %v1656 = vshrl.u32 %v1655, 7
        %v1657 = vsub.s32 3, %v1656
        %v1658 = vrot.slane %v1492, %v1657
        %v1659 = vlaneseq
        %v1660 = vshrl.u32 %v1659, 7
        %v1661 = vsub.s32 0, %v1660
        %v1662 = vrot.slane %v1506, %v1661
        %v1663 = vlaneseq
        %v1664 = vshrl.u32 %v1663, 7
        %v1665 = vsub.s32 1, %v1664
        %v1666 = vrot.slane %v1506, %v1665
        %v1667 = vlaneseq
        %v1668 = vshrl.u32 %v1667, 7
        %v1669 = vsub.s32 2, %v1668
        %v1670 = vrot.slane %v1506, %v1669
        %v1671 = vlaneseq
        %v1672 = vshrl.u32 %v1671, 7
        %v1673 = vsub.s32 3, %v1672
        %v1674 = vrot.slane %v1506, %v1673
        %v1675 = vlaneseq
        %v1676 = vshrl.u32 %v1675, 7
        %v1677 = vsub.s32 0, %v1676
        %v1678 = vrot.slane %v1508, %v1677
        %v1679 = vlaneseq
        %v1680 = vshrl.u32 %v1679, 7
        %v1681 = vsub.s32 1, %v1680
        %v1682 = vrot.slane %v1508, %v1681
        %v1683 = vlaneseq
        %v1684 = vshrl.u32 %v1683, 7
        %v1685 = vsub.s32 2, %v1684
        %v1686 = vrot.slane %v1508, %v1685
        %v1687 = vlaneseq
        %v1688 = vshrl.u32 %v1687, 7
        %v1689 = vsub.s32 3, %v1688
        %v1690 = vrot.slane %v1508, %v1689
        %v1691 = vlaneseq
        %v1692 = vshrl.u32 %v1691, 7
        %v1693 = vsub.s32 0, %v1692
        %v1694 = vrot.slane %v1510, %v1693
        %v1695 = vlaneseq
        %v1696 = vshrl.u32 %v1695, 7
        %v1697 = vsub.s32 1, %v1696
        %v1698 = vrot.slane %v1510, %v1697
        %v1699 = vlaneseq
        %v1700 = vshrl.u32 %v1699, 7
        %v1701 = vsub.s32 2, %v1700
        %v1702 = vrot.slane %v1510, %v1701
        %v1703 = vlaneseq
        %v1704 = vshrl.u32 %v1703, 7
        %v1705 = vsub.s32 3, %v1704
        %v1706 = vrot.slane %v1510, %v1705
        %v1707 = vlaneseq
        %v1708 = vshrl.u32 %v1707, 7
        %v1709 = vsub.s32 0, %v1708
        %v1710 = vrot.slane %v1553, %v1709
        %v1711 = vlaneseq
        %v1712 = vshrl.u32 %v1711, 7
        %v1713 = vsub.s32 1, %v1712
        %v1714 = vrot.slane %v1553, %v1713
        %v1715 = vlaneseq
        %v1716 = vshrl.u32 %v1715, 7
        %v1717 = vsub.s32 2, %v1716
        %v1718 = vrot.slane %v1553, %v1717
        %v1719 = vlaneseq
        %v1720 = vshrl.u32 %v1719, 7
        %v1721 = vsub.s32 3, %v1720
        %v1722 = vrot.slane %v1553, %v1721
        %v1723 = vlaneseq
        %v1724 = vshrl.u32 %v1723, 7
        %v1725 = vsub.s32 0, %v1724
        %v1726 = vrot.slane %v1567, %v1725
        %v1727 = vlaneseq
        %v1728 = vshrl.u32 %v1727, 7
        %v1729 = vsub.s32 1, %v1728
        %v1730 = vrot.slane %v1567, %v1729
        %v1731 = vlaneseq
        %v1732 = vshrl.u32 %v1731, 7
        %v1733 = vsub.s32 2, %v1732
        %v1734 = vrot.slane %v1567, %v1733
        %v1735 = vlaneseq
        %v1736 = vshrl.u32 %v1735, 7
        %v1737 = vsub.s32 3, %v1736
        %v1738 = vrot.slane %v1567, %v1737
        %v1739 = vlaneseq
        %v1740 = vshrl.u32 %v1739, 7
        %v1741 = vsub.s32 0, %v1740
        %v1742 = vrot.slane %v1575, %v1741
        %v1743 = vlaneseq
        %v1744 = vshrl.u32 %v1743, 7
        %v1745 = vsub.s32 1, %v1744
        %v1746 = vrot.slane %v1575, %v1745
        %v1747 = vlaneseq
        %v1748 = vshrl.u32 %v1747, 7
        %v1749 = vsub.s32 2, %v1748
        %v1750 = vrot.slane %v1575, %v1749
        %v1751 = vlaneseq
        %v1752 = vshrl.u32 %v1751, 7
        %v1753 = vsub.s32 3, %v1752
        %v1754 = vrot.slane %v1575, %v1753
        %v1755 = vlaneseq
        %v1756 = vshrl.u32 %v1755, 7
        %v1757 = vsub.s32 0, %v1756
        %v1758 = vrot.slane %v1577, %v1757
        %v1759 = vlaneseq
        %v1760 = vshrl.u32 %v1759, 7
        %v1761 = vsub.s32 1, %v1760
        %v1762 = vrot.slane %v1577, %v1761
        %v1763 = vlaneseq
        %v1764 = vshrl.u32 %v1763, 7
        %v1765 = vsub.s32 2, %v1764
        %v1766 = vrot.slane %v1577, %v1765
        %v1767 = vlaneseq
        %v1768 = vshrl.u32 %v1767, 7
        %v1769 = vsub.s32 3, %v1768
        %v1770 = vrot.slane %v1577, %v1769
        %v1771 = vlaneseq
        %v1772 = vshrl.u32 %v1771, 7
        %v1773 = vsub.s32 0, %v1772
        %v1774 = vrot.slane %v1560, %v1773
        %v1775 = vlaneseq
        %v1776 = vshrl.u32 %v1775, 7
        %v1777 = vsub.s32 1, %v1776
        %v1778 = vrot.slane %v1560, %v1777
        %v1779 = vlaneseq
        %v1780 = vshrl.u32 %v1779, 7
        %v1781 = vsub.s32 2, %v1780
        %v1782 = vrot.slane %v1560, %v1781
        %v1783 = vlaneseq
        %v1784 = vshrl.u32 %v1783, 7
        %v1785 = vsub.s32 3, %v1784
        %v1786 = vrot.slane %v1560, %v1785
        %v1787 = vlaneseq
        %v1788 = vshrl.u32 %v1787, 7
        %v1789 = vsub.s32 0, %v1788
        %v1790 = vrot.slane %v1574, %v1789
        %v1791 = vlaneseq
        %v1792 = vshrl.u32 %v1791, 7
        %v1793 = vsub.s32 1, %v1792
        %v1794 = vrot.slane %v1574, %v1793
        %v1795 = vlaneseq
        %v1796 = vshrl.u32 %v1795, 7
        %v1797 = vsub.s32 2, %v1796
        %v1798 = vrot.slane %v1574, %v1797
        %v1799 = vlaneseq
        %v1800 = vshrl.u32 %v1799, 7
        %v1801 = vsub.s32 3, %v1800
        %v1802 = vrot.slane %v1574, %v1801
        %v1803 = vlaneseq
        %v1804 = vshrl.u32 %v1803, 7
        %v1805 = vsub.s32 0, %v1804
        %v1806 = vrot.slane %v1576, %v1805
        %v1807 = vlaneseq
        %v1808 = vshrl.u32 %v1807, 7
        %v1809 = vsub.s32 1, %v1808
        %v1810 = vrot.slane %v1576, %v1809
        %v1811 = vlaneseq
        %v1812 = vshrl.u32 %v1811, 7
        %v1813 = vsub.s32 2, %v1812
        %v1814 = vrot.slane %v1576, %v1813
        %v1815 = vlaneseq
        %v1816 = vshrl.u32 %v1815, 7
        %v1817 = vsub.s32 3, %v1816
        %v1818 = vrot.slane %v1576, %v1817
        %v1819 = vlaneseq
        %v1820 = vshrl.u32 %v1819, 7
        %v1821 = vsub.s32 0, %v1820
        %v1822 = vrot.slane %v1578, %v1821
        %v1823 = vlaneseq
        %v1824 = vshrl.u32 %v1823, 7
        %v1825 = vsub.s32 1, %v1824
        %v1826 = vrot.slane %v1578, %v1825
        %v1827 = vlaneseq
        %v1828 = vshrl.u32 %v1827, 7
        %v1829 = vsub.s32 2, %v1828
        %v1830 = vrot.slane %v1578, %v1829
        %v1831 = vlaneseq
        %v1832 = vshrl.u32 %v1831, 7
        %v1833 = vsub.s32 3, %v1832
        %v1834 = vrot.slane %v1578, %v1833
        %v1899 = vmul.f32 %v1582, %v552
        %v1900 = vmul.f32 %v1586, %v553
        %v1901 = vmul.f32 %v1590, %v554
        %v1902 = vmul.f32 %v1594, %v555
        %v1903 = vmul.f32 %v1582, %v556
        %v1904 = vmul.f32 %v1586, %v557
        %v1905 = vmul.f32 %v1590, %v558
        %v1906 = vmul.f32 %v1594, %v559
        %v1907 = vmul.f32 %v1598, %v552
        %v1908 = vmul.f32 %v1602, %v553
        %v1909 = vmul.f32 %v1606, %v554
        %v1910 = vmul.f32 %v1610, %v555
        %v1911 = vmul.f32 %v1598, %v556
        %v1912 = vmul.f32 %v1602, %v557
        %v1913 = vmul.f32 %v1606, %v558
        %v1914 = vmul.f32 %v1610, %v559
        %v1915 = vmul.f32 %v1614, %v552
        %v1916 = vmul.f32 %v1618, %v553
        %v1917 = vmul.f32 %v1622, %v554
        %v1918 = vmul.f32 %v1626, %v555
        %v1919 = vmul.f32 %v1614, %v556
        %v1920 = vmul.f32 %v1618, %v557
        %v1921 = vmul.f32 %v1622, %v558
        %v1922 = vmul.f32 %v1626, %v559
        %v1923 = vmul.f32 %v1630, %v552
        %v1924 = vmul.f32 %v1634, %v553
        %v1925 = vmul.f32 %v1638, %v554
        %v1926 = vmul.f32 %v1642, %v555
        %v1927 = vmul.f32 %v1630, %v556
        %v1928 = vmul.f32 %v1634, %v557
        %v1929 = vmul.f32 %v1638, %v558
        %v1930 = vmul.f32 %v1642, %v559
        %v1931 = vmul.f32 %v1646, %v552
        %v1932 = vmul.f32 %v1650, %v553
        %v1933 = vmul.f32 %v1654, %v554
        %v1934 = vmul.f32 %v1658, %v555
        %v1935 = vmul.f32 %v1646, %v556
        %v1936 = vmul.f32 %v1650, %v557
        %v1937 = vmul.f32 %v1654, %v558
        %v1938 = vmul.f32 %v1658, %v559
        %v1939 = vmul.f32 %v1662, %v552
        %v1940 = vmul.f32 %v1666, %v553
        %v1941 = vmul.f32 %v1670, %v554
        %v1942 = vmul.f32 %v1674, %v555
        %v1943 = vmul.f32 %v1662, %v556
        %v1944 = vmul.f32 %v1666, %v557
        %v1945 = vmul.f32 %v1670, %v558
        %v1946 = vmul.f32 %v1674, %v559
        %v1947 = vmul.f32 %v1678, %v552
        %v1948 = vmul.f32 %v1682, %v553
        %v1949 = vmul.f32 %v1686, %v554
        %v1950 = vmul.f32 %v1690, %v555
        %v1951 = vmul.f32 %v1678, %v556
        %v1952 = vmul.f32 %v1682, %v557
        %v1953 = vmul.f32 %v1686, %v558
        %v1954 = vmul.f32 %v1690, %v559
        %v1955 = vmul.f32 %v1694, %v552
        %v1956 = vmul.f32 %v1698, %v553
        %v1957 = vmul.f32 %v1702, %v554
        %v1958 = vmul.f32 %v1706, %v555
        %v1959 = vmul.f32 %v1694, %v556
        %v1960 = vmul.f32 %v1698, %v557
        %v1961 = vmul.f32 %v1702, %v558
        %v1962 = vmul.f32 %v1706, %v559
        %v1963 = vmul.f32 %v1710, %v552
        %v1964 = vmul.f32 %v1714, %v553
        %v1965 = vmul.f32 %v1718, %v554
        %v1966 = vmul.f32 %v1722, %v555
        %v1967 = vmul.f32 %v1710, %v556
        %v1968 = vmul.f32 %v1714, %v557
        %v1969 = vmul.f32 %v1718, %v558
        %v1970 = vmul.f32 %v1722, %v559
        %v1971 = vmul.f32 %v1726, %v552
        %v1972 = vmul.f32 %v1730, %v553
        %v1973 = vmul.f32 %v1734, %v554
        %v1974 = vmul.f32 %v1738, %v555
        %v1975 = vmul.f32 %v1726, %v556
        %v1976 = vmul.f32 %v1730, %v557
        %v1977 = vmul.f32 %v1734, %v558
        %v1978 = vmul.f32 %v1738, %v559
        %v1979 = vmul.f32 %v1742, %v552
        %v1980 = vmul.f32 %v1746, %v553
        %v1981 = vmul.f32 %v1750, %v554
        %v1982 = vmul.f32 %v1754, %v555
        %v1983 = vmul.f32 %v1742, %v556
        %v1984 = vmul.f32 %v1746, %v557
        %v1985 = vmul.f32 %v1750, %v558
        %v1986 = vmul.f32 %v1754, %v559
        %v1987 = vmul.f32 %v1758, %v552
        %v1988 = vmul.f32 %v1762, %v553
        %v1989 = vmul.f32 %v1766, %v554
        %v1990 = vmul.f32 %v1770, %v555
        %v1991 = vmul.f32 %v1758, %v556
        %v1992 = vmul.f32 %v1762, %v557
        %v1993 = vmul.f32 %v1766, %v558
        %v1994 = vmul.f32 %v1770, %v559
        %v1995 = vmul.f32 %v1774, %v552
        %v1996 = vmul.f32 %v1778, %v553
        %v1997 = vmul.f32 %v1782, %v554
        %v1998 = vmul.f32 %v1786, %v555
        %v1999 = vmul.f32 %v1774, %v556
        %v2000 = vmul.f32 %v1778, %v557
        %v2001 = vmul.f32 %v1782, %v558
        %v2002 = vmul.f32 %v1786, %v559
        %v2003 = vmul.f32 %v1790, %v552
        %v2004 = vmul.f32 %v1794, %v553
        %v2005 = vmul.f32 %v1798, %v554
        %v2006 = vmul.f32 %v1802, %v555
        %v2007 = vmul.f32 %v1790, %v556
        %v2008 = vmul.f32 %v1794, %v557
        %v2009 = vmul.f32 %v1798, %v558
        %v2010 = vmul.f32 %v1802, %v559
        %v2011 = vmul.f32 %v1806, %v552
        %v2012 = vmul.f32 %v1810, %v553
        %v2013 = vmul.f32 %v1814, %v554
        %v2014 = vmul.f32 %v1818, %v555
        %v2015 = vmul.f32 %v1806, %v556
        %v2016 = vmul.f32 %v1810, %v557
        %v2017 = vmul.f32 %v1814, %v558
        %v2018 = vmul.f32 %v1818, %v559
        %v2019 = vmul.f32 %v1822, %v552
        %v2020 = vmul.f32 %v1826, %v553
        %v2021 = vmul.f32 %v1830, %v554
        %v2022 = vmul.f32 %v1834, %v555
        %v2023 = vmul.f32 %v1822, %v556
        %v2024 = vmul.f32 %v1826, %v557
        %v2025 = vmul.f32 %v1830, %v558
        %v2026 = vmul.f32 %v1834, %v559
        %s2027 = scalar_lea.vmem %s1, 16
        %v2028 = vld [vmem:[%s2027] sm:$0xff]
        %v2029 = vld [vmem:[%s2027 + $0x8] sm:$0xff]
        %v2030 = vpack.c.bf16 %v1903, %v1899
        %v2031 = vpack.c.bf16 %v1904, %v1900
        %v2032 = vpack.c.bf16 %v1905, %v1901
        %v2033 = vpack.c.bf16 %v1906, %v1902
        %v2034 = vpack.c.bf16 %v1911, %v1907
        %v2035 = vpack.c.bf16 %v1912, %v1908
        %v2036 = vpack.c.bf16 %v1913, %v1909
        %v2037 = vpack.c.bf16 %v1914, %v1910
        %v2038 = vpack.c.bf16 %v1919, %v1915
        %v2039 = vpack.c.bf16 %v1920, %v1916
        %v2040 = vpack.c.bf16 %v1921, %v1917
        %v2041 = vpack.c.bf16 %v1922, %v1918
        %v2042 = vpack.c.bf16 %v1927, %v1923
        %v2043 = vpack.c.bf16 %v1928, %v1924
        %v2044 = vpack.c.bf16 %v1929, %v1925
        %v2045 = vpack.c.bf16 %v1930, %v1926
        %v2046 = vpack.c.bf16 %v1935, %v1931
        %v2047 = vpack.c.bf16 %v1936, %v1932
        %v2048 = vpack.c.bf16 %v1937, %v1933
        %v2049 = vpack.c.bf16 %v1938, %v1934
        %v2050 = vpack.c.bf16 %v1943, %v1939
        %v2051 = vpack.c.bf16 %v1944, %v1940
        %v2052 = vpack.c.bf16 %v1945, %v1941
        %v2053 = vpack.c.bf16 %v1946, %v1942
        %v2054 = vpack.c.bf16 %v1951, %v1947
        %v2055 = vpack.c.bf16 %v1952, %v1948
        %v2056 = vpack.c.bf16 %v1953, %v1949
        %v2057 = vpack.c.bf16 %v1954, %v1950
        %v2058 = vpack.c.bf16 %v1959, %v1955
        %v2059 = vpack.c.bf16 %v1960, %v1956
        %v2060 = vpack.c.bf16 %v1961, %v1957
        %v2061 = vpack.c.bf16 %v1962, %v1958
        %v2062 = vpack.c.bf16 %v1967, %v1963
        %v2063 = vpack.c.bf16 %v1968, %v1964
        %v2064 = vpack.c.bf16 %v1969, %v1965
        %v2065 = vpack.c.bf16 %v1970, %v1966
        %v2066 = vpack.c.bf16 %v1975, %v1971
        %v2067 = vpack.c.bf16 %v1976, %v1972
        %v2068 = vpack.c.bf16 %v1977, %v1973
        %v2069 = vpack.c.bf16 %v1978, %v1974
        %v2070 = vpack.c.bf16 %v1983, %v1979
        %v2071 = vpack.c.bf16 %v1984, %v1980
        %v2072 = vpack.c.bf16 %v1985, %v1981
        %v2073 = vpack.c.bf16 %v1986, %v1982
        %v2074 = vpack.c.bf16 %v1991, %v1987
        %v2075 = vpack.c.bf16 %v1992, %v1988
        %v2076 = vpack.c.bf16 %v1993, %v1989
        %v2077 = vpack.c.bf16 %v1994, %v1990
        %v2078 = vpack.c.bf16 %v1999, %v1995
        %v2079 = vpack.c.bf16 %v2000, %v1996
        %v2080 = vpack.c.bf16 %v2001, %v1997
        %v2081 = vpack.c.bf16 %v2002, %v1998
        %v2082 = vpack.c.bf16 %v2007, %v2003
        %v2083 = vpack.c.bf16 %v2008, %v2004
        %v2084 = vpack.c.bf16 %v2009, %v2005
        %v2085 = vpack.c.bf16 %v2010, %v2006
        %v2086 = vpack.c.bf16 %v2015, %v2011
        %v2087 = vpack.c.bf16 %v2016, %v2012
        %v2088 = vpack.c.bf16 %v2017, %v2013
        %v2089 = vpack.c.bf16 %v2018, %v2014
        %v2090 = vpack.c.bf16 %v2023, %v2019
        %v2091 = vpack.c.bf16 %v2024, %v2020
        %v2092 = vpack.c.bf16 %v2025, %v2021
        %v2093 = vpack.c.bf16 %v2026, %v2022
        %v2096 = vunpack.c.l.b16 %v2028
        %v2097 = vunpack.c.h.b16 %v2028
        %v2098 = vunpack.c.l.b16 %v2029
        %v2099 = vunpack.c.h.b16 %v2029
        %v2100 = vpack.c.b16 %v2098, %v2096
        %v2101 = vpack.c.b16 %v2099, %v2097
        %2104 = vmatprep.subr.bf16.mxu0 %v2031
        %2105 = vmatpush1.bf16.msra.mxu0 %v2030
        %2106 = vmatprep.subr.bf16.mxu0 %v2035
        %2107 = vmatpush1.bf16.msra.mxu0 %v2034
        %2108 = vmatprep.subr.bf16.mxu0 %v2039
        %2109 = vmatpush1.bf16.msra.mxu0 %v2038
        %2110 = vmatprep.subr.bf16.mxu0 %v2043
        %2111 = vmatpush1.bf16.msra.mxu0 %v2042
        %2112 = vmatprep.subr.bf16.mxu0 %v2047
        %2113 = vmatpush1.bf16.msra.mxu0 %v2046
        %2114 = vmatprep.subr.bf16.mxu0 %v2051
        %2115 = vmatpush1.bf16.msra.mxu0 %v2050
        %2116 = vmatprep.subr.bf16.mxu0 %v2055
        %2117 = vmatpush1.bf16.msra.mxu0 %v2054
        %2118 = vmatprep.subr.bf16.mxu0 %v2059
        %2119 = vmatpush1.bf16.msra.mxu0 %v2058
        %2120 = vmatprep.subr.bf16.mxu0 %v2063
        %2121 = vmatpush1.bf16.msra.mxu0 %v2062
        %2122 = vmatprep.subr.bf16.mxu0 %v2067
        %2123 = vmatpush1.bf16.msra.mxu0 %v2066
        %2124 = vmatprep.subr.bf16.mxu0 %v2071
        %2125 = vmatpush1.bf16.msra.mxu0 %v2070
        %2126 = vmatprep.subr.bf16.mxu0 %v2075
        %2127 = vmatpush1.bf16.msra.mxu0 %v2074
        %2128 = vmatprep.subr.bf16.mxu0 %v2079
        %2129 = vmatpush1.bf16.msra.mxu0 %v2078
        %2130 = vmatprep.subr.bf16.mxu0 %v2083
        %2131 = vmatpush1.bf16.msra.mxu0 %v2082
        %2132 = vmatprep.subr.bf16.mxu0 %v2087
        %2133 = vmatpush1.bf16.msra.mxu0 %v2086
        %2134 = vmatprep.subr.bf16.mxu0 %v2091
        %2135 = vmatpush1.bf16.msra.mxu0 %v2090
        %2136 = vmatprep.mubr.bf16.mxu0 %v2101
        %2137 = vmatmul.mubr.bf16.gmra.mrb[0].mxu0 %v2100
        %v2138 = vpop.f32.mrb[0].mxu0
        %v2139 = vadd.f32 0.0, %v2138
        %v2140 = vpop.f32.mrb[0].mxu0
        %v2141 = vadd.f32 0.0, %v2140
        %v2142 = vpop.f32.mrb[0].mxu0
        %v2143 = vadd.f32 0.0, %v2142
        %v2144 = vpop.f32.mrb[0].mxu0
        %v2145 = vadd.f32 0.0, %v2144
        %2146 = vdwg.mxu0
        %2147 = vmatprep.subr.bf16.mxu0 %v2033
        %2148 = vmatpush1.bf16.msra.mxu0 %v2032
        %2149 = vmatprep.subr.bf16.mxu0 %v2037
        %2150 = vmatpush1.bf16.msra.mxu0 %v2036
        %2151 = vmatprep.subr.bf16.mxu0 %v2041
        %2152 = vmatpush1.bf16.msra.mxu0 %v2040
        %2153 = vmatprep.subr.bf16.mxu0 %v2045
        %2154 = vmatpush1.bf16.msra.mxu0 %v2044
        %2155 = vmatprep.subr.bf16.mxu0 %v2049
        %2156 = vmatpush1.bf16.msra.mxu0 %v2048
        %2157 = vmatprep.subr.bf16.mxu0 %v2053
        %2158 = vmatpush1.bf16.msra.mxu0 %v2052
        %2159 = vmatprep.subr.bf16.mxu0 %v2057
        %2160 = vmatpush1.bf16.msra.mxu0 %v2056
        %2161 = vmatprep.subr.bf16.mxu0 %v2061
        %2162 = vmatpush1.bf16.msra.mxu0 %v2060
        %2163 = vmatprep.subr.bf16.mxu0 %v2065
        %2164 = vmatpush1.bf16.msra.mxu0 %v2064
        %2165 = vmatprep.subr.bf16.mxu0 %v2069
        %2166 = vmatpush1.bf16.msra.mxu0 %v2068
        %2167 = vmatprep.subr.bf16.mxu0 %v2073
        %2168 = vmatpush1.bf16.msra.mxu0 %v2072
        %2169 = vmatprep.subr.bf16.mxu0 %v2077
        %2170 = vmatpush1.bf16.msra.mxu0 %v2076
        %2171 = vmatprep.subr.bf16.mxu0 %v2081
        %2172 = vmatpush1.bf16.msra.mxu0 %v2080
        %2173 = vmatprep.subr.bf16.mxu0 %v2085
        %2174 = vmatpush1.bf16.msra.mxu0 %v2084
        %2175 = vmatprep.subr.bf16.mxu0 %v2089
        %2176 = vmatpush1.bf16.msra.mxu0 %v2088
        %2177 = vmatprep.subr.bf16.mxu0 %v2093
        %2178 = vmatpush1.bf16.msra.mxu0 %v2092
        %2179 = vmatprep.mubr.bf16.mxu0 %v2101
        %2180 = vmatmul.mubr.bf16.gmra.mrb[0].mxu0 %v2100
        %v2181 = vpop.f32.mrb[0].mxu0
        %v2182 = vadd.f32 0.0, %v2181
        %v2183 = vpop.f32.mrb[0].mxu0
        %v2184 = vadd.f32 0.0, %v2183
        %v2185 = vpop.f32.mrb[0].mxu0
        %v2186 = vadd.f32 0.0, %v2185
        %v2187 = vpop.f32.mrb[0].mxu0
        %v2188 = vadd.f32 0.0, %v2187
        %2189 = vdwg.mxu0
        %v2190 = vmul.f32 %v1582, %v431
        %v2191 = vmul.f32 %v1586, %v432
        %v2192 = vmul.f32 %v1590, %v433
        %v2193 = vmul.f32 %v1594, %v434
        %v2194 = vmul.f32 %v1582, %v435
        %v2195 = vmul.f32 %v1586, %v436
        %v2196 = vmul.f32 %v1590, %v437
        %v2197 = vmul.f32 %v1594, %v438
        %v2198 = vmul.f32 %v1598, %v431
        %v2199 = vmul.f32 %v1602, %v432
        %v2200 = vmul.f32 %v1606, %v433
        %v2201 = vmul.f32 %v1610, %v434
        %v2202 = vmul.f32 %v1598, %v435
        %v2203 = vmul.f32 %v1602, %v436
        %v2204 = vmul.f32 %v1606, %v437
        %v2205 = vmul.f32 %v1610, %v438
        %v2206 = vmul.f32 %v1614, %v431
        %v2207 = vmul.f32 %v1618, %v432
        %v2208 = vmul.f32 %v1622, %v433
        %v2209 = vmul.f32 %v1626, %v434
        %v2210 = vmul.f32 %v1614, %v435
        %v2211 = vmul.f32 %v1618, %v436
        %v2212 = vmul.f32 %v1622, %v437
        %v2213 = vmul.f32 %v1626, %v438
        %v2214 = vmul.f32 %v1630, %v431
        %v2215 = vmul.f32 %v1634, %v432
        %v2216 = vmul.f32 %v1638, %v433
        %v2217 = vmul.f32 %v1642, %v434
        %v2218 = vmul.f32 %v1630, %v435
        %v2219 = vmul.f32 %v1634, %v436
        %v2220 = vmul.f32 %v1638, %v437
        %v2221 = vmul.f32 %v1642, %v438
        %v2222 = vmul.f32 %v1646, %v431
        %v2223 = vmul.f32 %v1650, %v432
        %v2224 = vmul.f32 %v1654, %v433
        %v2225 = vmul.f32 %v1658, %v434
        %v2226 = vmul.f32 %v1646, %v435
        %v2227 = vmul.f32 %v1650, %v436
        %v2228 = vmul.f32 %v1654, %v437
        %v2229 = vmul.f32 %v1658, %v438
        %v2230 = vmul.f32 %v1662, %v431
        %v2231 = vmul.f32 %v1666, %v432
        %v2232 = vmul.f32 %v1670, %v433
        %v2233 = vmul.f32 %v1674, %v434
        %v2234 = vmul.f32 %v1662, %v435
        %v2235 = vmul.f32 %v1666, %v436
        %v2236 = vmul.f32 %v1670, %v437
        %v2237 = vmul.f32 %v1674, %v438
        %v2238 = vmul.f32 %v1678, %v431
        %v2239 = vmul.f32 %v1682, %v432
        %v2240 = vmul.f32 %v1686, %v433
        %v2241 = vmul.f32 %v1690, %v434
        %v2242 = vmul.f32 %v1678, %v435
        %v2243 = vmul.f32 %v1682, %v436
        %v2244 = vmul.f32 %v1686, %v437
        %v2245 = vmul.f32 %v1690, %v438
        %v2246 = vmul.f32 %v1694, %v431
        %v2247 = vmul.f32 %v1698, %v432
        %v2248 = vmul.f32 %v1702, %v433
        %v2249 = vmul.f32 %v1706, %v434
        %v2250 = vmul.f32 %v1694, %v435
        %v2251 = vmul.f32 %v1698, %v436
        %v2252 = vmul.f32 %v1702, %v437
        %v2253 = vmul.f32 %v1706, %v438
        %v2254 = vmul.f32 %v1710, %v431
        %v2255 = vmul.f32 %v1714, %v432
        %v2256 = vmul.f32 %v1718, %v433
        %v2257 = vmul.f32 %v1722, %v434
        %v2258 = vmul.f32 %v1710, %v435
        %v2259 = vmul.f32 %v1714, %v436
        %v2260 = vmul.f32 %v1718, %v437
        %v2261 = vmul.f32 %v1722, %v438
        %v2262 = vmul.f32 %v1726, %v431
        %v2263 = vmul.f32 %v1730, %v432
        %v2264 = vmul.f32 %v1734, %v433
        %v2265 = vmul.f32 %v1738, %v434
        %v2266 = vmul.f32 %v1726, %v435
        %v2267 = vmul.f32 %v1730, %v436
        %v2268 = vmul.f32 %v1734, %v437
        %v2269 = vmul.f32 %v1738, %v438
        %v2270 = vmul.f32 %v1742, %v431
        %v2271 = vmul.f32 %v1746, %v432
        %v2272 = vmul.f32 %v1750, %v433
        %v2273 = vmul.f32 %v1754, %v434
        %v2274 = vmul.f32 %v1742, %v435
        %v2275 = vmul.f32 %v1746, %v436
        %v2276 = vmul.f32 %v1750, %v437
        %v2277 = vmul.f32 %v1754, %v438
        %v2278 = vmul.f32 %v1758, %v431
        %v2279 = vmul.f32 %v1762, %v432
        %v2280 = vmul.f32 %v1766, %v433
        %v2281 = vmul.f32 %v1770, %v434
        %v2282 = vmul.f32 %v1758, %v435
        %v2283 = vmul.f32 %v1762, %v436
        %v2284 = vmul.f32 %v1766, %v437
        %v2285 = vmul.f32 %v1770, %v438
        %v2286 = vmul.f32 %v1774, %v431
        %v2287 = vmul.f32 %v1778, %v432
        %v2288 = vmul.f32 %v1782, %v433
        %v2289 = vmul.f32 %v1786, %v434
        %v2290 = vmul.f32 %v1774, %v435
        %v2291 = vmul.f32 %v1778, %v436
        %v2292 = vmul.f32 %v1782, %v437
        %v2293 = vmul.f32 %v1786, %v438
        %v2294 = vmul.f32 %v1790, %v431
        %v2295 = vmul.f32 %v1794, %v432
        %v2296 = vmul.f32 %v1798, %v433
        %v2297 = vmul.f32 %v1802, %v434
        %v2298 = vmul.f32 %v1790, %v435
        %v2299 = vmul.f32 %v1794, %v436
        %v2300 = vmul.f32 %v1798, %v437
        %v2301 = vmul.f32 %v1802, %v438
        %v2302 = vmul.f32 %v1806, %v431
        %v2303 = vmul.f32 %v1810, %v432
        %v2304 = vmul.f32 %v1814, %v433
        %v2305 = vmul.f32 %v1818, %v434
        %v2306 = vmul.f32 %v1806, %v435
        %v2307 = vmul.f32 %v1810, %v436
        %v2308 = vmul.f32 %v1814, %v437
        %v2309 = vmul.f32 %v1818, %v438
        %v2310 = vmul.f32 %v1822, %v431
        %v2311 = vmul.f32 %v1826, %v432
        %v2312 = vmul.f32 %v1830, %v433
        %v2313 = vmul.f32 %v1834, %v434
        %v2314 = vmul.f32 %v1822, %v435
        %v2315 = vmul.f32 %v1826, %v436
        %v2316 = vmul.f32 %v1830, %v437
        %v2317 = vmul.f32 %v1834, %v438
        %s2318 = scalar_lea.vmem %s1, 32
        %v2319 = vld [vmem:[%s2318] sm:$0xff]
        %v2320 = vld [vmem:[%s2318 + $0x8] sm:$0xff]
        %v2321 = vpack.c.bf16 %v2194, %v2190
        %v2322 = vpack.c.bf16 %v2195, %v2191
        %v2323 = vpack.c.bf16 %v2196, %v2192
        %v2324 = vpack.c.bf16 %v2197, %v2193
        %v2325 = vpack.c.bf16 %v2202, %v2198
        %v2326 = vpack.c.bf16 %v2203, %v2199
        %v2327 = vpack.c.bf16 %v2204, %v2200
        %v2328 = vpack.c.bf16 %v2205, %v2201
        %v2329 = vpack.c.bf16 %v2210, %v2206
        %v2330 = vpack.c.bf16 %v2211, %v2207
        %v2331 = vpack.c.bf16 %v2212, %v2208
        %v2332 = vpack.c.bf16 %v2213, %v2209
        %v2333 = vpack.c.bf16 %v2218, %v2214
        %v2334 = vpack.c.bf16 %v2219, %v2215
        %v2335 = vpack.c.bf16 %v2220, %v2216
        %v2336 = vpack.c.bf16 %v2221, %v2217
        %v2337 = vpack.c.bf16 %v2226, %v2222
        %v2338 = vpack.c.bf16 %v2227, %v2223
        %v2339 = vpack.c.bf16 %v2228, %v2224
        %v2340 = vpack.c.bf16 %v2229, %v2225
        %v2341 = vpack.c.bf16 %v2234, %v2230
        %v2342 = vpack.c.bf16 %v2235, %v2231
        %v2343 = vpack.c.bf16 %v2236, %v2232
        %v2344 = vpack.c.bf16 %v2237, %v2233
        %v2345 = vpack.c.bf16 %v2242, %v2238
        %v2346 = vpack.c.bf16 %v2243, %v2239
        %v2347 = vpack.c.bf16 %v2244, %v2240
        %v2348 = vpack.c.bf16 %v2245, %v2241
        %v2349 = vpack.c.bf16 %v2250, %v2246
        %v2350 = vpack.c.bf16 %v2251, %v2247
        %v2351 = vpack.c.bf16 %v2252, %v2248
        %v2352 = vpack.c.bf16 %v2253, %v2249
        %v2353 = vpack.c.bf16 %v2258, %v2254
        %v2354 = vpack.c.bf16 %v2259, %v2255
        %v2355 = vpack.c.bf16 %v2260, %v2256
        %v2356 = vpack.c.bf16 %v2261, %v2257
        %v2357 = vpack.c.bf16 %v2266, %v2262
        %v2358 = vpack.c.bf16 %v2267, %v2263
        %v2359 = vpack.c.bf16 %v2268, %v2264
        %v2360 = vpack.c.bf16 %v2269, %v2265
        %v2361 = vpack.c.bf16 %v2274, %v2270
        %v2362 = vpack.c.bf16 %v2275, %v2271
        %v2363 = vpack.c.bf16 %v2276, %v2272
        %v2364 = vpack.c.bf16 %v2277, %v2273
        %v2365 = vpack.c.bf16 %v2282, %v2278
        %v2366 = vpack.c.bf16 %v2283, %v2279
        %v2367 = vpack.c.bf16 %v2284, %v2280
        %v2368 = vpack.c.bf16 %v2285, %v2281
        %v2369 = vpack.c.bf16 %v2290, %v2286
        %v2370 = vpack.c.bf16 %v2291, %v2287
        %v2371 = vpack.c.bf16 %v2292, %v2288
        %v2372 = vpack.c.bf16 %v2293, %v2289
        %v2373 = vpack.c.bf16 %v2298, %v2294
        %v2374 = vpack.c.bf16 %v2299, %v2295
        %v2375 = vpack.c.bf16 %v2300, %v2296
        %v2376 = vpack.c.bf16 %v2301, %v2297
        %v2377 = vpack.c.bf16 %v2306, %v2302
        %v2378 = vpack.c.bf16 %v2307, %v2303
        %v2379 = vpack.c.bf16 %v2308, %v2304
        %v2380 = vpack.c.bf16 %v2309, %v2305
        %v2381 = vpack.c.bf16 %v2314, %v2310
        %v2382 = vpack.c.bf16 %v2315, %v2311
        %v2383 = vpack.c.bf16 %v2316, %v2312
        %v2384 = vpack.c.bf16 %v2317, %v2313
        %v2387 = vunpack.c.l.b16 %v2319
        %v2388 = vunpack.c.h.b16 %v2319
        %v2389 = vunpack.c.l.b16 %v2320
        %v2390 = vunpack.c.h.b16 %v2320
        %v2391 = vpack.c.b16 %v2389, %v2387
        %v2392 = vpack.c.b16 %v2390, %v2388
        %2395 = vmatprep.subr.bf16.mxu0 %v2322
        %2396 = vmatpush1.bf16.msra.mxu0 %v2321
        %2397 = vmatprep.subr.bf16.mxu0 %v2326
        %2398 = vmatpush1.bf16.msra.mxu0 %v2325
        %2399 = vmatprep.subr.bf16.mxu0 %v2330
        %2400 = vmatpush1.bf16.msra.mxu0 %v2329
        %2401 = vmatprep.subr.bf16.mxu0 %v2334
        %2402 = vmatpush1.bf16.msra.mxu0 %v2333
        %2403 = vmatprep.subr.bf16.mxu0 %v2338
        %2404 = vmatpush1.bf16.msra.mxu0 %v2337
        %2405 = vmatprep.subr.bf16.mxu0 %v2342
        %2406 = vmatpush1.bf16.msra.mxu0 %v2341
        %2407 = vmatprep.subr.bf16.mxu0 %v2346
        %2408 = vmatpush1.bf16.msra.mxu0 %v2345
        %2409 = vmatprep.subr.bf16.mxu0 %v2350
        %2410 = vmatpush1.bf16.msra.mxu0 %v2349
        %2411 = vmatprep.subr.bf16.mxu0 %v2354
        %2412 = vmatpush1.bf16.msra.mxu0 %v2353
        %2413 = vmatprep.subr.bf16.mxu0 %v2358
        %2414 = vmatpush1.bf16.msra.mxu0 %v2357
        %2415 = vmatprep.subr.bf16.mxu0 %v2362
        %2416 = vmatpush1.bf16.msra.mxu0 %v2361
        %2417 = vmatprep.subr.bf16.mxu0 %v2366
        %2418 = vmatpush1.bf16.msra.mxu0 %v2365
        %2419 = vmatprep.subr.bf16.mxu0 %v2370
        %2420 = vmatpush1.bf16.msra.mxu0 %v2369
        %2421 = vmatprep.subr.bf16.mxu0 %v2374
        %2422 = vmatpush1.bf16.msra.mxu0 %v2373
        %2423 = vmatprep.subr.bf16.mxu0 %v2378
        %2424 = vmatpush1.bf16.msra.mxu0 %v2377
        %2425 = vmatprep.subr.bf16.mxu0 %v2382
        %2426 = vmatpush1.bf16.msra.mxu0 %v2381
        %2427 = vmatprep.mubr.bf16.mxu0 %v2392
        %2428 = vmatmul.mubr.bf16.gmra.mrb[0].mxu0 %v2391
        %v2429 = vpop.f32.mrb[0].mxu0
        %v2430 = vadd.f32 0.0, %v2429
        %v2431 = vpop.f32.mrb[0].mxu0
        %v2432 = vadd.f32 0.0, %v2431
        %v2433 = vpop.f32.mrb[0].mxu0
        %v2434 = vadd.f32 0.0, %v2433
        %v2435 = vpop.f32.mrb[0].mxu0
        %v2436 = vadd.f32 0.0, %v2435
        %2437 = vdwg.mxu0
        %2438 = vmatprep.subr.bf16.mxu0 %v2324
        %2439 = vmatpush1.bf16.msra.mxu0 %v2323
        %2440 = vmatprep.subr.bf16.mxu0 %v2328
        %2441 = vmatpush1.bf16.msra.mxu0 %v2327
        %2442 = vmatprep.subr.bf16.mxu0 %v2332
        %2443 = vmatpush1.bf16.msra.mxu0 %v2331
        %2444 = vmatprep.subr.bf16.mxu0 %v2336
        %2445 = vmatpush1.bf16.msra.mxu0 %v2335
        %2446 = vmatprep.subr.bf16.mxu0 %v2340
        %2447 = vmatpush1.bf16.msra.mxu0 %v2339
        %2448 = vmatprep.subr.bf16.mxu0 %v2344
        %2449 = vmatpush1.bf16.msra.mxu0 %v2343
        %2450 = vmatprep.subr.bf16.mxu0 %v2348
        %2451 = vmatpush1.bf16.msra.mxu0 %v2347
        %2452 = vmatprep.subr.bf16.mxu0 %v2352
        %2453 = vmatpush1.bf16.msra.mxu0 %v2351
        %2454 = vmatprep.subr.bf16.mxu0 %v2356
        %2455 = vmatpush1.bf16.msra.mxu0 %v2355
        %2456 = vmatprep.subr.bf16.mxu0 %v2360
        %2457 = vmatpush1.bf16.msra.mxu0 %v2359
        %2458 = vmatprep.subr.bf16.mxu0 %v2364
        %2459 = vmatpush1.bf16.msra.mxu0 %v2363
        %2460 = vmatprep.subr.bf16.mxu0 %v2368
        %2461 = vmatpush1.bf16.msra.mxu0 %v2367
        %2462 = vmatprep.subr.bf16.mxu0 %v2372
        %2463 = vmatpush1.bf16.msra.mxu0 %v2371
        %2464 = vmatprep.subr.bf16.mxu0 %v2376
        %2465 = vmatpush1.bf16.msra.mxu0 %v2375
        %2466 = vmatprep.subr.bf16.mxu0 %v2380
        %2467 = vmatpush1.bf16.msra.mxu0 %v2379
        %2468 = vmatprep.subr.bf16.mxu0 %v2384
        %2469 = vmatpush1.bf16.msra.mxu0 %v2383
        %2470 = vmatprep.mubr.bf16.mxu0 %v2392
        %2471 = vmatmul.mubr.bf16.gmra.mrb[0].mxu0 %v2391
        %v2472 = vpop.f32.mrb[0].mxu0
        %v2473 = vadd.f32 0.0, %v2472
        %v2474 = vpop.f32.mrb[0].mxu0
        %v2475 = vadd.f32 0.0, %v2474
        %v2476 = vpop.f32.mrb[0].mxu0
        %v2477 = vadd.f32 0.0, %v2476
        %v2478 = vpop.f32.mrb[0].mxu0
        %v2479 = vadd.f32 0.0, %v2478
        %2480 = vdwg.mxu0
        %v2481 = vmul.f32 %v1384, %v2139
        %v2482 = vmul.f32 %v1386, %v2141
        %v2483 = vmul.f32 %v1427, %v2182
        %v2484 = vmul.f32 %v1429, %v2184
        %v2485 = vmul.f32 %v1388, %v2143
        %v2486 = vmul.f32 %v1390, %v2145
        %v2487 = vmul.f32 %v1431, %v2186
        %v2488 = vmul.f32 %v1433, %v2188
        %v2489 = vmul.f32 %v2481, %v2430
        %v2490 = vmul.f32 %v2482, %v2432
        %v2491 = vmul.f32 %v2483, %v2473
        %v2492 = vmul.f32 %v2484, %v2475
        %v2493 = vmul.f32 %v2485, %v2434
        %v2494 = vmul.f32 %v2486, %v2436
        %v2495 = vmul.f32 %v2487, %v2477
        %v2496 = vmul.f32 %v2488, %v2479
        %v2497 = vpack.c.bf16 %v2493, %v2489
        %v2498 = vpack.c.bf16 %v2494, %v2490
        %v2499 = vpack.c.bf16 %v2495, %v2491
        %v2500 = vpack.c.bf16 %v2496, %v2492
        %v2501 = vld [vmem:[%s2] sm:$0xf]
        %v2502 = vld [vmem:[%s2 + $0x4] sm:$0xf]
        %v2503 = vld [vmem:[%s2 + $0x8] sm:$0xf]
        %v2504 = vld [vmem:[%s2 + $0xc] sm:$0xf]
        %v2505 = vld [vmem:[%s2 + $0x10] sm:$0xf]
        %v2506 = vld [vmem:[%s2 + $0x14] sm:$0xf]
        %v2507 = vld [vmem:[%s2 + $0x18] sm:$0xf]
        %v2508 = vld [vmem:[%s2 + $0x1c] sm:$0xf]
        %v2509 = vld [vmem:[%s2 + $0x20] sm:$0xf]
        %v2510 = vld [vmem:[%s2 + $0x24] sm:$0xf]
        %v2511 = vld [vmem:[%s2 + $0x28] sm:$0xf]
        %v2512 = vld [vmem:[%s2 + $0x2c] sm:$0xf]
        %v2513 = vld [vmem:[%s2 + $0x30] sm:$0xf]
        %v2514 = vld [vmem:[%s2 + $0x34] sm:$0xf]
        %v2515 = vld [vmem:[%s2 + $0x38] sm:$0xf]
        %v2516 = vld [vmem:[%s2 + $0x3c] sm:$0xf]
        %v2517 = vld [vmem:[%s3] sm:$0xff]
        %v2518 = vld [vmem:[%s3 + $0x8] sm:$0xff]
        %v2519 = vld [vmem:[%s3 + $0x10] sm:$0xff]
        %v2520 = vld [vmem:[%s3 + $0x18] sm:$0xff]
        %v2521 = vld [vmem:[%s3 + $0x20] sm:$0xff]
        %v2522 = vld [vmem:[%s3 + $0x28] sm:$0xff]
        %v2523 = vld [vmem:[%s3 + $0x30] sm:$0xff]
        %v2524 = vld [vmem:[%s3 + $0x38] sm:$0xff]
        %v2525 = vld [vmem:[%s3 + $0x40] sm:$0xff]
        %v2526 = vld [vmem:[%s3 + $0x48] sm:$0xff]
        %v2527 = vld [vmem:[%s3 + $0x50] sm:$0xff]
        %v2528 = vld [vmem:[%s3 + $0x58] sm:$0xff]
        %v2529 = vld [vmem:[%s3 + $0x60] sm:$0xff]
        %v2530 = vld [vmem:[%s3 + $0x68] sm:$0xff]
        %v2531 = vld [vmem:[%s3 + $0x70] sm:$0xff]
        %v2532 = vld [vmem:[%s3 + $0x78] sm:$0xff]
        %2534 = vset.pattern.permute.xlu0 0
        %2535 = vperm.xlu0 %2534, %v2517
        %v2536 = vpop.permute.xlu0 %2535
        %2539 = vset.pattern.permute.xlu0 0
        %2540 = vperm.xlu0 %2539, %v2518
        %v2541 = vpop.permute.xlu0 %2540
        %2544 = vset.pattern.permute.xlu0 0
        %2545 = vperm.xlu0 %2544, %v2519
        %v2546 = vpop.permute.xlu0 %2545
        %2549 = vset.pattern.permute.xlu0 0
        %2550 = vperm.xlu0 %2549, %v2520
        %v2551 = vpop.permute.xlu0 %2550
        %2554 = vset.pattern.permute.xlu0 0
        %2555 = vperm.xlu0 %2554, %v2521
        %v2556 = vpop.permute.xlu0 %2555
        %2559 = vset.pattern.permute.xlu0 0
        %2560 = vperm.xlu0 %2559, %v2522
        %v2561 = vpop.permute.xlu0 %2560
        %2564 = vset.pattern.permute.xlu0 0
        %2565 = vperm.xlu0 %2564, %v2523
        %v2566 = vpop.permute.xlu0 %2565
        %2569 = vset.pattern.permute.xlu0 0
        %2570 = vperm.xlu0 %2569, %v2524
        %v2571 = vpop.permute.xlu0 %2570
        %2574 = vset.pattern.permute.xlu0 0
        %2575 = vperm.xlu0 %2574, %v2525
        %v2576 = vpop.permute.xlu0 %2575
        %2579 = vset.pattern.permute.xlu0 0
        %2580 = vperm.xlu0 %2579, %v2526
        %v2581 = vpop.permute.xlu0 %2580
        %2584 = vset.pattern.permute.xlu0 0
        %2585 = vperm.xlu0 %2584, %v2527
        %v2586 = vpop.permute.xlu0 %2585
        %2589 = vset.pattern.permute.xlu0 0
        %2590 = vperm.xlu0 %2589, %v2528
        %v2591 = vpop.permute.xlu0 %2590
        %2594 = vset.pattern.permute.xlu0 0
        %2595 = vperm.xlu0 %2594, %v2529
        %v2596 = vpop.permute.xlu0 %2595
        %2599 = vset.pattern.permute.xlu0 0
        %2600 = vperm.xlu0 %2599, %v2530
        %v2601 = vpop.permute.xlu0 %2600
        %2604 = vset.pattern.permute.xlu0 0
        %2605 = vperm.xlu0 %2604, %v2531
        %v2606 = vpop.permute.xlu0 %2605
        %2609 = vset.pattern.permute.xlu0 0
        %2610 = vperm.xlu0 %2609, %v2532
        %v2611 = vpop.permute.xlu0 %2610
        %v2629 = vunpack.c.l.b16 %v2501
        %v2630 = vunpack.c.l.b16 %v2502
        %v2631 = vunpack.c.l.b16 %v2503
        %v2632 = vunpack.c.l.b16 %v2504
        %v2633 = vunpack.c.l.b16 %v2505
        %v2634 = vunpack.c.l.b16 %v2506
        %v2635 = vunpack.c.l.b16 %v2507
        %v2636 = vunpack.c.l.b16 %v2508
        %v2637 = vunpack.c.l.b16 %v2509
        %v2638 = vunpack.c.l.b16 %v2510
        %v2639 = vunpack.c.l.b16 %v2511
        %v2640 = vunpack.c.l.b16 %v2512
        %v2641 = vunpack.c.l.b16 %v2513
        %v2642 = vunpack.c.l.b16 %v2514
        %v2643 = vunpack.c.l.b16 %v2515
        %v2644 = vunpack.c.l.b16 %v2516
        %v2645 = vpack.c.b16 %v2630, %v2629
        %v2646 = vpack.c.b16 %v2632, %v2631
        %v2647 = vpack.c.b16 %v2634, %v2633
        %v2648 = vpack.c.b16 %v2636, %v2635
        %v2649 = vpack.c.b16 %v2638, %v2637
        %v2650 = vpack.c.b16 %v2640, %v2639
        %v2651 = vpack.c.b16 %v2642, %v2641
        %v2652 = vpack.c.b16 %v2644, %v2643
        %vm2653 = vcmask 130048
        %v2655 = vsel %vm2653, %v2645, 0
        %v2658 = vsel %vm2653, %v2646, 0
        %v2661 = vsel %vm2653, %v2647, 0
        %v2664 = vsel %vm2653, %v2648, 0
        %v2667 = vsel %vm2653, %v2649, 0
        %v2670 = vsel %vm2653, %v2650, 0
        %v2673 = vsel %vm2653, %v2651, 0
        %v2676 = vsel %vm2653, %v2652, 0
        %2678 = vmatprep.subr.bf16.mxu0 %v2498
        %2679 = vmatpush1.bf16.msra.mxu0 %v2497
        %2680 = vmatprep.subr.bf16.mxu0 0
        %2681 = vmatpush1.bf16.msra.mxu0 0
        %2682 = vmatprep.subr.bf16.mxu0 0
        %2683 = vmatpush1.bf16.msra.mxu0 0
        %2684 = vmatprep.subr.bf16.mxu0 0
        %2685 = vmatpush1.bf16.msra.mxu0 0
        %2686 = vmatprep.subr.bf16.mxu0 0
        %2687 = vmatpush1.bf16.msra.mxu0 0
        %2688 = vmatprep.subr.bf16.mxu0 0
        %2689 = vmatpush1.bf16.msra.mxu0 0
        %2690 = vmatprep.subr.bf16.mxu0 0
        %2691 = vmatpush1.bf16.msra.mxu0 0
        %2692 = vmatprep.subr.bf16.mxu0 0
        %2693 = vmatpush1.bf16.msra.mxu0 0
        %2694 = vmatprep.subr.bf16.mxu0 0
        %2695 = vmatpush1.bf16.msra.mxu0 0
        %2696 = vmatprep.subr.bf16.mxu0 0
        %2697 = vmatpush1.bf16.msra.mxu0 0
        %2698 = vmatprep.subr.bf16.mxu0 0
        %2699 = vmatpush1.bf16.msra.mxu0 0
        %2700 = vmatprep.subr.bf16.mxu0 0
        %2701 = vmatpush1.bf16.msra.mxu0 0
        %2702 = vmatprep.subr.bf16.mxu0 0
        %2703 = vmatpush1.bf16.msra.mxu0 0
        %2704 = vmatprep.subr.bf16.mxu0 0
        %2705 = vmatpush1.bf16.msra.mxu0 0
        %2706 = vmatprep.subr.bf16.mxu0 0
        %2707 = vmatpush1.bf16.msra.mxu0 0
        %2708 = vmatprep.subr.bf16.mxu0 0
        %2709 = vmatpush1.bf16.msra.mxu0 0
        %2710 = vmatprep.mubr.bf16.mxu0 0
        %2711 = vmatmul.mubr.bf16.gmra.mrb[0].mxu0 %v2655
        %v2712 = vpop.f32.mrb[0].mxu0
        %v2713 = vadd.f32 %v2536, %v2712
        %v2714 = vpop.f32.mrb[0].mxu0
        %v2715 = vadd.f32 %v2536, %v2714
        %v2716 = vpop.f32.mrb[0].mxu0
        %v2717 = vadd.f32 %v2541, %v2716
        %v2718 = vpop.f32.mrb[0].mxu0
        %v2719 = vadd.f32 %v2541, %v2718
        %2720 = vmatprep.mubr.bf16.mxu0 0
        %2721 = vmatmul.mubr.bf16.gmra.mrb[0].mxu0 %v2658
        %v2722 = vpop.f32.mrb[0].mxu0
        %v2723 = vadd.f32 %v2546, %v2722
        %v2724 = vpop.f32.mrb[0].mxu0
        %v2725 = vadd.f32 %v2546, %v2724
        %v2726 = vpop.f32.mrb[0].mxu0
        %v2727 = vadd.f32 %v2551, %v2726
        %v2728 = vpop.f32.mrb[0].mxu0
        %v2729 = vadd.f32 %v2551, %v2728
        %2730 = vmatprep.mubr.bf16.mxu0 0
        %2731 = vmatmul.mubr.bf16.gmra.mrb[0].mxu0 %v2661
        %v2732 = vpop.f32.mrb[0].mxu0
        %v2733 = vadd.f32 %v2556, %v2732
        %v2734 = vpop.f32.mrb[0].mxu0
        %v2735 = vadd.f32 %v2556, %v2734
        %v2736 = vpop.f32.mrb[0].mxu0
        %v2737 = vadd.f32 %v2561, %v2736
        %v2738 = vpop.f32.mrb[0].mxu0
        %v2739 = vadd.f32 %v2561, %v2738
        %2740 = vmatprep.mubr.bf16.mxu0 0
        %2741 = vmatmul.mubr.bf16.gmra.mrb[0].mxu0 %v2664
        %v2742 = vpop.f32.mrb[0].mxu0
        %v2743 = vadd.f32 %v2566, %v2742
        %v2744 = vpop.f32.mrb[0].mxu0
        %v2745 = vadd.f32 %v2566, %v2744
        %v2746 = vpop.f32.mrb[0].mxu0
        %v2747 = vadd.f32 %v2571, %v2746
        %v2748 = vpop.f32.mrb[0].mxu0
        %v2749 = vadd.f32 %v2571, %v2748
        %2750 = vmatprep.mubr.bf16.mxu0 0
        %2751 = vmatmul.mubr.bf16.gmra.mrb[0].mxu0 %v2667
        %v2752 = vpop.f32.mrb[0].mxu0
        %v2753 = vadd.f32 %v2576, %v2752
        %v2754 = vpop.f32.mrb[0].mxu0
        %v2755 = vadd.f32 %v2576, %v2754
        %v2756 = vpop.f32.mrb[0].mxu0
        %v2757 = vadd.f32 %v2581, %v2756
        %v2758 = vpop.f32.mrb[0].mxu0
        %v2759 = vadd.f32 %v2581, %v2758
        %2760 = vmatprep.mubr.bf16.mxu0 0
        %2761 = vmatmul.mubr.bf16.gmra.mrb[0].mxu0 %v2670
        %v2762 = vpop.f32.mrb[0].mxu0
        %v2763 = vadd.f32 %v2586, %v2762
        %v2764 = vpop.f32.mrb[0].mxu0
        %v2765 = vadd.f32 %v2586, %v2764
        %v2766 = vpop.f32.mrb[0].mxu0
        %v2767 = vadd.f32 %v2591, %v2766
        %v2768 = vpop.f32.mrb[0].mxu0
        %v2769 = vadd.f32 %v2591, %v2768
        %2770 = vmatprep.mubr.bf16.mxu0 0
        %2771 = vmatmul.mubr.bf16.gmra.mrb[0].mxu0 %v2673
        %v2772 = vpop.f32.mrb[0].mxu0
        %v2773 = vadd.f32 %v2596, %v2772
        %v2774 = vpop.f32.mrb[0].mxu0
        %v2775 = vadd.f32 %v2596, %v2774
        %v2776 = vpop.f32.mrb[0].mxu0
        %v2777 = vadd.f32 %v2601, %v2776
        %v2778 = vpop.f32.mrb[0].mxu0
        %v2779 = vadd.f32 %v2601, %v2778
        %2780 = vmatprep.mubr.bf16.mxu0 0
        %2781 = vmatmul.mubr.bf16.gmra.mrb[0].mxu0 %v2676
        %v2782 = vpop.f32.mrb[0].mxu0
        %v2783 = vadd.f32 %v2606, %v2782
        %v2784 = vpop.f32.mrb[0].mxu0
        %v2785 = vadd.f32 %v2606, %v2784
        %v2786 = vpop.f32.mrb[0].mxu0
        %v2787 = vadd.f32 %v2611, %v2786
        %v2788 = vpop.f32.mrb[0].mxu0
        %v2789 = vadd.f32 %v2611, %v2788
        %2790 = vdwg.mxu0
        %2791 = vmatprep.subr.bf16.mxu0 %v2500
        %2792 = vmatpush1.bf16.msra.mxu0 %v2499
        %2793 = vmatprep.subr.bf16.mxu0 0
        %2794 = vmatpush1.bf16.msra.mxu0 0
        %2795 = vmatprep.subr.bf16.mxu0 0
        %2796 = vmatpush1.bf16.msra.mxu0 0
        %2797 = vmatprep.subr.bf16.mxu0 0
        %2798 = vmatpush1.bf16.msra.mxu0 0
        %2799 = vmatprep.subr.bf16.mxu0 0
        %2800 = vmatpush1.bf16.msra.mxu0 0
        %2801 = vmatprep.subr.bf16.mxu0 0
        %2802 = vmatpush1.bf16.msra.mxu0 0
        %2803 = vmatprep.subr.bf16.mxu0 0
        %2804 = vmatpush1.bf16.msra.mxu0 0
        %2805 = vmatprep.subr.bf16.mxu0 0
        %2806 = vmatpush1.bf16.msra.mxu0 0
        %2807 = vmatprep.subr.bf16.mxu0 0
        %2808 = vmatpush1.bf16.msra.mxu0 0
        %2809 = vmatprep.subr.bf16.mxu0 0
        %2810 = vmatpush1.bf16.msra.mxu0 0
        %2811 = vmatprep.subr.bf16.mxu0 0
        %2812 = vmatpush1.bf16.msra.mxu0 0
        %2813 = vmatprep.subr.bf16.mxu0 0
        %2814 = vmatpush1.bf16.msra.mxu0 0
        %2815 = vmatprep.subr.bf16.mxu0 0
        %2816 = vmatpush1.bf16.msra.mxu0 0
        %2817 = vmatprep.subr.bf16.mxu0 0
        %2818 = vmatpush1.bf16.msra.mxu0 0
        %2819 = vmatprep.subr.bf16.mxu0 0
        %2820 = vmatpush1.bf16.msra.mxu0 0
        %2821 = vmatprep.subr.bf16.mxu0 0
        %2822 = vmatpush1.bf16.msra.mxu0 0
        %2823 = vmatprep.mubr.bf16.mxu0 0
        %2824 = vmatmul.mubr.bf16.gmra.mrb[0].mxu0 %v2655
        %v2825 = vpop.f32.mrb[0].mxu0
        %v2826 = vadd.f32 %v2536, %v2825
        %v2827 = vpop.f32.mrb[0].mxu0
        %v2828 = vadd.f32 %v2536, %v2827
        %v2829 = vpop.f32.mrb[0].mxu0
        %v2830 = vadd.f32 %v2541, %v2829
        %v2831 = vpop.f32.mrb[0].mxu0
        %v2832 = vadd.f32 %v2541, %v2831
        %2833 = vmatprep.mubr.bf16.mxu0 0
        %2834 = vmatmul.mubr.bf16.gmra.mrb[0].mxu0 %v2658
        %v2835 = vpop.f32.mrb[0].mxu0
        %v2836 = vadd.f32 %v2546, %v2835
        %v2837 = vpop.f32.mrb[0].mxu0
        %v2838 = vadd.f32 %v2546, %v2837
        %v2839 = vpop.f32.mrb[0].mxu0
        %v2840 = vadd.f32 %v2551, %v2839
        %v2841 = vpop.f32.mrb[0].mxu0
        %v2842 = vadd.f32 %v2551, %v2841
        %2843 = vmatprep.mubr.bf16.mxu0 0
        %2844 = vmatmul.mubr.bf16.gmra.mrb[0].mxu0 %v2661
        %v2845 = vpop.f32.mrb[0].mxu0
        %v2846 = vadd.f32 %v2556, %v2845
        %v2847 = vpop.f32.mrb[0].mxu0
        %v2848 = vadd.f32 %v2556, %v2847
        %v2849 = vpop.f32.mrb[0].mxu0
        %v2850 = vadd.f32 %v2561, %v2849
        %v2851 = vpop.f32.mrb[0].mxu0
        %v2852 = vadd.f32 %v2561, %v2851
        %2853 = vmatprep.mubr.bf16.mxu0 0
        %2854 = vmatmul.mubr.bf16.gmra.mrb[0].mxu0 %v2664
        %v2855 = vpop.f32.mrb[0].mxu0
        %v2856 = vadd.f32 %v2566, %v2855
        %v2857 = vpop.f32.mrb[0].mxu0
        %v2858 = vadd.f32 %v2566, %v2857
        %v2859 = vpop.f32.mrb[0].mxu0
        %v2860 = vadd.f32 %v2571, %v2859
        %v2861 = vpop.f32.mrb[0].mxu0
        %v2862 = vadd.f32 %v2571, %v2861
        %2863 = vmatprep.mubr.bf16.mxu0 0
        %2864 = vmatmul.mubr.bf16.gmra.mrb[0].mxu0 %v2667
        %v2865 = vpop.f32.mrb[0].mxu0
        %v2866 = vadd.f32 %v2576, %v2865
        %v2867 = vpop.f32.mrb[0].mxu0
        %v2868 = vadd.f32 %v2576, %v2867
        %v2869 = vpop.f32.mrb[0].mxu0
        %v2870 = vadd.f32 %v2581, %v2869
        %v2871 = vpop.f32.mrb[0].mxu0
        %v2872 = vadd.f32 %v2581, %v2871
        %2873 = vmatprep.mubr.bf16.mxu0 0
        %2874 = vmatmul.mubr.bf16.gmra.mrb[0].mxu0 %v2670
        %v2875 = vpop.f32.mrb[0].mxu0
        %v2876 = vadd.f32 %v2586, %v2875
        %v2877 = vpop.f32.mrb[0].mxu0
        %v2878 = vadd.f32 %v2586, %v2877
        %v2879 = vpop.f32.mrb[0].mxu0
        %v2880 = vadd.f32 %v2591, %v2879
        %v2881 = vpop.f32.mrb[0].mxu0
        %v2882 = vadd.f32 %v2591, %v2881
        %2883 = vmatprep.mubr.bf16.mxu0 0
        %2884 = vmatmul.mubr.bf16.gmra.mrb[0].mxu0 %v2673
        %v2885 = vpop.f32.mrb[0].mxu0
        %v2886 = vadd.f32 %v2596, %v2885
        %v2887 = vpop.f32.mrb[0].mxu0
        %v2888 = vadd.f32 %v2596, %v2887
        %v2889 = vpop.f32.mrb[0].mxu0
        %v2890 = vadd.f32 %v2601, %v2889
        %v2891 = vpop.f32.mrb[0].mxu0
        %v2892 = vadd.f32 %v2601, %v2891
        %2893 = vmatprep.mubr.bf16.mxu0 0
        %2894 = vmatmul.mubr.bf16.gmra.mrb[0].mxu0 %v2676
        %v2895 = vpop.f32.mrb[0].mxu0
        %v2896 = vadd.f32 %v2606, %v2895
        %v2897 = vpop.f32.mrb[0].mxu0
        %v2898 = vadd.f32 %v2606, %v2897
        %v2899 = vpop.f32.mrb[0].mxu0
        %v2900 = vadd.f32 %v2611, %v2899
        %v2901 = vpop.f32.mrb[0].mxu0
        %v2902 = vadd.f32 %v2611, %v2901
        %2903 = vdwg.mxu0
        %v2904 = vmax.f32 %v2713, 0.0
        %v2905 = vmax.f32 %v2715, 0.0
        %v2906 = vmax.f32 %v2826, 0.0
        %v2907 = vmax.f32 %v2828, 0.0
        %v2908 = vmax.f32 %v2717, 0.0
        %v2909 = vmax.f32 %v2719, 0.0
        %v2910 = vmax.f32 %v2830, 0.0
        %v2911 = vmax.f32 %v2832, 0.0
        %v2912 = vmax.f32 %v2723, 0.0
        %v2913 = vmax.f32 %v2725, 0.0
        %v2914 = vmax.f32 %v2836, 0.0
        %v2915 = vmax.f32 %v2838, 0.0
        %v2916 = vmax.f32 %v2727, 0.0
        %v2917 = vmax.f32 %v2729, 0.0
        %v2918 = vmax.f32 %v2840, 0.0
        %v2919 = vmax.f32 %v2842, 0.0
        %v2920 = vmax.f32 %v2733, 0.0
        %v2921 = vmax.f32 %v2735, 0.0
        %v2922 = vmax.f32 %v2846, 0.0
        %v2923 = vmax.f32 %v2848, 0.0
        %v2924 = vmax.f32 %v2737, 0.0
        %v2925 = vmax.f32 %v2739, 0.0
        %v2926 = vmax.f32 %v2850, 0.0
        %v2927 = vmax.f32 %v2852, 0.0
        %v2928 = vmax.f32 %v2743, 0.0
        %v2929 = vmax.f32 %v2745, 0.0
        %v2930 = vmax.f32 %v2856, 0.0
        %v2931 = vmax.f32 %v2858, 0.0
        %v2932 = vmax.f32 %v2747, 0.0
        %v2933 = vmax.f32 %v2749, 0.0
        %v2934 = vmax.f32 %v2860, 0.0
        %v2935 = vmax.f32 %v2862, 0.0
        %v2936 = vmax.f32 %v2753, 0.0
        %v2937 = vmax.f32 %v2755, 0.0
        %v2938 = vmax.f32 %v2866, 0.0
        %v2939 = vmax.f32 %v2868, 0.0
        %v2940 = vmax.f32 %v2757, 0.0
        %v2941 = vmax.f32 %v2759, 0.0
        %v2942 = vmax.f32 %v2870, 0.0
        %v2943 = vmax.f32 %v2872, 0.0
        %v2944 = vmax.f32 %v2763, 0.0
        %v2945 = vmax.f32 %v2765, 0.0
        %v2946 = vmax.f32 %v2876, 0.0
        %v2947 = vmax.f32 %v2878, 0.0
        %v2948 = vmax.f32 %v2767, 0.0
        %v2949 = vmax.f32 %v2769, 0.0
        %v2950 = vmax.f32 %v2880, 0.0
        %v2951 = vmax.f32 %v2882, 0.0
        %v2952 = vmax.f32 %v2773, 0.0
        %v2953 = vmax.f32 %v2775, 0.0
        %v2954 = vmax.f32 %v2886, 0.0
        %v2955 = vmax.f32 %v2888, 0.0
        %v2956 = vmax.f32 %v2777, 0.0
        %v2957 = vmax.f32 %v2779, 0.0
        %v2958 = vmax.f32 %v2890, 0.0
        %v2959 = vmax.f32 %v2892, 0.0
        %v2960 = vmax.f32 %v2783, 0.0
        %v2961 = vmax.f32 %v2785, 0.0
        %v2962 = vmax.f32 %v2896, 0.0
        %v2963 = vmax.f32 %v2898, 0.0
        %v2964 = vmax.f32 %v2787, 0.0
        %v2965 = vmax.f32 %v2789, 0.0
        %v2966 = vmax.f32 %v2900, 0.0
        %v2967 = vmax.f32 %v2902, 0.0
        %v2968 = vld [vmem:[%s4] sm:$0xf]
        %v2969 = vld [vmem:[%s4 + $0x4] sm:$0xf]
        %v2970 = vld [vmem:[%s4 + $0x8] sm:$0xf]
        %v2971 = vld [vmem:[%s4 + $0xc] sm:$0xf]
        %v2972 = vld [vmem:[%s4 + $0x10] sm:$0xf]
        %v2973 = vld [vmem:[%s4 + $0x14] sm:$0xf]
        %v2974 = vld [vmem:[%s4 + $0x18] sm:$0xf]
        %v2975 = vld [vmem:[%s4 + $0x1c] sm:$0xf]
        %v2976 = vld [vmem:[%s4 + $0x20] sm:$0xf]
        %v2977 = vld [vmem:[%s4 + $0x24] sm:$0xf]
        %v2978 = vld [vmem:[%s4 + $0x28] sm:$0xf]
        %v2979 = vld [vmem:[%s4 + $0x2c] sm:$0xf]
        %v2980 = vld [vmem:[%s4 + $0x30] sm:$0xf]
        %v2981 = vld [vmem:[%s4 + $0x34] sm:$0xf]
        %v2982 = vld [vmem:[%s4 + $0x38] sm:$0xf]
        %v2983 = vld [vmem:[%s4 + $0x3c] sm:$0xf]
        %v2984 = vpack.c.bf16 %v2908, %v2904
        %v2985 = vpack.c.bf16 %v2909, %v2905
        %v2986 = vpack.c.bf16 %v2910, %v2906
        %v2987 = vpack.c.bf16 %v2911, %v2907
        %v2988 = vpack.c.bf16 %v2916, %v2912
        %v2989 = vpack.c.bf16 %v2917, %v2913
        %v2990 = vpack.c.bf16 %v2918, %v2914
        %v2991 = vpack.c.bf16 %v2919, %v2915
        %v2992 = vpack.c.bf16 %v2924, %v2920
        %v2993 = vpack.c.bf16 %v2925, %v2921
        %v2994 = vpack.c.bf16 %v2926, %v2922
        %v2995 = vpack.c.bf16 %v2927, %v2923
        %v2996 = vpack.c.bf16 %v2932, %v2928
        %v2997 = vpack.c.bf16 %v2933, %v2929
        %v2998 = vpack.c.bf16 %v2934, %v2930
        %v2999 = vpack.c.bf16 %v2935, %v2931
        %v3000 = vpack.c.bf16 %v2940, %v2936
        %v3001 = vpack.c.bf16 %v2941, %v2937
        %v3002 = vpack.c.bf16 %v2942, %v2938
        %v3003 = vpack.c.bf16 %v2943, %v2939
        %v3004 = vpack.c.bf16 %v2948, %v2944
        %v3005 = vpack.c.bf16 %v2949, %v2945
        %v3006 = vpack.c.bf16 %v2950, %v2946
        %v3007 = vpack.c.bf16 %v2951, %v2947
        %v3008 = vpack.c.bf16 %v2956, %v2952
        %v3009 = vpack.c.bf16 %v2957, %v2953
        %v3010 = vpack.c.bf16 %v2958, %v2954
        %v3011 = vpack.c.bf16 %v2959, %v2955
        %v3012 = vpack.c.bf16 %v2964, %v2960
        %v3013 = vpack.c.bf16 %v2965, %v2961
        %v3014 = vpack.c.bf16 %v2966, %v2962
        %v3015 = vpack.c.bf16 %v2967, %v2963
        %v3016 = vld [vmem:[%s5] sm:$0xff]
        %v3017 = vld [vmem:[%s5 + $0x8] sm:$0xff]
        %v3018 = vld [vmem:[%s5 + $0x10] sm:$0xff]
        %v3019 = vld [vmem:[%s5 + $0x18] sm:$0xff]
        %v3020 = vld [vmem:[%s5 + $0x20] sm:$0xff]
        %v3021 = vld [vmem:[%s5 + $0x28] sm:$0xff]
        %v3022 = vld [vmem:[%s5 + $0x30] sm:$0xff]
        %v3023 = vld [vmem:[%s5 + $0x38] sm:$0xff]
        %v3024 = vld [vmem:[%s5 + $0x40] sm:$0xff]
        %v3025 = vld [vmem:[%s5 + $0x48] sm:$0xff]
        %v3026 = vld [vmem:[%s5 + $0x50] sm:$0xff]
        %v3027 = vld [vmem:[%s5 + $0x58] sm:$0xff]
        %v3028 = vld [vmem:[%s5 + $0x60] sm:$0xff]
        %v3029 = vld [vmem:[%s5 + $0x68] sm:$0xff]
        %v3030 = vld [vmem:[%s5 + $0x70] sm:$0xff]
        %v3031 = vld [vmem:[%s5 + $0x78] sm:$0xff]
        %3033 = vset.pattern.permute.xlu0 0
        %3034 = vperm.xlu0 %3033, %v3016
        %v3035 = vpop.permute.xlu0 %3034
        %3038 = vset.pattern.permute.xlu0 0
        %3039 = vperm.xlu0 %3038, %v3017
        %v3040 = vpop.permute.xlu0 %3039
        %3043 = vset.pattern.permute.xlu0 0
        %3044 = vperm.xlu0 %3043, %v3018
        %v3045 = vpop.permute.xlu0 %3044
        %3048 = vset.pattern.permute.xlu0 0
        %3049 = vperm.xlu0 %3048, %v3019
        %v3050 = vpop.permute.xlu0 %3049
        %3053 = vset.pattern.permute.xlu0 0
        %3054 = vperm.xlu0 %3053, %v3020
        %v3055 = vpop.permute.xlu0 %3054
        %3058 = vset.pattern.permute.xlu0 0
        %3059 = vperm.xlu0 %3058, %v3021
        %v3060 = vpop.permute.xlu0 %3059
        %3063 = vset.pattern.permute.xlu0 0
        %3064 = vperm.xlu0 %3063, %v3022
        %v3065 = vpop.permute.xlu0 %3064
        %3068 = vset.pattern.permute.xlu0 0
        %3069 = vperm.xlu0 %3068, %v3023
        %v3070 = vpop.permute.xlu0 %3069
        %3073 = vset.pattern.permute.xlu0 0
        %3074 = vperm.xlu0 %3073, %v3024
        %v3075 = vpop.permute.xlu0 %3074
        %3078 = vset.pattern.permute.xlu0 0
        %3079 = vperm.xlu0 %3078, %v3025
        %v3080 = vpop.permute.xlu0 %3079
        %3083 = vset.pattern.permute.xlu0 0
        %3084 = vperm.xlu0 %3083, %v3026
        %v3085 = vpop.permute.xlu0 %3084
        %3088 = vset.pattern.permute.xlu0 0
        %3089 = vperm.xlu0 %3088, %v3027
        %v3090 = vpop.permute.xlu0 %3089
        %3093 = vset.pattern.permute.xlu0 0
        %3094 = vperm.xlu0 %3093, %v3028
        %v3095 = vpop.permute.xlu0 %3094
        %3098 = vset.pattern.permute.xlu0 0
        %3099 = vperm.xlu0 %3098, %v3029
        %v3100 = vpop.permute.xlu0 %3099
        %3103 = vset.pattern.permute.xlu0 0
        %3104 = vperm.xlu0 %3103, %v3030
        %v3105 = vpop.permute.xlu0 %3104
        %3108 = vset.pattern.permute.xlu0 0
        %3109 = vperm.xlu0 %3108, %v3031
        %v3110 = vpop.permute.xlu0 %3109
        %v3128 = vunpack.c.l.b16 %v2968
        %v3129 = vunpack.c.l.b16 %v2969
        %v3130 = vunpack.c.l.b16 %v2970
        %v3131 = vunpack.c.l.b16 %v2971
        %v3132 = vunpack.c.l.b16 %v2972
        %v3133 = vunpack.c.l.b16 %v2973
        %v3134 = vunpack.c.l.b16 %v2974
        %v3135 = vunpack.c.l.b16 %v2975
        %v3136 = vunpack.c.l.b16 %v2976
        %v3137 = vunpack.c.l.b16 %v2977
        %v3138 = vunpack.c.l.b16 %v2978
        %v3139 = vunpack.c.l.b16 %v2979
        %v3140 = vunpack.c.l.b16 %v2980
        %v3141 = vunpack.c.l.b16 %v2981
        %v3142 = vunpack.c.l.b16 %v2982
        %v3143 = vunpack.c.l.b16 %v2983
        %v3144 = vpack.c.b16 %v3129, %v3128
        %v3145 = vpack.c.b16 %v3131, %v3130
        %v3146 = vpack.c.b16 %v3133, %v3132
        %v3147 = vpack.c.b16 %v3135, %v3134
        %v3148 = vpack.c.b16 %v3137, %v3136
        %v3149 = vpack.c.b16 %v3139, %v3138
        %v3150 = vpack.c.b16 %v3141, %v3140
        %v3151 = vpack.c.b16 %v3143, %v3142
        %3160 = vmatprep.subr.bf16.mxu0 %v2985
        %3161 = vmatpush1.bf16.msra.mxu0 %v2984
        %3162 = vmatprep.subr.bf16.mxu0 %v2989
        %3163 = vmatpush1.bf16.msra.mxu0 %v2988
        %3164 = vmatprep.subr.bf16.mxu0 %v2993
        %3165 = vmatpush1.bf16.msra.mxu0 %v2992
        %3166 = vmatprep.subr.bf16.mxu0 %v2997
        %3167 = vmatpush1.bf16.msra.mxu0 %v2996
        %3168 = vmatprep.subr.bf16.mxu0 %v3001
        %3169 = vmatpush1.bf16.msra.mxu0 %v3000
        %3170 = vmatprep.subr.bf16.mxu0 %v3005
        %3171 = vmatpush1.bf16.msra.mxu0 %v3004
        %3172 = vmatprep.subr.bf16.mxu0 %v3009
        %3173 = vmatpush1.bf16.msra.mxu0 %v3008
        %3174 = vmatprep.subr.bf16.mxu0 %v3013
        %3175 = vmatpush1.bf16.msra.mxu0 %v3012
        %3176 = vmatprep.subr.bf16.mxu0 0
        %3177 = vmatpush1.bf16.msra.mxu0 0
        %3178 = vmatprep.subr.bf16.mxu0 0
        %3179 = vmatpush1.bf16.msra.mxu0 0
        %3180 = vmatprep.subr.bf16.mxu0 0
        %3181 = vmatpush1.bf16.msra.mxu0 0
        %3182 = vmatprep.subr.bf16.mxu0 0
        %3183 = vmatpush1.bf16.msra.mxu0 0
        %3184 = vmatprep.subr.bf16.mxu0 0
        %3185 = vmatpush1.bf16.msra.mxu0 0
        %3186 = vmatprep.subr.bf16.mxu0 0
        %3187 = vmatpush1.bf16.msra.mxu0 0
        %3188 = vmatprep.subr.bf16.mxu0 0
        %3189 = vmatpush1.bf16.msra.mxu0 0
        %3190 = vmatprep.subr.bf16.mxu0 0
        %3191 = vmatpush1.bf16.msra.mxu0 0
        %3192 = vmatprep.mubr.bf16.mxu0 0
        %3193 = vmatmul.mubr.bf16.gmra.mrb[0].mxu0 %v3144
        %v3194 = vpop.f32.mrb[0].mxu0
        %v3195 = vadd.f32 %v3035, %v3194
        %v3196 = vpop.f32.mrb[0].mxu0
        %v3197 = vadd.f32 %v3035, %v3196
        %v3198 = vpop.f32.mrb[0].mxu0
        %v3199 = vadd.f32 %v3040, %v3198
        %v3200 = vpop.f32.mrb[0].mxu0
        %v3201 = vadd.f32 %v3040, %v3200
        %3202 = vmatprep.mubr.bf16.mxu0 0
        %3203 = vmatmul.mubr.bf16.gmra.mrb[0].mxu0 %v3145
        %v3204 = vpop.f32.mrb[0].mxu0
        %v3205 = vadd.f32 %v3045, %v3204
        %v3206 = vpop.f32.mrb[0].mxu0
        %v3207 = vadd.f32 %v3045, %v3206
        %v3208 = vpop.f32.mrb[0].mxu0
        %v3209 = vadd.f32 %v3050, %v3208
        %v3210 = vpop.f32.mrb[0].mxu0
        %v3211 = vadd.f32 %v3050, %v3210
        %3212 = vmatprep.mubr.bf16.mxu0 0
        %3213 = vmatmul.mubr.bf16.gmra.mrb[0].mxu0 %v3146
        %v3214 = vpop.f32.mrb[0].mxu0
        %v3215 = vadd.f32 %v3055, %v3214
        %v3216 = vpop.f32.mrb[0].mxu0
        %v3217 = vadd.f32 %v3055, %v3216
        %v3218 = vpop.f32.mrb[0].mxu0
        %v3219 = vadd.f32 %v3060, %v3218
        %v3220 = vpop.f32.mrb[0].mxu0
        %v3221 = vadd.f32 %v3060, %v3220
        %3222 = vmatprep.mubr.bf16.mxu0 0
        %3223 = vmatmul.mubr.bf16.gmra.mrb[0].mxu0 %v3147
        %v3224 = vpop.f32.mrb[0].mxu0
        %v3225 = vadd.f32 %v3065, %v3224
        %v3226 = vpop.f32.mrb[0].mxu0
        %v3227 = vadd.f32 %v3065, %v3226
        %v3228 = vpop.f32.mrb[0].mxu0
        %v3229 = vadd.f32 %v3070, %v3228
        %v3230 = vpop.f32.mrb[0].mxu0
        %v3231 = vadd.f32 %v3070, %v3230
        %3232 = vmatprep.mubr.bf16.mxu0 0
        %3233 = vmatmul.mubr.bf16.gmra.mrb[0].mxu0 %v3148
        %v3234 = vpop.f32.mrb[0].mxu0
        %v3235 = vadd.f32 %v3075, %v3234
        %v3236 = vpop.f32.mrb[0].mxu0
        %v3237 = vadd.f32 %v3075, %v3236
        %v3238 = vpop.f32.mrb[0].mxu0
        %v3239 = vadd.f32 %v3080, %v3238
        %v3240 = vpop.f32.mrb[0].mxu0
        %v3241 = vadd.f32 %v3080, %v3240
        %3242 = vmatprep.mubr.bf16.mxu0 0
        %3243 = vmatmul.mubr.bf16.gmra.mrb[0].mxu0 %v3149
        %v3244 = vpop.f32.mrb[0].mxu0
        %v3245 = vadd.f32 %v3085, %v3244
        %v3246 = vpop.f32.mrb[0].mxu0
        %v3247 = vadd.f32 %v3085, %v3246
        %v3248 = vpop.f32.mrb[0].mxu0
        %v3249 = vadd.f32 %v3090, %v3248
        %v3250 = vpop.f32.mrb[0].mxu0
        %v3251 = vadd.f32 %v3090, %v3250
        %3252 = vmatprep.mubr.bf16.mxu0 0
        %3253 = vmatmul.mubr.bf16.gmra.mrb[0].mxu0 %v3150
        %v3254 = vpop.f32.mrb[0].mxu0
        %v3255 = vadd.f32 %v3095, %v3254
        %v3256 = vpop.f32.mrb[0].mxu0
        %v3257 = vadd.f32 %v3095, %v3256
        %v3258 = vpop.f32.mrb[0].mxu0
        %v3259 = vadd.f32 %v3100, %v3258
        %v3260 = vpop.f32.mrb[0].mxu0
        %v3261 = vadd.f32 %v3100, %v3260
        %3262 = vmatprep.mubr.bf16.mxu0 0
        %3263 = vmatmul.mubr.bf16.gmra.mrb[0].mxu0 %v3151
        %v3264 = vpop.f32.mrb[0].mxu0
        %v3265 = vadd.f32 %v3105, %v3264
        %v3266 = vpop.f32.mrb[0].mxu0
        %v3267 = vadd.f32 %v3105, %v3266
        %v3268 = vpop.f32.mrb[0].mxu0
        %v3269 = vadd.f32 %v3110, %v3268
        %v3270 = vpop.f32.mrb[0].mxu0
        %v3271 = vadd.f32 %v3110, %v3270
        %3272 = vdwg.mxu0
        %3273 = vmatprep.subr.bf16.mxu0 %v2987
        %3274 = vmatpush1.bf16.msra.mxu0 %v2986
        %3275 = vmatprep.subr.bf16.mxu0 %v2991
        %3276 = vmatpush1.bf16.msra.mxu0 %v2990
        %3277 = vmatprep.subr.bf16.mxu0 %v2995
        %3278 = vmatpush1.bf16.msra.mxu0 %v2994
        %3279 = vmatprep.subr.bf16.mxu0 %v2999
        %3280 = vmatpush1.bf16.msra.mxu0 %v2998
        %3281 = vmatprep.subr.bf16.mxu0 %v3003
        %3282 = vmatpush1.bf16.msra.mxu0 %v3002
        %3283 = vmatprep.subr.bf16.mxu0 %v3007
        %3284 = vmatpush1.bf16.msra.mxu0 %v3006
        %3285 = vmatprep.subr.bf16.mxu0 %v3011
        %3286 = vmatpush1.bf16.msra.mxu0 %v3010
        %3287 = vmatprep.subr.bf16.mxu0 %v3015
        %3288 = vmatpush1.bf16.msra.mxu0 %v3014
        %3289 = vmatprep.subr.bf16.mxu0 0
        %3290 = vmatpush1.bf16.msra.mxu0 0
        %3291 = vmatprep.subr.bf16.mxu0 0
        %3292 = vmatpush1.bf16.msra.mxu0 0
        %3293 = vmatprep.subr.bf16.mxu0 0
        %3294 = vmatpush1.bf16.msra.mxu0 0
        %3295 = vmatprep.subr.bf16.mxu0 0
        %3296 = vmatpush1.bf16.msra.mxu0 0
        %3297 = vmatprep.subr.bf16.mxu0 0
        %3298 = vmatpush1.bf16.msra.mxu0 0
        %3299 = vmatprep.subr.bf16.mxu0 0
        %3300 = vmatpush1.bf16.msra.mxu0 0
        %3301 = vmatprep.subr.bf16.mxu0 0
        %3302 = vmatpush1.bf16.msra.mxu0 0
        %3303 = vmatprep.subr.bf16.mxu0 0
        %3304 = vmatpush1.bf16.msra.mxu0 0
        %3305 = vmatprep.mubr.bf16.mxu0 0
        %3306 = vmatmul.mubr.bf16.gmra.mrb[0].mxu0 %v3144
        %v3307 = vpop.f32.mrb[0].mxu0
        %v3308 = vadd.f32 %v3035, %v3307
        %v3309 = vpop.f32.mrb[0].mxu0
        %v3310 = vadd.f32 %v3035, %v3309
        %v3311 = vpop.f32.mrb[0].mxu0
        %v3312 = vadd.f32 %v3040, %v3311
        %v3313 = vpop.f32.mrb[0].mxu0
        %v3314 = vadd.f32 %v3040, %v3313
        %3315 = vmatprep.mubr.bf16.mxu0 0
        %3316 = vmatmul.mubr.bf16.gmra.mrb[0].mxu0 %v3145
        %v3317 = vpop.f32.mrb[0].mxu0
        %v3318 = vadd.f32 %v3045, %v3317
        %v3319 = vpop.f32.mrb[0].mxu0
        %v3320 = vadd.f32 %v3045, %v3319
        %v3321 = vpop.f32.mrb[0].mxu0
        %v3322 = vadd.f32 %v3050, %v3321
        %v3323 = vpop.f32.mrb[0].mxu0
        %v3324 = vadd.f32 %v3050, %v3323
        %3325 = vmatprep.mubr.bf16.mxu0 0
        %3326 = vmatmul.mubr.bf16.gmra.mrb[0].mxu0 %v3146
        %v3327 = vpop.f32.mrb[0].mxu0
        %v3328 = vadd.f32 %v3055, %v3327
        %v3329 = vpop.f32.mrb[0].mxu0
        %v3330 = vadd.f32 %v3055, %v3329
        %v3331 = vpop.f32.mrb[0].mxu0
        %v3332 = vadd.f32 %v3060, %v3331
        %v3333 = vpop.f32.mrb[0].mxu0
        %v3334 = vadd.f32 %v3060, %v3333
        %3335 = vmatprep.mubr.bf16.mxu0 0
        %3336 = vmatmul.mubr.bf16.gmra.mrb[0].mxu0 %v3147
        %v3337 = vpop.f32.mrb[0].mxu0
        %v3338 = vadd.f32 %v3065, %v3337
        %v3339 = vpop.f32.mrb[0].mxu0
        %v3340 = vadd.f32 %v3065, %v3339
        %v3341 = vpop.f32.mrb[0].mxu0
        %v3342 = vadd.f32 %v3070, %v3341
        %v3343 = vpop.f32.mrb[0].mxu0
        %v3344 = vadd.f32 %v3070, %v3343
        %3345 = vmatprep.mubr.bf16.mxu0 0
        %3346 = vmatmul.mubr.bf16.gmra.mrb[0].mxu0 %v3148
        %v3347 = vpop.f32.mrb[0].mxu0
        %v3348 = vadd.f32 %v3075, %v3347
        %v3349 = vpop.f32.mrb[0].mxu0
        %v3350 = vadd.f32 %v3075, %v3349
        %v3351 = vpop.f32.mrb[0].mxu0
        %v3352 = vadd.f32 %v3080, %v3351
        %v3353 = vpop.f32.mrb[0].mxu0
        %v3354 = vadd.f32 %v3080, %v3353
        %3355 = vmatprep.mubr.bf16.mxu0 0
        %3356 = vmatmul.mubr.bf16.gmra.mrb[0].mxu0 %v3149
        %v3357 = vpop.f32.mrb[0].mxu0
        %v3358 = vadd.f32 %v3085, %v3357
        %v3359 = vpop.f32.mrb[0].mxu0
        %v3360 = vadd.f32 %v3085, %v3359
        %v3361 = vpop.f32.mrb[0].mxu0
        %v3362 = vadd.f32 %v3090, %v3361
        %v3363 = vpop.f32.mrb[0].mxu0
        %v3364 = vadd.f32 %v3090, %v3363
        %3365 = vmatprep.mubr.bf16.mxu0 0
        %3366 = vmatmul.mubr.bf16.gmra.mrb[0].mxu0 %v3150
        %v3367 = vpop.f32.mrb[0].mxu0
        %v3368 = vadd.f32 %v3095, %v3367
        %v3369 = vpop.f32.mrb[0].mxu0
        %v3370 = vadd.f32 %v3095, %v3369
        %v3371 = vpop.f32.mrb[0].mxu0
        %v3372 = vadd.f32 %v3100, %v3371
        %v3373 = vpop.f32.mrb[0].mxu0
        %v3374 = vadd.f32 %v3100, %v3373
        %3375 = vmatprep.mubr.bf16.mxu0 0
        %3376 = vmatmul.mubr.bf16.gmra.mrb[0].mxu0 %v3151
        %v3377 = vpop.f32.mrb[0].mxu0
        %v3378 = vadd.f32 %v3105, %v3377
        %v3379 = vpop.f32.mrb[0].mxu0
        %v3380 = vadd.f32 %v3105, %v3379
        %v3381 = vpop.f32.mrb[0].mxu0
        %v3382 = vadd.f32 %v3110, %v3381
        %v3383 = vpop.f32.mrb[0].mxu0
        %v3384 = vadd.f32 %v3110, %v3383
        %3385 = vdwg.mxu0
        %v3386 = vmax.f32 %v3195, 0.0
        %v3387 = vmax.f32 %v3197, 0.0
        %v3388 = vmax.f32 %v3308, 0.0
        %v3389 = vmax.f32 %v3310, 0.0
        %v3390 = vmax.f32 %v3199, 0.0
        %v3391 = vmax.f32 %v3201, 0.0
        %v3392 = vmax.f32 %v3312, 0.0
        %v3393 = vmax.f32 %v3314, 0.0
        %v3394 = vmax.f32 %v3205, 0.0
        %v3395 = vmax.f32 %v3207, 0.0
        %v3396 = vmax.f32 %v3318, 0.0
        %v3397 = vmax.f32 %v3320, 0.0
        %v3398 = vmax.f32 %v3209, 0.0
        %v3399 = vmax.f32 %v3211, 0.0
        %v3400 = vmax.f32 %v3322, 0.0
        %v3401 = vmax.f32 %v3324, 0.0
        %v3402 = vmax.f32 %v3215, 0.0
        %v3403 = vmax.f32 %v3217, 0.0
        %v3404 = vmax.f32 %v3328, 0.0
        %v3405 = vmax.f32 %v3330, 0.0
        %v3406 = vmax.f32 %v3219, 0.0
        %v3407 = vmax.f32 %v3221, 0.0
        %v3408 = vmax.f32 %v3332, 0.0
        %v3409 = vmax.f32 %v3334, 0.0
        %v3410 = vmax.f32 %v3225, 0.0
        %v3411 = vmax.f32 %v3227, 0.0
        %v3412 = vmax.f32 %v3338, 0.0
        %v3413 = vmax.f32 %v3340, 0.0
        %v3414 = vmax.f32 %v3229, 0.0
        %v3415 = vmax.f32 %v3231, 0.0
        %v3416 = vmax.f32 %v3342, 0.0
        %v3417 = vmax.f32 %v3344, 0.0
        %v3418 = vmax.f32 %v3235, 0.0
        %v3419 = vmax.f32 %v3237, 0.0
        %v3420 = vmax.f32 %v3348, 0.0
        %v3421 = vmax.f32 %v3350, 0.0
        %v3422 = vmax.f32 %v3239, 0.0
        %v3423 = vmax.f32 %v3241, 0.0
        %v3424 = vmax.f32 %v3352, 0.0
        %v3425 = vmax.f32 %v3354, 0.0
        %v3426 = vmax.f32 %v3245, 0.0
        %v3427 = vmax.f32 %v3247, 0.0
        %v3428 = vmax.f32 %v3358, 0.0
        %v3429 = vmax.f32 %v3360, 0.0
        %v3430 = vmax.f32 %v3249, 0.0
        %v3431 = vmax.f32 %v3251, 0.0
        %v3432 = vmax.f32 %v3362, 0.0
        %v3433 = vmax.f32 %v3364, 0.0
        %v3434 = vmax.f32 %v3255, 0.0
        %v3435 = vmax.f32 %v3257, 0.0
        %v3436 = vmax.f32 %v3368, 0.0
        %v3437 = vmax.f32 %v3370, 0.0
        %v3438 = vmax.f32 %v3259, 0.0
        %v3439 = vmax.f32 %v3261, 0.0
        %v3440 = vmax.f32 %v3372, 0.0
        %v3441 = vmax.f32 %v3374, 0.0
        %v3442 = vmax.f32 %v3265, 0.0
        %v3443 = vmax.f32 %v3267, 0.0
        %v3444 = vmax.f32 %v3378, 0.0
        %v3445 = vmax.f32 %v3380, 0.0
        %v3446 = vmax.f32 %v3269, 0.0
        %v3447 = vmax.f32 %v3271, 0.0
        %v3448 = vmax.f32 %v3382, 0.0
        %v3449 = vmax.f32 %v3384, 0.0
        %v3450 = vld [vmem:[%s6] sm:$0xff]
        %v3451 = vld [vmem:[%s6 + $0x8] sm:$0xff]
        %v3452 = vld [vmem:[%s6 + $0x10] sm:$0xff]
        %v3453 = vld [vmem:[%s6 + $0x18] sm:$0xff]
        %v3454 = vld [vmem:[%s6 + $0x20] sm:$0xff]
        %v3455 = vld [vmem:[%s6 + $0x28] sm:$0xff]
        %v3456 = vld [vmem:[%s6 + $0x30] sm:$0xff]
        %v3457 = vld [vmem:[%s6 + $0x38] sm:$0xff]
        %v3458 = vld [vmem:[%s6 + $0x40] sm:$0xff]
        %v3459 = vld [vmem:[%s6 + $0x48] sm:$0xff]
        %v3460 = vld [vmem:[%s6 + $0x50] sm:$0xff]
        %v3461 = vld [vmem:[%s6 + $0x58] sm:$0xff]
        %v3462 = vld [vmem:[%s6 + $0x60] sm:$0xff]
        %v3463 = vld [vmem:[%s6 + $0x68] sm:$0xff]
        %v3464 = vld [vmem:[%s6 + $0x70] sm:$0xff]
        %v3465 = vld [vmem:[%s6 + $0x78] sm:$0xff]
        %3467 = vset.pattern.permute.xlu0 0
        %3468 = vperm.xlu0 %3467, %v3450
        %v3469 = vpop.permute.xlu0 %3468
        %3472 = vset.pattern.permute.xlu0 0
        %3473 = vperm.xlu0 %3472, %v3451
        %v3474 = vpop.permute.xlu0 %3473
        %3477 = vset.pattern.permute.xlu0 0
        %3478 = vperm.xlu0 %3477, %v3452
        %v3479 = vpop.permute.xlu0 %3478
        %3482 = vset.pattern.permute.xlu0 0
        %3483 = vperm.xlu0 %3482, %v3453
        %v3484 = vpop.permute.xlu0 %3483
        %3487 = vset.pattern.permute.xlu0 0
        %3488 = vperm.xlu0 %3487, %v3454
        %v3489 = vpop.permute.xlu0 %3488
        %3492 = vset.pattern.permute.xlu0 0
        %3493 = vperm.xlu0 %3492, %v3455
        %v3494 = vpop.permute.xlu0 %3493
        %3497 = vset.pattern.permute.xlu0 0
        %3498 = vperm.xlu0 %3497, %v3456
        %v3499 = vpop.permute.xlu0 %3498
        %3502 = vset.pattern.permute.xlu0 0
        %3503 = vperm.xlu0 %3502, %v3457
        %v3504 = vpop.permute.xlu0 %3503
        %3507 = vset.pattern.permute.xlu0 0
        %3508 = vperm.xlu0 %3507, %v3458
        %v3509 = vpop.permute.xlu0 %3508
        %3512 = vset.pattern.permute.xlu0 0
        %3513 = vperm.xlu0 %3512, %v3459
        %v3514 = vpop.permute.xlu0 %3513
        %3517 = vset.pattern.permute.xlu0 0
        %3518 = vperm.xlu0 %3517, %v3460
        %v3519 = vpop.permute.xlu0 %3518
        %3522 = vset.pattern.permute.xlu0 0
        %3523 = vperm.xlu0 %3522, %v3461
        %v3524 = vpop.permute.xlu0 %3523
        %3527 = vset.pattern.permute.xlu0 0
        %3528 = vperm.xlu0 %3527, %v3462
        %v3529 = vpop.permute.xlu0 %3528
        %3532 = vset.pattern.permute.xlu0 0
        %3533 = vperm.xlu0 %3532, %v3463
        %v3534 = vpop.permute.xlu0 %3533
        %3537 = vset.pattern.permute.xlu0 0
        %3538 = vperm.xlu0 %3537, %v3464
        %v3539 = vpop.permute.xlu0 %3538
        %3542 = vset.pattern.permute.xlu0 0
        %3543 = vperm.xlu0 %3542, %v3465
        %v3544 = vpop.permute.xlu0 %3543
        %v3546 = vmul.f32 %v3469, %v3386
        %v3547 = vmul.f32 %v3469, %v3387
        %v3548 = vmul.f32 %v3469, %v3388
        %v3549 = vmul.f32 %v3469, %v3389
        %v3550 = vmul.f32 %v3474, %v3390
        %v3551 = vmul.f32 %v3474, %v3391
        %v3552 = vmul.f32 %v3474, %v3392
        %v3553 = vmul.f32 %v3474, %v3393
        %v3554 = vmul.f32 %v3479, %v3394
        %v3555 = vmul.f32 %v3479, %v3395
        %v3556 = vmul.f32 %v3479, %v3396
        %v3557 = vmul.f32 %v3479, %v3397
        %v3558 = vmul.f32 %v3484, %v3398
        %v3559 = vmul.f32 %v3484, %v3399
        %v3560 = vmul.f32 %v3484, %v3400
        %v3561 = vmul.f32 %v3484, %v3401
        %v3562 = vmul.f32 %v3489, %v3402
        %v3563 = vmul.f32 %v3489, %v3403
        %v3564 = vmul.f32 %v3489, %v3404
        %v3565 = vmul.f32 %v3489, %v3405
        %v3566 = vmul.f32 %v3494, %v3406
        %v3567 = vmul.f32 %v3494, %v3407
        %v3568 = vmul.f32 %v3494, %v3408
        %v3569 = vmul.f32 %v3494, %v3409
        %v3570 = vmul.f32 %v3499, %v3410
        %v3571 = vmul.f32 %v3499, %v3411
        %v3572 = vmul.f32 %v3499, %v3412
        %v3573 = vmul.f32 %v3499, %v3413
        %v3574 = vmul.f32 %v3504, %v3414
        %v3575 = vmul.f32 %v3504, %v3415
        %v3576 = vmul.f32 %v3504, %v3416
        %v3577 = vmul.f32 %v3504, %v3417
        %v3578 = vmul.f32 %v3509, %v3418
        %v3579 = vmul.f32 %v3509, %v3419
        %v3580 = vmul.f32 %v3509, %v3420
        %v3581 = vmul.f32 %v3509, %v3421
        %v3582 = vmul.f32 %v3514, %v3422
        %v3583 = vmul.f32 %v3514, %v3423
        %v3584 = vmul.f32 %v3514, %v3424
        %v3585 = vmul.f32 %v3514, %v3425
        %v3586 = vmul.f32 %v3519, %v3426
        %v3587 = vmul.f32 %v3519, %v3427
        %v3588 = vmul.f32 %v3519, %v3428
        %v3589 = vmul.f32 %v3519, %v3429
        %v3590 = vmul.f32 %v3524, %v3430
        %v3591 = vmul.f32 %v3524, %v3431
        %v3592 = vmul.f32 %v3524, %v3432
        %v3593 = vmul.f32 %v3524, %v3433
        %v3594 = vmul.f32 %v3529, %v3434
        %v3595 = vmul.f32 %v3529, %v3435
        %v3596 = vmul.f32 %v3529, %v3436
        %v3597 = vmul.f32 %v3529, %v3437
        %v3598 = vmul.f32 %v3534, %v3438
        %v3599 = vmul.f32 %v3534, %v3439
        %v3600 = vmul.f32 %v3534, %v3440
        %v3601 = vmul.f32 %v3534, %v3441
        %v3602 = vmul.f32 %v3539, %v3442
        %v3603 = vmul.f32 %v3539, %v3443
        %v3604 = vmul.f32 %v3539, %v3444
        %v3605 = vmul.f32 %v3539, %v3445
        %v3606 = vmul.f32 %v3544, %v3446
        %v3607 = vmul.f32 %v3544, %v3447
        %v3608 = vmul.f32 %v3544, %v3448
        %v3609 = vmul.f32 %v3544, %v3449
        %v3610 = vadd.f32 %v3546, %v3550
        %v3611 = vadd.f32 %v3610, %v3554
        %v3612 = vadd.f32 %v3611, %v3558
        %v3613 = vadd.f32 %v3612, %v3562
        %v3614 = vadd.f32 %v3613, %v3566
        %v3615 = vadd.f32 %v3614, %v3570
        %v3616 = vadd.f32 %v3615, %v3574
        %v3617 = vadd.f32 %v3616, %v3578
        %v3618 = vadd.f32 %v3617, %v3582
        %v3619 = vadd.f32 %v3618, %v3586
        %v3620 = vadd.f32 %v3619, %v3590
        %v3621 = vadd.f32 %v3620, %v3594
        %v3622 = vadd.f32 %v3621, %v3598
        %v3623 = vadd.f32 %v3622, %v3602
        %v3624 = vadd.f32 %v3623, %v3606
        %v3625 = vrot.slane %v3624, 4
        %v3626 = vadd.f32 %v3624, %v3625
        %v3627 = vrot.slane %v3626, 2
        %v3628 = vadd.f32 %v3626, %v3627
        %v3629 = vrot.slane %v3628, 1
        %v3630 = vadd.f32 %v3628, %v3629
        %v3631 = vadd.f32 %v3547, %v3551
        %v3632 = vadd.f32 %v3631, %v3555
        %v3633 = vadd.f32 %v3632, %v3559
        %v3634 = vadd.f32 %v3633, %v3563
        %v3635 = vadd.f32 %v3634, %v3567
        %v3636 = vadd.f32 %v3635, %v3571
        %v3637 = vadd.f32 %v3636, %v3575
        %v3638 = vadd.f32 %v3637, %v3579
        %v3639 = vadd.f32 %v3638, %v3583
        %v3640 = vadd.f32 %v3639, %v3587
        %v3641 = vadd.f32 %v3640, %v3591
        %v3642 = vadd.f32 %v3641, %v3595
        %v3643 = vadd.f32 %v3642, %v3599
        %v3644 = vadd.f32 %v3643, %v3603
        %v3645 = vadd.f32 %v3644, %v3607
        %v3646 = vrot.slane %v3645, 4
        %v3647 = vadd.f32 %v3645, %v3646
        %v3648 = vrot.slane %v3647, 2
        %v3649 = vadd.f32 %v3647, %v3648
        %v3650 = vrot.slane %v3649, 1
        %v3651 = vadd.f32 %v3649, %v3650
        %v3652 = vadd.f32 %v3548, %v3552
        %v3653 = vadd.f32 %v3652, %v3556
        %v3654 = vadd.f32 %v3653, %v3560
        %v3655 = vadd.f32 %v3654, %v3564
        %v3656 = vadd.f32 %v3655, %v3568
        %v3657 = vadd.f32 %v3656, %v3572
        %v3658 = vadd.f32 %v3657, %v3576
        %v3659 = vadd.f32 %v3658, %v3580
        %v3660 = vadd.f32 %v3659, %v3584
        %v3661 = vadd.f32 %v3660, %v3588
        %v3662 = vadd.f32 %v3661, %v3592
        %v3663 = vadd.f32 %v3662, %v3596
        %v3664 = vadd.f32 %v3663, %v3600
        %v3665 = vadd.f32 %v3664, %v3604
        %v3666 = vadd.f32 %v3665, %v3608
        %v3667 = vrot.slane %v3666, 4
        %v3668 = vadd.f32 %v3666, %v3667
        %v3669 = vrot.slane %v3668, 2
        %v3670 = vadd.f32 %v3668, %v3669
        %v3671 = vrot.slane %v3670, 1
        %v3672 = vadd.f32 %v3670, %v3671
        %v3673 = vadd.f32 %v3549, %v3553
        %v3674 = vadd.f32 %v3673, %v3557
        %v3675 = vadd.f32 %v3674, %v3561
        %v3676 = vadd.f32 %v3675, %v3565
        %v3677 = vadd.f32 %v3676, %v3569
        %v3678 = vadd.f32 %v3677, %v3573
        %v3679 = vadd.f32 %v3678, %v3577
        %v3680 = vadd.f32 %v3679, %v3581
        %v3681 = vadd.f32 %v3680, %v3585
        %v3682 = vadd.f32 %v3681, %v3589
        %v3683 = vadd.f32 %v3682, %v3593
        %v3684 = vadd.f32 %v3683, %v3597
        %v3685 = vadd.f32 %v3684, %v3601
        %v3686 = vadd.f32 %v3685, %v3605
        %v3687 = vadd.f32 %v3686, %v3609
        %v3688 = vrot.slane %v3687, 4
        %v3689 = vadd.f32 %v3687, %v3688
        %v3690 = vrot.slane %v3689, 2
        %v3691 = vadd.f32 %v3689, %v3690
        %v3692 = vrot.slane %v3691, 1
        %v3693 = vadd.f32 %v3691, %v3692
        %v3694 = vld [vmem:[#allocation2] sm:$0x1]
        %3696 = vset.pattern.permute.xlu0 0
        %3697 = vperm.xlu0 %3696, %v3694
        %v3698 = vpop.permute.xlu0 %3697
        %v3700 = vlaneseq
        %v3701 = vshrl.u32 %v3700, 7
        %v3702 = vsub.s32 0, %v3701
        %v3703 = vrot.slane %v3698, %v3702
        %v3704 = vadd.f32 %v3630, %v3703
        %v3705 = vadd.f32 %v3651, %v3703
        %v3706 = vadd.f32 %v3672, %v3703
        %v3707 = vadd.f32 %v3693, %v3703
        %v3712 = vcombine.low %v3704, %v3705
        %v3713 = vcombine.low %v3706, %v3707
        %v3715 = vunpack.c.l.s4 1966171168
        %v3716 = vunpack.c.0.s8 %v3715
        %v3717 = vlaneseq
        %v3718 = vshrl.u32 %v3717, 7
        %v3719 = vsub.s32 %v3716, %v3718
        %v3720 = vrot.slane %v3712, %v3719
        %v3722 = vunpack.c.l.s4 1966171168
        %v3723 = vunpack.c.0.s8 %v3722
        %v3724 = vlaneseq
        %v3725 = vshrl.u32 %v3724, 7
        %v3726 = vsub.s32 %v3723, %v3725
        %v3727 = vrot.slane %v3713, %v3726
        %v3728 = vcombine.low %v3720, %v3727
        %v3730 = vunpack.c.l.s4 1966171168
        %v3731 = vunpack.c.0.s8 %v3730
        %v3732 = vlaneseq
        %v3733 = vshrl.u32 %v3732, 7
        %v3734 = vsub.s32 %v3731, %v3733
        %v3735 = vrot.slane %v3728, %v3734
        %v3737 = vlaneseq
        %vm3738 = vcmp.ge.s32.totalorder %v3737, 0
        %vm3739 = vcmp.lt.s32.totalorder %v3737, 512
        %vm3740 = vmand %vm3738, %vm3739
        %3741 = vst.msk [vmem:[%s301] sm:$0xf] %vm3740, %v3735
        %s3742 = sand.u32 %s205, 1
        %s3743 = scalar_lea.sflag [#allocation4], %s3742
        %s3744 = sand.u32 %s205, 1
        %s3745 = smul.addr %s3744, 4
        %s3746 = scalar_lea.vmem [#allocation3], %s3745
        // Predicated region
        $region53: #{tpu_custom_call.1} parent=51 // pred_check
          %p3747 = pneg %p215
        $region54: #{tpu_custom_call.1} parent=51 // pred_check_branch
          %3749 = sbr.rel (%p3747) target = $region56
        $region55: #{tpu_custom_call.1} parent=51 // pred_region
          %s3750 = smul.u32 4, %s24
          %s3752 = ssub.s32 64, 64
          %3753 = vsyncadd %s3743, %s3752
          %s3754 = smul.addr %s3750, 16
          %s3755 = scalar_lea.hbm %s8, %s3754
          %s3757 = sshll.u32 %s3746, 4
          %s3758 = int_to_ptr.vmem [resolvable:$true] %s3757
          %3760 = dma.vmem_to_hbm [thread:$0]  %s3758, 64, %s3755, %s3743
        $region56: #{tpu_custom_call.1} parent=51 // pred_fallthru
          _
      $region52: #{tpu_custom_call.1} parent=5 // pred_fallthru
        _
      %p3761 = scmp.le.s32.totalorder 2, %s19
      // Predicated region
      $region57: #{tpu_custom_call.1} parent=5 // pred_check
        %p3762 = pneg %p3761
      $region58: #{tpu_custom_call.1} parent=5 // pred_check_branch
        %3764 = sbr.rel (%p3762) target = $region60
      $region59: #{tpu_custom_call.1} parent=5 // pred_region
        %s3765 = ssub.s32 %s19, 2
        // Predicated region
        $region61: #{tpu_custom_call.1} parent=59 // pred_check
          %p3766 = pneg %p221
        $region62: #{tpu_custom_call.1} parent=59 // pred_check_branch
          %3768 = sbr.rel (%p3766) target = $region64
        $region63: #{tpu_custom_call.1} parent=59 // pred_region
          %s3769 = sand.u32 %s206, 1
          %s3770 = scalar_lea.sflag [#allocation4], %s3769
          %s3771 = sand.u32 %s206, 1
          %s3772 = smul.addr %s3771, 4
          %s3773 = scalar_lea.vmem [#allocation3], %s3772
          %3774 = dma.done %s3770, 64
        $region64: #{tpu_custom_call.1} parent=59 // pred_fallthru
          _
      $region60: #{tpu_custom_call.1} parent=5 // pred_fallthru
        _
    $region6: #{tpu_custom_call.1} parent=1 // loop_footer
      %s23 = sadd.s32 1, %s19
    $region7: #{tpu_custom_call.1} parent=1 // loop_footer_branch
      %18 = sbr.rel target = $region3
    $region8: #{tpu_custom_call.1} parent=1 // loop_exit
      _
    %3775 = vsyncpa [#allocation4], 1
    %s3776 = scalar_lea.sflag [#allocation4], 1
    %3777 = vsyncpa %s3776, 1

</llo_original>
